<compile_context>
chip_gen: v6e
topology: v6e:2x2x1
jax: 0.10.0
libtpu: 0.0.40
codegen_flags: <defaults>
</compile_context>

<pallas_src>
import jax
import jax.numpy as jnp
from jax.experimental import pallas as pl
from jax.experimental.pallas import tpu as pltpu

EMBED_DIM = 128
CONV1_OUT = 128
CONV2_OUT = 64
FC_HIDDEN = 64
NUM_CLASSES = 1
K = 3      # conv kernel size
POOL = 3   # MaxPool1d kernel == stride


def _make_kernel(BB, L):
    L1 = L - (K - 1)          # conv1 'valid' output length per sample
    Lp = L1 // POOL           # after MaxPool1d(3,3) (floor mode)
    L2 = Lp - (K - 1)         # conv2 'valid' output length per sample
    M = BB * L                # flattened conv1 matmul rows per grid step
    M2 = BB * Lp              # flattened conv2 matmul rows per grid step

    def kernel(x_ref, w1_ref, b1_ref, w2_ref, b2_ref,
               fw1_ref, fb1_ref, fw2_ref, fb2_ref, out_ref):
        f32 = jnp.float32
        bf16 = jnp.bfloat16

        xf = x_ref[...]                                           # (M, 128) bf16
        # Shifted copies for the 3 conv taps. Zero-pad the tail; the last K-1
        # output rows of every sample (which would mix samples / pad) are
        # discarded below before pooling, so they never affect the result.
        xp = jnp.concatenate([xf, jnp.zeros((K - 1, EMBED_DIM), bf16)], axis=0)

        # ---- conv1 (Conv1d(128,128,3)) as 3 large MXU matmuls + bias, ReLU ----
        h1 = (jnp.dot(xf, w1_ref[0], preferred_element_type=f32)
              + jnp.dot(xp[1:M + 1], w1_ref[1], preferred_element_type=f32)
              + jnp.dot(xp[2:M + 2], w1_ref[2], preferred_element_type=f32)
              + b1_ref[...])
        h1 = jnp.maximum(h1, 0.0)                                 # (M, 128) f32

        # ---- MaxPool1d(3,3): keep only valid per-sample rows, reshape, reduce ----
        h1 = h1.reshape(BB, L, CONV1_OUT)[:, :Lp * POOL, :]       # (BB, Lp*3, 128)
        hp = jnp.max(h1.reshape(M2, POOL, CONV1_OUT), axis=1)     # (M2, 128) f32

        # ---- conv2 (Conv1d(128,64,3)) + ReLU, same flattened-batch trick ----
        hp_bf = hp.astype(bf16)
        hpp = jnp.concatenate([hp_bf, jnp.zeros((K - 1, CONV1_OUT), bf16)], axis=0)
        h2 = (jnp.dot(hp_bf, w2_ref[0], preferred_element_type=f32)
              + jnp.dot(hpp[1:M2 + 1], w2_ref[1], preferred_element_type=f32)
              + jnp.dot(hpp[2:M2 + 2], w2_ref[2], preferred_element_type=f32)
              + b2_ref[...])
        h2 = jnp.maximum(h2, 0.0)                                 # (M2, 64) f32

        # ---- AdaptiveMaxPool1d(1): global max over the valid length per sample ----
        g = jnp.max(h2.reshape(BB, Lp, CONV2_OUT)[:, :L2, :], axis=1)   # (BB, 64)

        # ---- fc1 + ReLU (batched over BB samples) ----
        f1 = jnp.maximum(
            jnp.dot(g.astype(bf16), fw1_ref[...], preferred_element_type=f32)
            + fb1_ref[...], 0.0)                                  # (BB, 64)
        # TODO(synk): Dropout(0.3) is identity at inference; training-mode dropout
        # not implemented.

        # ---- fc2 + sigmoid ----
        f2 = (jnp.dot(f1.astype(bf16), fw2_ref[...], preferred_element_type=f32)
              + fb2_ref[...])                                     # (BB, 1)
        out_ref[...] = jax.nn.sigmoid(f2).astype(out_ref.dtype)

    return kernel


def sentiment_cnn_forward(token_ids, params, block_b=None):
    emb, w1, b1, w2, b2, fw1, fb1, fw2, fb2 = params
    B, L = token_ids.shape

    # Batch tile: target ~256 flattened MXU rows per conv1 push.
    if block_b is None:
        block_b = max(1, 256 // L)
    BB = block_b
    B_pad = ((B + BB - 1) // BB) * BB
    if B_pad != B:
        token_ids = jnp.pad(token_ids, ((0, B_pad - B), (0, 0)))   # token 0 == padding

    # Embedding lookup kept as plain-JAX glue (padding_idx=0 row is zero); cast to
    # bf16 so the (B, L, 128) activation round trip costs half the HBM bytes.
    # TODO(synk): fuse the gather into the kernel (scalar-prefetched token ids +
    # manual DMA row gather) to remove the HBM round trip entirely.
    x = jnp.take(emb, token_ids, axis=0).astype(jnp.bfloat16)      # (B_pad, L, 128)
    x = x.reshape(B_pad * L, EMBED_DIM)                            # lane-dense flat tile

    bf = jnp.bfloat16
    w1b, w2b, fw1b, fw2b = (w.astype(bf) for w in (w1, w2, fw1, fw2))
    b1f, b2f, fb1f, fb2f = (b.astype(jnp.float32) for b in (b1, b2, fb1, fb2))

    kernel = _make_kernel(BB, L)

    def full_spec(shape):
        return pl.BlockSpec(shape, lambda i, n=len(shape): (0,) * n)

    out = pl.pallas_call(
        kernel,
        out_shape=jax.ShapeDtypeStruct((B_pad, NUM_CLASSES), jnp.float32),
        grid=(B_pad // BB,),
        in_specs=[
            pl.BlockSpec((BB * L, EMBED_DIM), lambda i: (i, 0)),   # per-step sample block
            full_spec((K, EMBED_DIM, CONV1_OUT)),
            full_spec((1, CONV1_OUT)),
            full_spec((K, CONV1_OUT, CONV2_OUT)),
            full_spec((1, CONV2_OUT)),
            full_spec((CONV2_OUT, FC_HIDDEN)),
            full_spec((1, FC_HIDDEN)),
            full_spec((FC_HIDDEN, NUM_CLASSES)),
            full_spec((1, NUM_CLASSES)),
        ],
        # Per-step output block: batch axis is embarrassingly parallel, so it can be
        # sharded across TensorCores (v7x) and needs no resident accumulator buffer.
        out_specs=pl.BlockSpec((BB, NUM_CLASSES), lambda i: (i, 0)),
        compiler_params=pltpu.CompilerParams(dimension_semantics=("parallel",)),
    )(x, w1b, b1f, w2b, b2f, fw1b, fb1f, fw2b, fb2f)
    return out[:B]


def reference_forward(token_ids, params):
    """Pure-JAX f32 reference matching the PyTorch forward (eval mode)."""
    emb, w1, b1, w2, b2, fw1, fb1, fw2, fb2 = params
    x = jnp.take(emb, token_ids, axis=0)                           # (B, L, C)
    B, L, _ = x.shape
    L1 = L - (K - 1)
    h1 = sum(jnp.einsum('bld,do->blo', x[:, j:j + L1], w1[j]) for j in range(K)) + b1
    h1 = jax.nn.relu(h1)
    Lp = L1 // POOL
    h1p = jnp.max(h1[:, :Lp * POOL].reshape(B, Lp, POOL, CONV1_OUT), axis=2)
    L2 = Lp - (K - 1)
    h2 = sum(jnp.einsum('bld,do->blo', h1p[:, j:j + L2], w2[j]) for j in range(K)) + b2
    h2 = jax.nn.relu(h2)
    g = jnp.max(h2, axis=1)
    f1 = jax.nn.relu(g @ fw1 + fb1)
    return jax.nn.sigmoid(f1 @ fw2 + fb2)


if __name__ == "__main__":
    key = jax.random.PRNGKey(0)
    vocab_size = 100
    B, L = 2, 32                     # 32 -> conv1 30 -> pool 10 -> conv2 8

    ks = jax.random.split(key, 10)
    emb = jax.random.normal(ks[0], (vocab_size, EMBED_DIM), jnp.float32) * 0.1
    emb = emb.at[0].set(0.0)         # padding_idx=0
    w1 = jax.random.normal(ks[1], (K, EMBED_DIM, CONV1_OUT), jnp.float32) * 0.05
    b1 = jax.random.normal(ks[2], (1, CONV1_OUT), jnp.float32) * 0.05
    w2 = jax.random.normal(ks[3], (K, CONV1_OUT, CONV2_OUT), jnp.float32) * 0.05
    b2 = jax.random.normal(ks[4], (1, CONV2_OUT), jnp.float32) * 0.05
    fw1 = jax.random.normal(ks[5], (CONV2_OUT, FC_HIDDEN), jnp.float32) * 0.1
    fb1 = jax.random.normal(ks[6], (1, FC_HIDDEN), jnp.float32) * 0.1
    fw2 = jax.random.normal(ks[7], (FC_HIDDEN, NUM_CLASSES), jnp.float32) * 0.1
    fb2 = jax.random.normal(ks[8], (1, NUM_CLASSES), jnp.float32) * 0.1
    token_ids = jax.random.randint(ks[9], (B, L), 0, vocab_size, dtype=jnp.int32)

    params = (emb, w1, b1, w2, b2, fw1, fb1, fw2, fb2)

    out = jax.block_until_ready(sentiment_cnn_forward(token_ids, params))
    ref = reference_forward(token_ids, params)

    assert out.shape == (B, NUM_CLASSES), out.shape
    # bf16 matmul operands (f32 accumulation) -> slightly looser tolerance than f32.
    assert jnp.allclose(out, ref, atol=5e-3), (out, ref)
    print("KERNEL_OK")
</pallas_src>

<mosaic_0001>
module attributes {stable_mosaic.version = 11 : i64} {
  func.func @kernel(%arg0: i32, %arg1: memref<256x128xbf16, #tpu.memory_space<vmem>>, %arg2: memref<3x128x128xbf16, #tpu.memory_space<vmem>>, %arg3: memref<1x128xf32, #tpu.memory_space<vmem>>, %arg4: memref<3x128x64xbf16, #tpu.memory_space<vmem>>, %arg5: memref<1x64xf32, #tpu.memory_space<vmem>>, %arg6: memref<64x64xbf16, #tpu.memory_space<vmem>>, %arg7: memref<1x64xf32, #tpu.memory_space<vmem>>, %arg8: memref<64x1xbf16, #tpu.memory_space<vmem>>, %arg9: memref<1x1xf32, #tpu.memory_space<vmem>>, %arg10: memref<8x1xf32, #tpu.memory_space<vmem>>) attributes {dimension_semantics = [#tpu.dimension_semantics<parallel>], iteration_bounds = array<i64: 1>, scalar_prefetch = 0 : i64, scratch_operands = 0 : i64, tpu.core_type = #tpu.core_type<tc>, window_params = [{transform_indices = @transform_0, window_bounds = array<i64: 256, 128>}, {pipeline_mode = #tpu.pipeline_mode<synchronous>, transform_indices = @transform_1, window_bounds = array<i64: 3, 128, 128>}, {pipeline_mode = #tpu.pipeline_mode<synchronous>, transform_indices = @transform_2, window_bounds = array<i64: 1, 128>}, {pipeline_mode = #tpu.pipeline_mode<synchronous>, transform_indices = @transform_3, window_bounds = array<i64: 3, 128, 64>}, {pipeline_mode = #tpu.pipeline_mode<synchronous>, transform_indices = @transform_4, window_bounds = array<i64: 1, 64>}, {pipeline_mode = #tpu.pipeline_mode<synchronous>, transform_indices = @transform_5, window_bounds = array<i64: 64, 64>}, {pipeline_mode = #tpu.pipeline_mode<synchronous>, transform_indices = @transform_6, window_bounds = array<i64: 1, 64>}, {pipeline_mode = #tpu.pipeline_mode<synchronous>, transform_indices = @transform_7, window_bounds = array<i64: 64, 1>}, {pipeline_mode = #tpu.pipeline_mode<synchronous>, transform_indices = @transform_8, window_bounds = array<i64: 1, 1>}, {transform_indices = @transform_9, window_bounds = array<i64: 8, 1>}]} {
    %c0 = arith.constant 0 : index
    %c0_0 = arith.constant 0 : index
    %0 = vector.load %arg1[%c0, %c0_0] : memref<256x128xbf16, #tpu.memory_space<vmem>>, vector<256x128xbf16>
    %cst = arith.constant 0.000000e+00 : bf16
    %1 = vector.broadcast %cst : bf16 to vector<2x128xbf16>
    %2 = tpu.concatenate %0, %1 in 0 : vector<256x128xbf16>, vector<2x128xbf16> -> vector<258x128xbf16>
    %c0_1 = arith.constant 0 : index
    %c0_2 = arith.constant 0 : index
    %c0_3 = arith.constant 0 : index
    %3 = vector.load %arg2[%c0_1, %c0_2, %c0_3] : memref<3x128x128xbf16, #tpu.memory_space<vmem>>, vector<1x128x128xbf16>
    %4 = vector.shape_cast %3 : vector<1x128x128xbf16> to vector<128x128xbf16>
    %cst_4 = arith.constant dense<0.000000e+00> : vector<256x128xf32>
    %5 = tpu.matmul %0, %4, %cst_4 {dimension_numbers = #tpu.dot_dimension_numbers<[1], [0], [0], [1], [0, 0, 1, 1], [], []>} : vector<256x128xbf16>, vector<128x128xbf16>, vector<256x128xf32> -> vector<256x128xf32>
    %6 = vector.extract_strided_slice %2 {offsets = [1, 0], sizes = [256, 128], strides = [1, 1]} : vector<258x128xbf16> to vector<256x128xbf16>
    %c1 = arith.constant 1 : index
    %c0_5 = arith.constant 0 : index
    %c0_6 = arith.constant 0 : index
    %7 = vector.load %arg2[%c1, %c0_5, %c0_6] : memref<3x128x128xbf16, #tpu.memory_space<vmem>>, vector<1x128x128xbf16>
    %8 = vector.shape_cast %7 : vector<1x128x128xbf16> to vector<128x128xbf16>
    %cst_7 = arith.constant dense<0.000000e+00> : vector<256x128xf32>
    %9 = tpu.matmul %6, %8, %cst_7 {dimension_numbers = #tpu.dot_dimension_numbers<[1], [0], [0], [1], [0, 0, 1, 1], [], []>} : vector<256x128xbf16>, vector<128x128xbf16>, vector<256x128xf32> -> vector<256x128xf32>
    %10 = arith.addf %5, %9 : vector<256x128xf32>
    %11 = vector.extract_strided_slice %2 {offsets = [2, 0], sizes = [256, 128], strides = [1, 1]} : vector<258x128xbf16> to vector<256x128xbf16>
    %c2 = arith.constant 2 : index
    %c0_8 = arith.constant 0 : index
    %c0_9 = arith.constant 0 : index
    %12 = vector.load %arg2[%c2, %c0_8, %c0_9] : memref<3x128x128xbf16, #tpu.memory_space<vmem>>, vector<1x128x128xbf16>
    %13 = vector.shape_cast %12 : vector<1x128x128xbf16> to vector<128x128xbf16>
    %cst_10 = arith.constant dense<0.000000e+00> : vector<256x128xf32>
    %14 = tpu.matmul %11, %13, %cst_10 {dimension_numbers = #tpu.dot_dimension_numbers<[1], [0], [0], [1], [0, 0, 1, 1], [], []>} : vector<256x128xbf16>, vector<128x128xbf16>, vector<256x128xf32> -> vector<256x128xf32>
    %15 = arith.addf %10, %14 : vector<256x128xf32>
    %c0_11 = arith.constant 0 : index
    %c0_12 = arith.constant 0 : index
    %16 = vector.load %arg3[%c0_11, %c0_12] : memref<1x128xf32, #tpu.memory_space<vmem>>, vector<1x128xf32>
    %17 = vector.broadcast %16 : vector<1x128xf32> to vector<256x128xf32>
    %18 = arith.addf %15, %17 : vector<256x128xf32>
    %cst_13 = arith.constant 0.000000e+00 : f32
    %19 = vector.broadcast %cst_13 : f32 to vector<256x128xf32>
    %20 = arith.maximumf %18, %19 : vector<256x128xf32>
    %21 = vector.shape_cast %20 : vector<256x128xf32> to vector<8x32x128xf32>
    %22 = vector.extract_strided_slice %21 {offsets = [0, 0, 0], sizes = [8, 30, 128], strides = [1, 1, 1]} : vector<8x32x128xf32> to vector<8x30x128xf32>
    %23 = vector.shape_cast %22 : vector<8x30x128xf32> to vector<80x3x128xf32>
    %cst_14 = arith.constant dense<0xFF800000> : vector<80x128xf32>
    %24 = vector.multi_reduction <maximumf>, %23, %cst_14 [1] : vector<80x3x128xf32> to vector<80x128xf32>
    %25 = arith.truncf %24 : vector<80x128xf32> to vector<80x128xbf16>
    %cst_15 = arith.constant 0.000000e+00 : bf16
    %26 = vector.broadcast %cst_15 : bf16 to vector<2x128xbf16>
    %27 = tpu.concatenate %25, %26 in 0 : vector<80x128xbf16>, vector<2x128xbf16> -> vector<82x128xbf16>
    %c0_16 = arith.constant 0 : index
    %c0_17 = arith.constant 0 : index
    %c0_18 = arith.constant 0 : index
    %28 = vector.load %arg4[%c0_16, %c0_17, %c0_18] : memref<3x128x64xbf16, #tpu.memory_space<vmem>>, vector<1x128x64xbf16>
    %29 = vector.shape_cast %28 : vector<1x128x64xbf16> to vector<128x64xbf16>
    %cst_19 = arith.constant dense<0.000000e+00> : vector<80x64xf32>
    %30 = tpu.matmul %25, %29, %cst_19 {dimension_numbers = #tpu.dot_dimension_numbers<[1], [0], [0], [1], [0, 0, 1, 1], [], []>} : vector<80x128xbf16>, vector<128x64xbf16>, vector<80x64xf32> -> vector<80x64xf32>
    %31 = vector.extract_strided_slice %27 {offsets = [1, 0], sizes = [80, 128], strides = [1, 1]} : vector<82x128xbf16> to vector<80x128xbf16>
    %c1_20 = arith.constant 1 : index
    %c0_21 = arith.constant 0 : index
    %c0_22 = arith.constant 0 : index
    %32 = vector.load %arg4[%c1_20, %c0_21, %c0_22] : memref<3x128x64xbf16, #tpu.memory_space<vmem>>, vector<1x128x64xbf16>
    %33 = vector.shape_cast %32 : vector<1x128x64xbf16> to vector<128x64xbf16>
    %cst_23 = arith.constant dense<0.000000e+00> : vector<80x64xf32>
    %34 = tpu.matmul %31, %33, %cst_23 {dimension_numbers = #tpu.dot_dimension_numbers<[1], [0], [0], [1], [0, 0, 1, 1], [], []>} : vector<80x128xbf16>, vector<128x64xbf16>, vector<80x64xf32> -> vector<80x64xf32>
    %35 = arith.addf %30, %34 : vector<80x64xf32>
    %36 = vector.extract_strided_slice %27 {offsets = [2, 0], sizes = [80, 128], strides = [1, 1]} : vector<82x128xbf16> to vector<80x128xbf16>
    %c2_24 = arith.constant 2 : index
    %c0_25 = arith.constant 0 : index
    %c0_26 = arith.constant 0 : index
    %37 = vector.load %arg4[%c2_24, %c0_25, %c0_26] : memref<3x128x64xbf16, #tpu.memory_space<vmem>>, vector<1x128x64xbf16>
    %38 = vector.shape_cast %37 : vector<1x128x64xbf16> to vector<128x64xbf16>
    %cst_27 = arith.constant dense<0.000000e+00> : vector<80x64xf32>
    %39 = tpu.matmul %36, %38, %cst_27 {dimension_numbers = #tpu.dot_dimension_numbers<[1], [0], [0], [1], [0, 0, 1, 1], [], []>} : vector<80x128xbf16>, vector<128x64xbf16>, vector<80x64xf32> -> vector<80x64xf32>
    %40 = arith.addf %35, %39 : vector<80x64xf32>
    %c0_28 = arith.constant 0 : index
    %c0_29 = arith.constant 0 : index
    %41 = vector.load %arg5[%c0_28, %c0_29] : memref<1x64xf32, #tpu.memory_space<vmem>>, vector<1x64xf32>
    %42 = vector.broadcast %41 : vector<1x64xf32> to vector<80x64xf32>
    %43 = arith.addf %40, %42 : vector<80x64xf32>
    %cst_30 = arith.constant 0.000000e+00 : f32
    %44 = vector.broadcast %cst_30 : f32 to vector<80x64xf32>
    %45 = arith.maximumf %43, %44 : vector<80x64xf32>
    %46 = vector.shape_cast %45 : vector<80x64xf32> to vector<8x10x64xf32>
    %47 = vector.extract_strided_slice %46 {offsets = [0, 0, 0], sizes = [8, 8, 64], strides = [1, 1, 1]} : vector<8x10x64xf32> to vector<8x8x64xf32>
    %cst_31 = arith.constant dense<0xFF800000> : vector<8x64xf32>
    %48 = vector.multi_reduction <maximumf>, %47, %cst_31 [1] : vector<8x8x64xf32> to vector<8x64xf32>
    %49 = arith.truncf %48 : vector<8x64xf32> to vector<8x64xbf16>
    %c0_32 = arith.constant 0 : index
    %c0_33 = arith.constant 0 : index
    %50 = vector.load %arg6[%c0_32, %c0_33] : memref<64x64xbf16, #tpu.memory_space<vmem>>, vector<64x64xbf16>
    %cst_34 = arith.constant dense<0.000000e+00> : vector<8x64xf32>
    %51 = tpu.matmul %49, %50, %cst_34 {dimension_numbers = #tpu.dot_dimension_numbers<[1], [0], [0], [1], [0, 0, 1, 1], [], []>} : vector<8x64xbf16>, vector<64x64xbf16>, vector<8x64xf32> -> vector<8x64xf32>
    %c0_35 = arith.constant 0 : index
    %c0_36 = arith.constant 0 : index
    %52 = vector.load %arg7[%c0_35, %c0_36] : memref<1x64xf32, #tpu.memory_space<vmem>>, vector<1x64xf32>
    %53 = vector.broadcast %52 : vector<1x64xf32> to vector<8x64xf32>
    %54 = arith.addf %51, %53 : vector<8x64xf32>
    %cst_37 = arith.constant 0.000000e+00 : f32
    %55 = vector.broadcast %cst_37 : f32 to vector<8x64xf32>
    %56 = arith.maximumf %54, %55 : vector<8x64xf32>
    %57 = arith.truncf %56 : vector<8x64xf32> to vector<8x64xbf16>
    %c0_38 = arith.constant 0 : index
    %c0_39 = arith.constant 0 : index
    %58 = vector.load %arg8[%c0_38, %c0_39] : memref<64x1xbf16, #tpu.memory_space<vmem>>, vector<64x1xbf16>
    %cst_40 = arith.constant dense<0.000000e+00> : vector<8x1xf32>
    %59 = tpu.matmul %57, %58, %cst_40 {dimension_numbers = #tpu.dot_dimension_numbers<[1], [0], [0], [1], [0, 0, 1, 1], [], []>} : vector<8x64xbf16>, vector<64x1xbf16>, vector<8x1xf32> -> vector<8x1xf32>
    %c0_41 = arith.constant 0 : index
    %c0_42 = arith.constant 0 : index
    %60 = vector.load %arg9[%c0_41, %c0_42] : memref<1x1xf32, #tpu.memory_space<vmem>>, vector<1x1xf32>
    %61 = vector.broadcast %60 : vector<1x1xf32> to vector<8x1xf32>
    %62 = arith.addf %59, %61 : vector<8x1xf32>
    %63 = arith.negf %62 : vector<8x1xf32>
    %64 = math.exp %63 : vector<8x1xf32>
    %cst_43 = arith.constant 1.000000e+00 : f32
    %65 = vector.broadcast %cst_43 : f32 to vector<8x1xf32>
    %66 = arith.addf %65, %64 : vector<8x1xf32>
    %67 = arith.divf %65, %66 : vector<8x1xf32>
    %c0_44 = arith.constant 0 : index
    %c0_45 = arith.constant 0 : index
    %68 = vector.load %arg10[%c0_44, %c0_45] : memref<8x1xf32, #tpu.memory_space<vmem>>, vector<8x1xf32>
    tpu.vector_store %arg10[%c0_44, %c0_45], %67 {strides = array<i32>} : memref<8x1xf32, #tpu.memory_space<vmem>>, vector<8x1xf32>,
    return
  }
  func.func @transform_0(%arg0: i32) -> (i32, i32) {
    %c0_i32 = arith.constant 0 : i32
    %c0_i32_0 = arith.constant 0 : i32
    return %arg0, %c0_i32 : i32, i32
  }
  func.func @transform_1(%arg0: i32) -> (i32, i32, i32) {
    %c0_i32 = arith.constant 0 : i32
    %c0_i32_0 = arith.constant 0 : i32
    %c0_i32_1 = arith.constant 0 : i32
    %c0_i32_2 = arith.constant 0 : i32
    return %c0_i32, %c0_i32_0, %c0_i32_1 : i32, i32, i32
  }
  func.func @transform_2(%arg0: i32) -> (i32, i32) {
    %c0_i32 = arith.constant 0 : i32
    %c0_i32_0 = arith.constant 0 : i32
    %c0_i32_1 = arith.constant 0 : i32
    return %c0_i32, %c0_i32_0 : i32, i32
  }
  func.func @transform_3(%arg0: i32) -> (i32, i32, i32) {
    %c0_i32 = arith.constant 0 : i32
    %c0_i32_0 = arith.constant 0 : i32
    %c0_i32_1 = arith.constant 0 : i32
    %c0_i32_2 = arith.constant 0 : i32
    return %c0_i32, %c0_i32_0, %c0_i32_1 : i32, i32, i32
  }
  func.func @transform_4(%arg0: i32) -> (i32, i32) {
    %c0_i32 = arith.constant 0 : i32
    %c0_i32_0 = arith.constant 0 : i32
    %c0_i32_1 = arith.constant 0 : i32
    return %c0_i32, %c0_i32_0 : i32, i32
  }
  func.func @transform_5(%arg0: i32) -> (i32, i32) {
    %c0_i32 = arith.constant 0 : i32
    %c0_i32_0 = arith.constant 0 : i32
    %c0_i32_1 = arith.constant 0 : i32
    return %c0_i32, %c0_i32_0 : i32, i32
  }
  func.func @transform_6(%arg0: i32) -> (i32, i32) {
    %c0_i32 = arith.constant 0 : i32
    %c0_i32_0 = arith.constant 0 : i32
    %c0_i32_1 = arith.constant 0 : i32
    return %c0_i32, %c0_i32_0 : i32, i32
  }
  func.func @transform_7(%arg0: i32) -> (i32, i32) {
    %c0_i32 = arith.constant 0 : i32
    %c0_i32_0 = arith.constant 0 : i32
    %c0_i32_1 = arith.constant 0 : i32
    return %c0_i32, %c0_i32_0 : i32, i32
  }
  func.func @transform_8(%arg0: i32) -> (i32, i32) {
    %c0_i32 = arith.constant 0 : i32
    %c0_i32_0 = arith.constant 0 : i32
    %c0_i32_1 = arith.constant 0 : i32
    return %c0_i32, %c0_i32_0 : i32, i32
  }
  func.func @transform_9(%arg0: i32) -> (i32, i32) {
    %c0_i32 = arith.constant 0 : i32
    %c0_i32_0 = arith.constant 0 : i32
    return %arg0, %c0_i32 : i32, i32
  }
}

</mosaic_0001>

<llo_original>
// kernel: tpu_custom_call.1
$region0: #{tpu_custom_call.1}
  #allocation0 [shape = 'u32[]', space=smem, size = 0x4, offset = 0x4, fixed_abs, tag = 'smem constant byte address 0x4 - core index']
  #allocation1 [shape = 'u32[144,128]{1,0:T(1,128)}', space=vmem, size = 0x12000, scoped, tag = 'internal scratch']
  #allocation2 [shape = 'f32[1,1]{1,0:T(1,128)S(1)}', space=vmem, size = 0x200, scoped, tag = 'scoped memory for tpu_custom_call.1']
  %s0 = inlined_call_operand.vmem [shape: bf16[256,128], index: 0, kind: input, shape index: {}]
  %s1 = inlined_call_operand.vmem [shape: bf16[3,128,128], index: 1, kind: input, shape index: {}]
  %s2 = inlined_call_operand.vmem [shape: f32[1,128], index: 2, kind: input, shape index: {}]
  %s3 = inlined_call_operand.vmem [shape: bf16[3,128,64], index: 3, kind: input, shape index: {}]
  %s4 = inlined_call_operand.vmem [shape: f32[1,64], index: 4, kind: input, shape index: {}]
  %s5 = inlined_call_operand.hbm [shape: bf16[64,64], index: 5, kind: input, shape index: {}]
  %s6 = inlined_call_operand.vmem [shape: f32[1,64], index: 6, kind: input, shape index: {}]
  %s7 = inlined_call_operand.vmem [shape: bf16[64,1], index: 7, kind: input, shape index: {}]
  %s8 = inlined_call_operand.<no memory space> [shape: f32[1,1], index: 8, kind: input, shape index: {}]
  %s9 = inlined_call_operand.vmem [shape: f32[8,1], index: 9, kind: output, shape index: {}]
  %s10 = sld [smem:[#allocation0]]
  $region50: #{tpu_custom_call.1} parent=0
    _
  %s12 = ssub.s32 1, %s10
  %s13 = scalar_select 0, %s12, %s10
  %v14 = vstv %s8
  %15 = vst [vmem:[#allocation2] sm:$0x1] %v14
  $region1: #{tpu_custom_call.1} parent=0
    #allocation3 [shape = 'u8[16384]{0}', space=vmem, size = 0x4000, scoped, tag = 'input window, operand 5, single buffered']
    #allocation4 [shape = 's32[1]{0}', space=sflag, size = 0x4, scoped, tag = 'scoped memory for tpu_custom_call.1']
    %16 = vsyncpa [#allocation4], 0
    // Predicated region
    $region2: #{tpu_custom_call.1} parent=1 // pred_check
      _
    $region3: #{tpu_custom_call.1} parent=1 // pred_check_branch
      %18 = sbr.rel (0) target = $region5
    $region4: #{tpu_custom_call.1} parent=1 // pred_region
      _
    $region5: #{tpu_custom_call.1} parent=1 // pred_fallthru
      _
    // Predicated region
    $region6: #{tpu_custom_call.1} parent=1 // pred_check
      _
    $region7: #{tpu_custom_call.1} parent=1 // pred_check_branch
      %20 = sbr.rel (0) target = $region9
    $region8: #{tpu_custom_call.1} parent=1 // pred_region
      _
    $region9: #{tpu_custom_call.1} parent=1 // pred_fallthru
      _
    // Predicated region
    $region10: #{tpu_custom_call.1} parent=1 // pred_check
      _
    $region11: #{tpu_custom_call.1} parent=1 // pred_check_branch
      %22 = sbr.rel (0) target = $region13
    $region12: #{tpu_custom_call.1} parent=1 // pred_region
      _
    $region13: #{tpu_custom_call.1} parent=1 // pred_fallthru
      _
    // Predicated region
    $region14: #{tpu_custom_call.1} parent=1 // pred_check
      _
    $region15: #{tpu_custom_call.1} parent=1 // pred_check_branch
      %24 = sbr.rel (0) target = $region17
    $region16: #{tpu_custom_call.1} parent=1 // pred_region
      _
    $region17: #{tpu_custom_call.1} parent=1 // pred_fallthru
      _
    // Predicated region
    $region18: #{tpu_custom_call.1} parent=1 // pred_check
      _
    $region19: #{tpu_custom_call.1} parent=1 // pred_check_branch
      %26 = sbr.rel (0) target = $region21
    $region20: #{tpu_custom_call.1} parent=1 // pred_region
      _
    $region21: #{tpu_custom_call.1} parent=1 // pred_fallthru
      _
    // Predicated region
    $region22: #{tpu_custom_call.1} parent=1 // pred_check
      _
    $region23: #{tpu_custom_call.1} parent=1 // pred_check_branch
      %28 = sbr.rel (0) target = $region25
    $region24: #{tpu_custom_call.1} parent=1 // pred_region
      %s30 = ssub.s32 512, 512
      %31 = vsyncadd [#allocation4], %s30
      %s32 = sshll.u32 [#allocation3], 4
      %s33 = int_to_ptr.vmem [resolvable:$true] %s32
      %38 = dma.hbm_to_vmem [thread:$0]  %s5, 512, %s33, [#allocation4], 64, 64, 4
    $region25: #{tpu_custom_call.1} parent=1 // pred_fallthru
      _
    // Predicated region
    $region26: #{tpu_custom_call.1} parent=1 // pred_check
      _
    $region27: #{tpu_custom_call.1} parent=1 // pred_check_branch
      %40 = sbr.rel (0) target = $region29
    $region28: #{tpu_custom_call.1} parent=1 // pred_region
      _
    $region29: #{tpu_custom_call.1} parent=1 // pred_fallthru
      _
    // Predicated region
    $region30: #{tpu_custom_call.1} parent=1 // pred_check
      _
    $region31: #{tpu_custom_call.1} parent=1 // pred_check_branch
      %42 = sbr.rel (0) target = $region33
    $region32: #{tpu_custom_call.1} parent=1 // pred_region
      _
    $region33: #{tpu_custom_call.1} parent=1 // pred_fallthru
      _
    // Predicated region
    $region34: #{tpu_custom_call.1} parent=1 // pred_check
      _
    $region35: #{tpu_custom_call.1} parent=1 // pred_check_branch
      %44 = sbr.rel (0) target = $region37
    $region36: #{tpu_custom_call.1} parent=1 // pred_region
      _
    $region37: #{tpu_custom_call.1} parent=1 // pred_fallthru
      _
    // Predicated region
    $region38: #{tpu_custom_call.1} parent=1 // pred_check
      _
    $region39: #{tpu_custom_call.1} parent=1 // pred_check_branch
      %46 = sbr.rel (0) target = $region41
    $region40: #{tpu_custom_call.1} parent=1 // pred_region
      %47 = dma.done [#allocation4], 512
    $region41: #{tpu_custom_call.1} parent=1 // pred_fallthru
      _
    %v49 = vld [vmem:[%s0] sm:$0xf]
    %v50 = vld [vmem:[%s0 + $0x4] sm:$0xf]
    %v51 = vld [vmem:[%s0 + $0x8] sm:$0xf]
    %v52 = vld [vmem:[%s0 + $0xc] sm:$0xf]
    %v53 = vld [vmem:[%s0 + $0x10] sm:$0xf]
    %v54 = vld [vmem:[%s0 + $0x14] sm:$0xf]
    %v55 = vld [vmem:[%s0 + $0x18] sm:$0xf]
    %v56 = vld [vmem:[%s0 + $0x1c] sm:$0xf]
    %v57 = vld [vmem:[%s0 + $0x20] sm:$0xf]
    %v58 = vld [vmem:[%s0 + $0x24] sm:$0xf]
    %v59 = vld [vmem:[%s0 + $0x28] sm:$0xf]
    %v60 = vld [vmem:[%s0 + $0x2c] sm:$0xf]
    %v61 = vld [vmem:[%s0 + $0x30] sm:$0xf]
    %v62 = vld [vmem:[%s0 + $0x34] sm:$0xf]
    %v63 = vld [vmem:[%s0 + $0x38] sm:$0xf]
    %v64 = vld [vmem:[%s0 + $0x3c] sm:$0xf]
    %v65 = vld [vmem:[%s0 + $0x40] sm:$0xf]
    %v66 = vld [vmem:[%s0 + $0x44] sm:$0xf]
    %v67 = vld [vmem:[%s0 + $0x48] sm:$0xf]
    %v68 = vld [vmem:[%s0 + $0x4c] sm:$0xf]
    %v69 = vld [vmem:[%s0 + $0x50] sm:$0xf]
    %v70 = vld [vmem:[%s0 + $0x54] sm:$0xf]
    %v71 = vld [vmem:[%s0 + $0x58] sm:$0xf]
    %v72 = vld [vmem:[%s0 + $0x5c] sm:$0xf]
    %v73 = vld [vmem:[%s0 + $0x60] sm:$0xf]
    %v74 = vld [vmem:[%s0 + $0x64] sm:$0xf]
    %v75 = vld [vmem:[%s0 + $0x68] sm:$0xf]
    %v76 = vld [vmem:[%s0 + $0x6c] sm:$0xf]
    %v77 = vld [vmem:[%s0 + $0x70] sm:$0xf]
    %v78 = vld [vmem:[%s0 + $0x74] sm:$0xf]
    %v79 = vld [vmem:[%s0 + $0x78] sm:$0xf]
    %v80 = vld [vmem:[%s0 + $0x7c] sm:$0xf]
    %v113 = vunpack.c.l.b16 %v49
    %v114 = vunpack.c.l.b16 %v50
    %v115 = vunpack.c.l.b16 %v51
    %v116 = vunpack.c.l.b16 %v52
    %v117 = vunpack.c.l.b16 %v53
    %v118 = vunpack.c.l.b16 %v54
    %v119 = vunpack.c.l.b16 %v55
    %v120 = vunpack.c.l.b16 %v56
    %v121 = vunpack.c.l.b16 %v57
    %v122 = vunpack.c.l.b16 %v58
    %v123 = vunpack.c.l.b16 %v59
    %v124 = vunpack.c.l.b16 %v60
    %v125 = vunpack.c.l.b16 %v61
    %v126 = vunpack.c.l.b16 %v62
    %v127 = vunpack.c.l.b16 %v63
    %v128 = vunpack.c.l.b16 %v64
    %v129 = vunpack.c.l.b16 %v65
    %v130 = vunpack.c.l.b16 %v66
    %v131 = vunpack.c.l.b16 %v67
    %v132 = vunpack.c.l.b16 %v68
    %v133 = vunpack.c.l.b16 %v69
    %v134 = vunpack.c.l.b16 %v70
    %v135 = vunpack.c.l.b16 %v71
    %v136 = vunpack.c.l.b16 %v72
    %v137 = vunpack.c.l.b16 %v73
    %v138 = vunpack.c.l.b16 %v74
    %v139 = vunpack.c.l.b16 %v75
    %v140 = vunpack.c.l.b16 %v76
    %v141 = vunpack.c.l.b16 %v77
    %v142 = vunpack.c.l.b16 %v78
    %v143 = vunpack.c.l.b16 %v79
    %v144 = vunpack.c.l.b16 %v80
    %v145 = vpack.c.b16 %v114, %v113
    %v146 = vpack.c.b16 %v116, %v115
    %v147 = vpack.c.b16 %v118, %v117
    %v148 = vpack.c.b16 %v120, %v119
    %v149 = vpack.c.b16 %v122, %v121
    %v150 = vpack.c.b16 %v124, %v123
    %v151 = vpack.c.b16 %v126, %v125
    %v152 = vpack.c.b16 %v128, %v127
    %v153 = vpack.c.b16 %v130, %v129
    %v154 = vpack.c.b16 %v132, %v131
    %v155 = vpack.c.b16 %v134, %v133
    %v156 = vpack.c.b16 %v136, %v135
    %v157 = vpack.c.b16 %v138, %v137
    %v158 = vpack.c.b16 %v140, %v139
    %v159 = vpack.c.b16 %v142, %v141
    %v160 = vpack.c.b16 %v144, %v143
    %v161 = vld [vmem:[%s1] sm:$0xf]
    %v162 = vld [vmem:[%s1 + $0x4] sm:$0xf]
    %v163 = vld [vmem:[%s1 + $0x8] sm:$0xf]
    %v164 = vld [vmem:[%s1 + $0xc] sm:$0xf]
    %v165 = vld [vmem:[%s1 + $0x10] sm:$0xf]
    %v166 = vld [vmem:[%s1 + $0x14] sm:$0xf]
    %v167 = vld [vmem:[%s1 + $0x18] sm:$0xf]
    %v168 = vld [vmem:[%s1 + $0x1c] sm:$0xf]
    %v169 = vld [vmem:[%s1 + $0x20] sm:$0xf]
    %v170 = vld [vmem:[%s1 + $0x24] sm:$0xf]
    %v171 = vld [vmem:[%s1 + $0x28] sm:$0xf]
    %v172 = vld [vmem:[%s1 + $0x2c] sm:$0xf]
    %v173 = vld [vmem:[%s1 + $0x30] sm:$0xf]
    %v174 = vld [vmem:[%s1 + $0x34] sm:$0xf]
    %v175 = vld [vmem:[%s1 + $0x38] sm:$0xf]
    %v176 = vld [vmem:[%s1 + $0x3c] sm:$0xf]
    %s177 = scalar_lea.vmem %s1, 64
    %v178 = vld [vmem:[%s177] sm:$0xf]
    %v179 = vld [vmem:[%s177 + $0x4] sm:$0xf]
    %v180 = vld [vmem:[%s177 + $0x8] sm:$0xf]
    %v181 = vld [vmem:[%s177 + $0xc] sm:$0xf]
    %v182 = vld [vmem:[%s177 + $0x10] sm:$0xf]
    %v183 = vld [vmem:[%s177 + $0x14] sm:$0xf]
    %v184 = vld [vmem:[%s177 + $0x18] sm:$0xf]
    %v185 = vld [vmem:[%s177 + $0x1c] sm:$0xf]
    %v186 = vld [vmem:[%s177 + $0x20] sm:$0xf]
    %v187 = vld [vmem:[%s177 + $0x24] sm:$0xf]
    %v188 = vld [vmem:[%s177 + $0x28] sm:$0xf]
    %v189 = vld [vmem:[%s177 + $0x2c] sm:$0xf]
    %v190 = vld [vmem:[%s177 + $0x30] sm:$0xf]
    %v191 = vld [vmem:[%s177 + $0x34] sm:$0xf]
    %v192 = vld [vmem:[%s177 + $0x38] sm:$0xf]
    %v193 = vld [vmem:[%s177 + $0x3c] sm:$0xf]
    %vm194 = vsmask.f32 7424
    %v196 = vshrl.u32 %v145, 16
    %v198 = vshll.u32 %v145, 16
    %v200 = vrot.slane %v198, 1
    %v201 = vor.u32 %v196, %v200
    %v203 = vshll.u32 %v146, 16
    %v205 = vrot.slane %v203, 1
    %v206 = vsel %vm194, %v201, %v205
    %v207 = vshrl.u32 %v146, 16
    %v209 = vor.u32 %v207, %v205
    %v211 = vshll.u32 %v147, 16
    %v213 = vrot.slane %v211, 1
    %v214 = vsel %vm194, %v209, %v213
    %v215 = vshrl.u32 %v147, 16
    %v217 = vor.u32 %v215, %v213
    %v219 = vshll.u32 %v148, 16
    %v221 = vrot.slane %v219, 1
    %v222 = vsel %vm194, %v217, %v221
    %v223 = vshrl.u32 %v148, 16
    %v225 = vor.u32 %v223, %v221
    %v227 = vshll.u32 %v149, 16
    %v229 = vrot.slane %v227, 1
    %v230 = vsel %vm194, %v225, %v229
    %v231 = vshrl.u32 %v149, 16
    %v233 = vor.u32 %v231, %v229
    %v235 = vshll.u32 %v150, 16
    %v237 = vrot.slane %v235, 1
    %v238 = vsel %vm194, %v233, %v237
    %v239 = vshrl.u32 %v150, 16
    %v241 = vor.u32 %v239, %v237
    %v243 = vshll.u32 %v151, 16
    %v245 = vrot.slane %v243, 1
    %v246 = vsel %vm194, %v241, %v245
    %v247 = vshrl.u32 %v151, 16
    %v249 = vor.u32 %v247, %v245
    %v251 = vshll.u32 %v152, 16
    %v253 = vrot.slane %v251, 1
    %v254 = vsel %vm194, %v249, %v253
    %v255 = vshrl.u32 %v152, 16
    %v257 = vor.u32 %v255, %v253
    %v259 = vshll.u32 %v153, 16
    %v261 = vrot.slane %v259, 1
    %v262 = vsel %vm194, %v257, %v261
    %v263 = vshrl.u32 %v153, 16
    %v265 = vor.u32 %v263, %v261
    %v267 = vshll.u32 %v154, 16
    %v269 = vrot.slane %v267, 1
    %v270 = vsel %vm194, %v265, %v269
    %v271 = vshrl.u32 %v154, 16
    %v273 = vor.u32 %v271, %v269
    %v275 = vshll.u32 %v155, 16
    %v277 = vrot.slane %v275, 1
    %v278 = vsel %vm194, %v273, %v277
    %v279 = vshrl.u32 %v155, 16
    %v281 = vor.u32 %v279, %v277
    %v283 = vshll.u32 %v156, 16
    %v285 = vrot.slane %v283, 1
    %v286 = vsel %vm194, %v281, %v285
    %v287 = vshrl.u32 %v156, 16
    %v289 = vor.u32 %v287, %v285
    %v291 = vshll.u32 %v157, 16
    %v293 = vrot.slane %v291, 1
    %v294 = vsel %vm194, %v289, %v293
    %v295 = vshrl.u32 %v157, 16
    %v297 = vor.u32 %v295, %v293
    %v299 = vshll.u32 %v158, 16
    %v301 = vrot.slane %v299, 1
    %v302 = vsel %vm194, %v297, %v301
    %v303 = vshrl.u32 %v158, 16
    %v305 = vor.u32 %v303, %v301
    %v307 = vshll.u32 %v159, 16
    %v309 = vrot.slane %v307, 1
    %v310 = vsel %vm194, %v305, %v309
    %v311 = vshrl.u32 %v159, 16
    %v313 = vor.u32 %v311, %v309
    %v315 = vshll.u32 %v160, 16
    %v317 = vrot.slane %v315, 1
    %v318 = vsel %vm194, %v313, %v317
    %v319 = vshrl.u32 %v160, 16
    %v321 = vor.u32 %v319, %v317
    %v323 = vshll.u32 0, 16
    %v325 = vrot.slane %v323, 1
    %v326 = vsel %vm194, %v321, %v325
    %v359 = vunpack.c.l.b16 %v178
    %v360 = vunpack.c.l.b16 %v179
    %v361 = vunpack.c.l.b16 %v180
    %v362 = vunpack.c.l.b16 %v181
    %v363 = vunpack.c.l.b16 %v182
    %v364 = vunpack.c.l.b16 %v183
    %v365 = vunpack.c.l.b16 %v184
    %v366 = vunpack.c.l.b16 %v185
    %v367 = vunpack.c.l.b16 %v186
    %v368 = vunpack.c.l.b16 %v187
    %v369 = vunpack.c.l.b16 %v188
    %v370 = vunpack.c.l.b16 %v189
    %v371 = vunpack.c.l.b16 %v190
    %v372 = vunpack.c.l.b16 %v191
    %v373 = vunpack.c.l.b16 %v192
    %v374 = vunpack.c.l.b16 %v193
    %v375 = vpack.c.b16 %v360, %v359
    %v376 = vpack.c.b16 %v362, %v361
    %v377 = vpack.c.b16 %v364, %v363
    %v378 = vpack.c.b16 %v366, %v365
    %v379 = vpack.c.b16 %v368, %v367
    %v380 = vpack.c.b16 %v370, %v369
    %v381 = vpack.c.b16 %v372, %v371
    %v382 = vpack.c.b16 %v374, %v373
    %391 = vmatprep.subr.bf16.mxu0 0
    %392 = vmatpush1.bf16.msra.mxu0 %v382
    %393 = vmatprep.subr.bf16.mxu0 0
    %394 = vmatpush1.bf16.msra.mxu0 %v381
    %395 = vmatprep.subr.bf16.mxu0 0
    %396 = vmatpush1.bf16.msra.mxu0 %v380
    %397 = vmatprep.subr.bf16.mxu0 0
    %398 = vmatpush1.bf16.msra.mxu0 %v379
    %399 = vmatprep.subr.bf16.mxu0 0
    %400 = vmatpush1.bf16.msra.mxu0 %v378
    %401 = vmatprep.subr.bf16.mxu0 0
    %402 = vmatpush1.bf16.msra.mxu0 %v377
    %403 = vmatprep.subr.bf16.mxu0 0
    %404 = vmatpush1.bf16.msra.mxu0 %v376
    %405 = vmatprep.subr.bf16.mxu0 0
    %406 = vmatpush1.bf16.msra.mxu0 %v375
    %407 = vmatprep.subr.bf16.mxu0 0
    %408 = vmatpush2.bf16.msra.mxu0 0
    %409 = vmatprep.subr.bf16.mxu0 0
    %410 = vmatpush2.bf16.msra.mxu0 0
    %411 = vmatprep.subr.bf16.mxu0 0
    %412 = vmatpush2.bf16.msra.mxu0 0
    %413 = vmatprep.subr.bf16.mxu0 0
    %414 = vmatpush2.bf16.msra.mxu0 0
    %415 = vmatprep.subr.bf16.mxu0 0
    %416 = vmatpush2.bf16.msra.mxu0 0
    %417 = vmatprep.subr.bf16.mxu0 0
    %418 = vmatpush2.bf16.msra.mxu0 0
    %419 = vmatprep.subr.bf16.mxu0 0
    %420 = vmatpush2.bf16.msra.mxu0 0
    %421 = vmatprep.subr.bf16.mxu0 0
    %422 = vmatpush2.bf16.msra.mxu0 0
    %423 = vmatprep.mubr.bf16.mxu0 0
    %424 = vmatmul.mubr.bf16.gmra.mxu0 %v206
    %v425 = vpop.f32.mrf.mxu0
    %v426 = vadd.f32 0.0, %v425
    %v427 = vpop.f32.mrf.mxu0
    %v428 = vpop.f32.mrf.mxu0
    %v429 = vadd.f32 0.0, %v428
    %v430 = vpop.f32.mrf.mxu0
    %431 = vmatprep.mubr.bf16.mxu0 0
    %432 = vmatmul.mubr.bf16.gmra.mxu0 %v214
    %v433 = vpop.f32.mrf.mxu0
    %v434 = vadd.f32 0.0, %v433
    %v435 = vpop.f32.mrf.mxu0
    %v436 = vpop.f32.mrf.mxu0
    %v437 = vadd.f32 0.0, %v436
    %v438 = vpop.f32.mrf.mxu0
    %439 = vmatprep.mubr.bf16.mxu0 0
    %440 = vmatmul.mubr.bf16.gmra.mxu0 %v222
    %v441 = vpop.f32.mrf.mxu0
    %v442 = vadd.f32 0.0, %v441
    %v443 = vpop.f32.mrf.mxu0
    %v444 = vpop.f32.mrf.mxu0
    %v445 = vadd.f32 0.0, %v444
    %v446 = vpop.f32.mrf.mxu0
    %447 = vmatprep.mubr.bf16.mxu0 0
    %448 = vmatmul.mubr.bf16.gmra.mxu0 %v230
    %v449 = vpop.f32.mrf.mxu0
    %v450 = vadd.f32 0.0, %v449
    %v451 = vpop.f32.mrf.mxu0
    %v452 = vpop.f32.mrf.mxu0
    %v453 = vadd.f32 0.0, %v452
    %v454 = vpop.f32.mrf.mxu0
    %455 = vmatprep.mubr.bf16.mxu0 0
    %456 = vmatmul.mubr.bf16.gmra.mxu0 %v238
    %v457 = vpop.f32.mrf.mxu0
    %v458 = vadd.f32 0.0, %v457
    %v459 = vpop.f32.mrf.mxu0
    %v460 = vpop.f32.mrf.mxu0
    %v461 = vadd.f32 0.0, %v460
    %v462 = vpop.f32.mrf.mxu0
    %463 = vmatprep.mubr.bf16.mxu0 0
    %464 = vmatmul.mubr.bf16.gmra.mxu0 %v246
    %v465 = vpop.f32.mrf.mxu0
    %v466 = vadd.f32 0.0, %v465
    %v467 = vpop.f32.mrf.mxu0
    %v468 = vpop.f32.mrf.mxu0
    %v469 = vadd.f32 0.0, %v468
    %v470 = vpop.f32.mrf.mxu0
    %471 = vmatprep.mubr.bf16.mxu0 0
    %472 = vmatmul.mubr.bf16.gmra.mxu0 %v254
    %v473 = vpop.f32.mrf.mxu0
    %v474 = vadd.f32 0.0, %v473
    %v475 = vpop.f32.mrf.mxu0
    %v476 = vpop.f32.mrf.mxu0
    %v477 = vadd.f32 0.0, %v476
    %v478 = vpop.f32.mrf.mxu0
    %479 = vmatprep.mubr.bf16.mxu0 0
    %480 = vmatmul.mubr.bf16.gmra.mxu0 %v262
    %v481 = vpop.f32.mrf.mxu0
    %v482 = vadd.f32 0.0, %v481
    %v483 = vpop.f32.mrf.mxu0
    %v484 = vpop.f32.mrf.mxu0
    %v485 = vadd.f32 0.0, %v484
    %v486 = vpop.f32.mrf.mxu0
    %487 = vmatprep.mubr.bf16.mxu0 0
    %488 = vmatmul.mubr.bf16.gmra.mxu0 %v270
    %v489 = vpop.f32.mrf.mxu0
    %v490 = vadd.f32 0.0, %v489
    %v491 = vpop.f32.mrf.mxu0
    %v492 = vpop.f32.mrf.mxu0
    %v493 = vadd.f32 0.0, %v492
    %v494 = vpop.f32.mrf.mxu0
    %495 = vmatprep.mubr.bf16.mxu0 0
    %496 = vmatmul.mubr.bf16.gmra.mxu0 %v278
    %v497 = vpop.f32.mrf.mxu0
    %v498 = vadd.f32 0.0, %v497
    %v499 = vpop.f32.mrf.mxu0
    %v500 = vpop.f32.mrf.mxu0
    %v501 = vadd.f32 0.0, %v500
    %v502 = vpop.f32.mrf.mxu0
    %503 = vmatprep.mubr.bf16.mxu0 0
    %504 = vmatmul.mubr.bf16.gmra.mxu0 %v286
    %v505 = vpop.f32.mrf.mxu0
    %v506 = vadd.f32 0.0, %v505
    %v507 = vpop.f32.mrf.mxu0
    %v508 = vpop.f32.mrf.mxu0
    %v509 = vadd.f32 0.0, %v508
    %v510 = vpop.f32.mrf.mxu0
    %511 = vmatprep.mubr.bf16.mxu0 0
    %512 = vmatmul.mubr.bf16.gmra.mxu0 %v294
    %v513 = vpop.f32.mrf.mxu0
    %v514 = vadd.f32 0.0, %v513
    %v515 = vpop.f32.mrf.mxu0
    %v516 = vpop.f32.mrf.mxu0
    %v517 = vadd.f32 0.0, %v516
    %v518 = vpop.f32.mrf.mxu0
    %519 = vmatprep.mubr.bf16.mxu0 0
    %520 = vmatmul.mubr.bf16.gmra.mxu0 %v302
    %v521 = vpop.f32.mrf.mxu0
    %v522 = vadd.f32 0.0, %v521
    %v523 = vpop.f32.mrf.mxu0
    %v524 = vpop.f32.mrf.mxu0
    %v525 = vadd.f32 0.0, %v524
    %v526 = vpop.f32.mrf.mxu0
    %527 = vmatprep.mubr.bf16.mxu0 0
    %528 = vmatmul.mubr.bf16.gmra.mxu0 %v310
    %v529 = vpop.f32.mrf.mxu0
    %v530 = vadd.f32 0.0, %v529
    %v531 = vpop.f32.mrf.mxu0
    %v532 = vpop.f32.mrf.mxu0
    %v533 = vadd.f32 0.0, %v532
    %v534 = vpop.f32.mrf.mxu0
    %535 = vmatprep.mubr.bf16.mxu0 0
    %536 = vmatmul.mubr.bf16.gmra.mxu0 %v318
    %v537 = vpop.f32.mrf.mxu0
    %v538 = vadd.f32 0.0, %v537
    %v539 = vpop.f32.mrf.mxu0
    %v540 = vpop.f32.mrf.mxu0
    %v541 = vadd.f32 0.0, %v540
    %v542 = vpop.f32.mrf.mxu0
    %543 = vmatprep.mubr.bf16.mxu0 0
    %544 = vmatmul.mubr.bf16.gmra.mxu0 %v326
    %v545 = vpop.f32.mrf.mxu0
    %v546 = vadd.f32 0.0, %v545
    %v547 = vpop.f32.mrf.mxu0
    %v548 = vpop.f32.mrf.mxu0
    %v549 = vadd.f32 0.0, %v548
    %v550 = vpop.f32.mrf.mxu0
    %551 = vdwg.mxu0
    %v584 = vunpack.c.l.b16 %v161
    %v585 = vunpack.c.l.b16 %v162
    %v586 = vunpack.c.l.b16 %v163
    %v587 = vunpack.c.l.b16 %v164
    %v588 = vunpack.c.l.b16 %v165
    %v589 = vunpack.c.l.b16 %v166
    %v590 = vunpack.c.l.b16 %v167
    %v591 = vunpack.c.l.b16 %v168
    %v592 = vunpack.c.l.b16 %v169
    %v593 = vunpack.c.l.b16 %v170
    %v594 = vunpack.c.l.b16 %v171
    %v595 = vunpack.c.l.b16 %v172
    %v596 = vunpack.c.l.b16 %v173
    %v597 = vunpack.c.l.b16 %v174
    %v598 = vunpack.c.l.b16 %v175
    %v599 = vunpack.c.l.b16 %v176
    %v600 = vpack.c.b16 %v585, %v584
    %v601 = vpack.c.b16 %v587, %v586
    %v602 = vpack.c.b16 %v589, %v588
    %v603 = vpack.c.b16 %v591, %v590
    %v604 = vpack.c.b16 %v593, %v592
    %v605 = vpack.c.b16 %v595, %v594
    %v606 = vpack.c.b16 %v597, %v596
    %v607 = vpack.c.b16 %v599, %v598
    %616 = vmatprep.subr.bf16.mxu0 0
    %617 = vmatpush1.bf16.msra.mxu0 %v607
    %618 = vmatprep.subr.bf16.mxu0 0
    %619 = vmatpush1.bf16.msra.mxu0 %v606
    %620 = vmatprep.subr.bf16.mxu0 0
    %621 = vmatpush1.bf16.msra.mxu0 %v605
    %622 = vmatprep.subr.bf16.mxu0 0
    %623 = vmatpush1.bf16.msra.mxu0 %v604
    %624 = vmatprep.subr.bf16.mxu0 0
    %625 = vmatpush1.bf16.msra.mxu0 %v603
    %626 = vmatprep.subr.bf16.mxu0 0
    %627 = vmatpush1.bf16.msra.mxu0 %v602
    %628 = vmatprep.subr.bf16.mxu0 0
    %629 = vmatpush1.bf16.msra.mxu0 %v601
    %630 = vmatprep.subr.bf16.mxu0 0
    %631 = vmatpush1.bf16.msra.mxu0 %v600
    %632 = vmatprep.subr.bf16.mxu0 0
    %633 = vmatpush2.bf16.msra.mxu0 0
    %634 = vmatprep.subr.bf16.mxu0 0
    %635 = vmatpush2.bf16.msra.mxu0 0
    %636 = vmatprep.subr.bf16.mxu0 0
    %637 = vmatpush2.bf16.msra.mxu0 0
    %638 = vmatprep.subr.bf16.mxu0 0
    %639 = vmatpush2.bf16.msra.mxu0 0
    %640 = vmatprep.subr.bf16.mxu0 0
    %641 = vmatpush2.bf16.msra.mxu0 0
    %642 = vmatprep.subr.bf16.mxu0 0
    %643 = vmatpush2.bf16.msra.mxu0 0
    %644 = vmatprep.subr.bf16.mxu0 0
    %645 = vmatpush2.bf16.msra.mxu0 0
    %646 = vmatprep.subr.bf16.mxu0 0
    %647 = vmatpush2.bf16.msra.mxu0 0
    %648 = vmatprep.mubr.bf16.mxu0 0
    %649 = vmatmul.mubr.bf16.gmra.mxu0 %v145
    %v650 = vpop.f32.mrf.mxu0
    %v651 = vadd.f32 %v426, %v650
    %v652 = vpop.f32.mrf.mxu0
    %v653 = vpop.f32.mrf.mxu0
    %v654 = vadd.f32 %v429, %v653
    %v655 = vpop.f32.mrf.mxu0
    %656 = vmatprep.mubr.bf16.mxu0 0
    %657 = vmatmul.mubr.bf16.gmra.mxu0 %v146
    %v658 = vpop.f32.mrf.mxu0
    %v659 = vadd.f32 %v434, %v658
    %v660 = vpop.f32.mrf.mxu0
    %v661 = vpop.f32.mrf.mxu0
    %v662 = vadd.f32 %v437, %v661
    %v663 = vpop.f32.mrf.mxu0
    %664 = vmatprep.mubr.bf16.mxu0 0
    %665 = vmatmul.mubr.bf16.gmra.mxu0 %v147
    %v666 = vpop.f32.mrf.mxu0
    %v667 = vadd.f32 %v442, %v666
    %v668 = vpop.f32.mrf.mxu0
    %v669 = vpop.f32.mrf.mxu0
    %v670 = vadd.f32 %v445, %v669
    %v671 = vpop.f32.mrf.mxu0
    %672 = vmatprep.mubr.bf16.mxu0 0
    %673 = vmatmul.mubr.bf16.gmra.mxu0 %v148
    %v674 = vpop.f32.mrf.mxu0
    %v675 = vadd.f32 %v450, %v674
    %v676 = vpop.f32.mrf.mxu0
    %v677 = vpop.f32.mrf.mxu0
    %v678 = vadd.f32 %v453, %v677
    %v679 = vpop.f32.mrf.mxu0
    %680 = vmatprep.mubr.bf16.mxu0 0
    %681 = vmatmul.mubr.bf16.gmra.mxu0 %v149
    %v682 = vpop.f32.mrf.mxu0
    %v683 = vadd.f32 %v458, %v682
    %v684 = vpop.f32.mrf.mxu0
    %v685 = vpop.f32.mrf.mxu0
    %v686 = vadd.f32 %v461, %v685
    %v687 = vpop.f32.mrf.mxu0
    %688 = vmatprep.mubr.bf16.mxu0 0
    %689 = vmatmul.mubr.bf16.gmra.mxu0 %v150
    %v690 = vpop.f32.mrf.mxu0
    %v691 = vadd.f32 %v466, %v690
    %v692 = vpop.f32.mrf.mxu0
    %v693 = vpop.f32.mrf.mxu0
    %v694 = vadd.f32 %v469, %v693
    %v695 = vpop.f32.mrf.mxu0
    %696 = vmatprep.mubr.bf16.mxu0 0
    %697 = vmatmul.mubr.bf16.gmra.mxu0 %v151
    %v698 = vpop.f32.mrf.mxu0
    %v699 = vadd.f32 %v474, %v698
    %v700 = vpop.f32.mrf.mxu0
    %v701 = vpop.f32.mrf.mxu0
    %v702 = vadd.f32 %v477, %v701
    %v703 = vpop.f32.mrf.mxu0
    %704 = vmatprep.mubr.bf16.mxu0 0
    %705 = vmatmul.mubr.bf16.gmra.mxu0 %v152
    %v706 = vpop.f32.mrf.mxu0
    %v707 = vadd.f32 %v482, %v706
    %v708 = vpop.f32.mrf.mxu0
    %v709 = vpop.f32.mrf.mxu0
    %v710 = vadd.f32 %v485, %v709
    %v711 = vpop.f32.mrf.mxu0
    %712 = vmatprep.mubr.bf16.mxu0 0
    %713 = vmatmul.mubr.bf16.gmra.mxu0 %v153
    %v714 = vpop.f32.mrf.mxu0
    %v715 = vadd.f32 %v490, %v714
    %v716 = vpop.f32.mrf.mxu0
    %v717 = vpop.f32.mrf.mxu0
    %v718 = vadd.f32 %v493, %v717
    %v719 = vpop.f32.mrf.mxu0
    %720 = vmatprep.mubr.bf16.mxu0 0
    %721 = vmatmul.mubr.bf16.gmra.mxu0 %v154
    %v722 = vpop.f32.mrf.mxu0
    %v723 = vadd.f32 %v498, %v722
    %v724 = vpop.f32.mrf.mxu0
    %v725 = vpop.f32.mrf.mxu0
    %v726 = vadd.f32 %v501, %v725
    %v727 = vpop.f32.mrf.mxu0
    %728 = vmatprep.mubr.bf16.mxu0 0
    %729 = vmatmul.mubr.bf16.gmra.mxu0 %v155
    %v730 = vpop.f32.mrf.mxu0
    %v731 = vadd.f32 %v506, %v730
    %v732 = vpop.f32.mrf.mxu0
    %v733 = vpop.f32.mrf.mxu0
    %v734 = vadd.f32 %v509, %v733
    %v735 = vpop.f32.mrf.mxu0
    %736 = vmatprep.mubr.bf16.mxu0 0
    %737 = vmatmul.mubr.bf16.gmra.mxu0 %v156
    %v738 = vpop.f32.mrf.mxu0
    %v739 = vadd.f32 %v514, %v738
    %v740 = vpop.f32.mrf.mxu0
    %v741 = vpop.f32.mrf.mxu0
    %v742 = vadd.f32 %v517, %v741
    %v743 = vpop.f32.mrf.mxu0
    %744 = vmatprep.mubr.bf16.mxu0 0
    %745 = vmatmul.mubr.bf16.gmra.mxu0 %v157
    %v746 = vpop.f32.mrf.mxu0
    %v747 = vadd.f32 %v522, %v746
    %v748 = vpop.f32.mrf.mxu0
    %v749 = vpop.f32.mrf.mxu0
    %v750 = vadd.f32 %v525, %v749
    %v751 = vpop.f32.mrf.mxu0
    %752 = vmatprep.mubr.bf16.mxu0 0
    %753 = vmatmul.mubr.bf16.gmra.mxu0 %v158
    %v754 = vpop.f32.mrf.mxu0
    %v755 = vadd.f32 %v530, %v754
    %v756 = vpop.f32.mrf.mxu0
    %v757 = vpop.f32.mrf.mxu0
    %v758 = vadd.f32 %v533, %v757
    %v759 = vpop.f32.mrf.mxu0
    %760 = vmatprep.mubr.bf16.mxu0 0
    %761 = vmatmul.mubr.bf16.gmra.mxu0 %v159
    %v762 = vpop.f32.mrf.mxu0
    %v763 = vadd.f32 %v538, %v762
    %v764 = vpop.f32.mrf.mxu0
    %v765 = vpop.f32.mrf.mxu0
    %v766 = vadd.f32 %v541, %v765
    %v767 = vpop.f32.mrf.mxu0
    %768 = vmatprep.mubr.bf16.mxu0 0
    %769 = vmatmul.mubr.bf16.gmra.mxu0 %v160
    %v770 = vpop.f32.mrf.mxu0
    %v771 = vadd.f32 %v546, %v770
    %v772 = vpop.f32.mrf.mxu0
    %v773 = vpop.f32.mrf.mxu0
    %v774 = vadd.f32 %v549, %v773
    %v775 = vpop.f32.mrf.mxu0
    %776 = vdwg.mxu0
    %s777 = scalar_lea.vmem %s1, 128
    %v778 = vld [vmem:[%s777] sm:$0xf]
    %v779 = vld [vmem:[%s777 + $0x4] sm:$0xf]
    %v780 = vld [vmem:[%s777 + $0x8] sm:$0xf]
    %v781 = vld [vmem:[%s777 + $0xc] sm:$0xf]
    %v782 = vld [vmem:[%s777 + $0x10] sm:$0xf]
    %v783 = vld [vmem:[%s777 + $0x14] sm:$0xf]
    %v784 = vld [vmem:[%s777 + $0x18] sm:$0xf]
    %v785 = vld [vmem:[%s777 + $0x1c] sm:$0xf]
    %v786 = vld [vmem:[%s777 + $0x20] sm:$0xf]
    %v787 = vld [vmem:[%s777 + $0x24] sm:$0xf]
    %v788 = vld [vmem:[%s777 + $0x28] sm:$0xf]
    %v789 = vld [vmem:[%s777 + $0x2c] sm:$0xf]
    %v790 = vld [vmem:[%s777 + $0x30] sm:$0xf]
    %v791 = vld [vmem:[%s777 + $0x34] sm:$0xf]
    %v792 = vld [vmem:[%s777 + $0x38] sm:$0xf]
    %v793 = vld [vmem:[%s777 + $0x3c] sm:$0xf]
    %vm795 = vcmask 1046528
    %v796 = vrot.slane %v145, 1
    %v797 = vrot.slane %v146, 1
    %v798 = vsel %vm795, %v796, %v797
    %v799 = vrot.slane %v147, 1
    %v800 = vsel %vm795, %v797, %v799
    %v801 = vrot.slane %v148, 1
    %v802 = vsel %vm795, %v799, %v801
    %v803 = vrot.slane %v149, 1
    %v804 = vsel %vm795, %v801, %v803
    %v805 = vrot.slane %v150, 1
    %v806 = vsel %vm795, %v803, %v805
    %v807 = vrot.slane %v151, 1
    %v808 = vsel %vm795, %v805, %v807
    %v809 = vrot.slane %v152, 1
    %v810 = vsel %vm795, %v807, %v809
    %v811 = vrot.slane %v153, 1
    %v812 = vsel %vm795, %v809, %v811
    %v813 = vrot.slane %v154, 1
    %v814 = vsel %vm795, %v811, %v813
    %v815 = vrot.slane %v155, 1
    %v816 = vsel %vm795, %v813, %v815
    %v817 = vrot.slane %v156, 1
    %v818 = vsel %vm795, %v815, %v817
    %v819 = vrot.slane %v157, 1
    %v820 = vsel %vm795, %v817, %v819
    %v821 = vrot.slane %v158, 1
    %v822 = vsel %vm795, %v819, %v821
    %v823 = vrot.slane %v159, 1
    %v824 = vsel %vm795, %v821, %v823
    %v825 = vrot.slane %v160, 1
    %v826 = vsel %vm795, %v823, %v825
    %v827 = vrot.slane 0, 1
    %v828 = vsel %vm795, %v825, %v827
    %v861 = vunpack.c.l.b16 %v778
    %v862 = vunpack.c.l.b16 %v779
    %v863 = vunpack.c.l.b16 %v780
    %v864 = vunpack.c.l.b16 %v781
    %v865 = vunpack.c.l.b16 %v782
    %v866 = vunpack.c.l.b16 %v783
    %v867 = vunpack.c.l.b16 %v784
    %v868 = vunpack.c.l.b16 %v785
    %v869 = vunpack.c.l.b16 %v786
    %v870 = vunpack.c.l.b16 %v787
    %v871 = vunpack.c.l.b16 %v788
    %v872 = vunpack.c.l.b16 %v789
    %v873 = vunpack.c.l.b16 %v790
    %v874 = vunpack.c.l.b16 %v791
    %v875 = vunpack.c.l.b16 %v792
    %v876 = vunpack.c.l.b16 %v793
    %v877 = vpack.c.b16 %v862, %v861
    %v878 = vpack.c.b16 %v864, %v863
    %v879 = vpack.c.b16 %v866, %v865
    %v880 = vpack.c.b16 %v868, %v867
    %v881 = vpack.c.b16 %v870, %v869
    %v882 = vpack.c.b16 %v872, %v871
    %v883 = vpack.c.b16 %v874, %v873
    %v884 = vpack.c.b16 %v876, %v875
    %893 = vmatprep.subr.bf16.mxu0 0
    %894 = vmatpush1.bf16.msra.mxu0 %v884
    %895 = vmatprep.subr.bf16.mxu0 0
    %896 = vmatpush1.bf16.msra.mxu0 %v883
    %897 = vmatprep.subr.bf16.mxu0 0
    %898 = vmatpush1.bf16.msra.mxu0 %v882
    %899 = vmatprep.subr.bf16.mxu0 0
    %900 = vmatpush1.bf16.msra.mxu0 %v881
    %901 = vmatprep.subr.bf16.mxu0 0
    %902 = vmatpush1.bf16.msra.mxu0 %v880
    %903 = vmatprep.subr.bf16.mxu0 0
    %904 = vmatpush1.bf16.msra.mxu0 %v879
    %905 = vmatprep.subr.bf16.mxu0 0
    %906 = vmatpush1.bf16.msra.mxu0 %v878
    %907 = vmatprep.subr.bf16.mxu0 0
    %908 = vmatpush1.bf16.msra.mxu0 %v877
    %909 = vmatprep.subr.bf16.mxu0 0
    %910 = vmatpush2.bf16.msra.mxu0 0
    %911 = vmatprep.subr.bf16.mxu0 0
    %912 = vmatpush2.bf16.msra.mxu0 0
    %913 = vmatprep.subr.bf16.mxu0 0
    %914 = vmatpush2.bf16.msra.mxu0 0
    %915 = vmatprep.subr.bf16.mxu0 0
    %916 = vmatpush2.bf16.msra.mxu0 0
    %917 = vmatprep.subr.bf16.mxu0 0
    %918 = vmatpush2.bf16.msra.mxu0 0
    %919 = vmatprep.subr.bf16.mxu0 0
    %920 = vmatpush2.bf16.msra.mxu0 0
    %921 = vmatprep.subr.bf16.mxu0 0
    %922 = vmatpush2.bf16.msra.mxu0 0
    %923 = vmatprep.subr.bf16.mxu0 0
    %924 = vmatpush2.bf16.msra.mxu0 0
    %925 = vmatprep.mubr.bf16.mxu0 0
    %926 = vmatmul.mubr.bf16.gmra.mxu0 %v798
    %v927 = vpop.f32.mrf.mxu0
    %v928 = vadd.f32 0.0, %v927
    %v929 = vpop.f32.mrf.mxu0
    %v930 = vpop.f32.mrf.mxu0
    %v931 = vadd.f32 0.0, %v930
    %v932 = vpop.f32.mrf.mxu0
    %933 = vmatprep.mubr.bf16.mxu0 0
    %934 = vmatmul.mubr.bf16.gmra.mxu0 %v800
    %v935 = vpop.f32.mrf.mxu0
    %v936 = vadd.f32 0.0, %v935
    %v937 = vpop.f32.mrf.mxu0
    %v938 = vpop.f32.mrf.mxu0
    %v939 = vadd.f32 0.0, %v938
    %v940 = vpop.f32.mrf.mxu0
    %941 = vmatprep.mubr.bf16.mxu0 0
    %942 = vmatmul.mubr.bf16.gmra.mxu0 %v802
    %v943 = vpop.f32.mrf.mxu0
    %v944 = vadd.f32 0.0, %v943
    %v945 = vpop.f32.mrf.mxu0
    %v946 = vpop.f32.mrf.mxu0
    %v947 = vadd.f32 0.0, %v946
    %v948 = vpop.f32.mrf.mxu0
    %949 = vmatprep.mubr.bf16.mxu0 0
    %950 = vmatmul.mubr.bf16.gmra.mxu0 %v804
    %v951 = vpop.f32.mrf.mxu0
    %v952 = vadd.f32 0.0, %v951
    %v953 = vpop.f32.mrf.mxu0
    %v954 = vpop.f32.mrf.mxu0
    %v955 = vadd.f32 0.0, %v954
    %v956 = vpop.f32.mrf.mxu0
    %957 = vmatprep.mubr.bf16.mxu0 0
    %958 = vmatmul.mubr.bf16.gmra.mxu0 %v806
    %v959 = vpop.f32.mrf.mxu0
    %v960 = vadd.f32 0.0, %v959
    %v961 = vpop.f32.mrf.mxu0
    %v962 = vpop.f32.mrf.mxu0
    %v963 = vadd.f32 0.0, %v962
    %v964 = vpop.f32.mrf.mxu0
    %965 = vmatprep.mubr.bf16.mxu0 0
    %966 = vmatmul.mubr.bf16.gmra.mxu0 %v808
    %v967 = vpop.f32.mrf.mxu0
    %v968 = vadd.f32 0.0, %v967
    %v969 = vpop.f32.mrf.mxu0
    %v970 = vpop.f32.mrf.mxu0
    %v971 = vadd.f32 0.0, %v970
    %v972 = vpop.f32.mrf.mxu0
    %973 = vmatprep.mubr.bf16.mxu0 0
    %974 = vmatmul.mubr.bf16.gmra.mxu0 %v810
    %v975 = vpop.f32.mrf.mxu0
    %v976 = vadd.f32 0.0, %v975
    %v977 = vpop.f32.mrf.mxu0
    %v978 = vpop.f32.mrf.mxu0
    %v979 = vadd.f32 0.0, %v978
    %v980 = vpop.f32.mrf.mxu0
    %981 = vmatprep.mubr.bf16.mxu0 0
    %982 = vmatmul.mubr.bf16.gmra.mxu0 %v812
    %v983 = vpop.f32.mrf.mxu0
    %v984 = vadd.f32 0.0, %v983
    %v985 = vpop.f32.mrf.mxu0
    %v986 = vpop.f32.mrf.mxu0
    %v987 = vadd.f32 0.0, %v986
    %v988 = vpop.f32.mrf.mxu0
    %989 = vmatprep.mubr.bf16.mxu0 0
    %990 = vmatmul.mubr.bf16.gmra.mxu0 %v814
    %v991 = vpop.f32.mrf.mxu0
    %v992 = vadd.f32 0.0, %v991
    %v993 = vpop.f32.mrf.mxu0
    %v994 = vpop.f32.mrf.mxu0
    %v995 = vadd.f32 0.0, %v994
    %v996 = vpop.f32.mrf.mxu0
    %997 = vmatprep.mubr.bf16.mxu0 0
    %998 = vmatmul.mubr.bf16.gmra.mxu0 %v816
    %v999 = vpop.f32.mrf.mxu0
    %v1000 = vadd.f32 0.0, %v999
    %v1001 = vpop.f32.mrf.mxu0
    %v1002 = vpop.f32.mrf.mxu0
    %v1003 = vadd.f32 0.0, %v1002
    %v1004 = vpop.f32.mrf.mxu0
    %1005 = vmatprep.mubr.bf16.mxu0 0
    %1006 = vmatmul.mubr.bf16.gmra.mxu0 %v818
    %v1007 = vpop.f32.mrf.mxu0
    %v1008 = vadd.f32 0.0, %v1007
    %v1009 = vpop.f32.mrf.mxu0
    %v1010 = vpop.f32.mrf.mxu0
    %v1011 = vadd.f32 0.0, %v1010
    %v1012 = vpop.f32.mrf.mxu0
    %1013 = vmatprep.mubr.bf16.mxu0 0
    %1014 = vmatmul.mubr.bf16.gmra.mxu0 %v820
    %v1015 = vpop.f32.mrf.mxu0
    %v1016 = vadd.f32 0.0, %v1015
    %v1017 = vpop.f32.mrf.mxu0
    %v1018 = vpop.f32.mrf.mxu0
    %v1019 = vadd.f32 0.0, %v1018
    %v1020 = vpop.f32.mrf.mxu0
    %1021 = vmatprep.mubr.bf16.mxu0 0
    %1022 = vmatmul.mubr.bf16.gmra.mxu0 %v822
    %v1023 = vpop.f32.mrf.mxu0
    %v1024 = vadd.f32 0.0, %v1023
    %v1025 = vpop.f32.mrf.mxu0
    %v1026 = vpop.f32.mrf.mxu0
    %v1027 = vadd.f32 0.0, %v1026
    %v1028 = vpop.f32.mrf.mxu0
    %1029 = vmatprep.mubr.bf16.mxu0 0
    %1030 = vmatmul.mubr.bf16.gmra.mxu0 %v824
    %v1031 = vpop.f32.mrf.mxu0
    %v1032 = vadd.f32 0.0, %v1031
    %v1033 = vpop.f32.mrf.mxu0
    %v1034 = vpop.f32.mrf.mxu0
    %v1035 = vadd.f32 0.0, %v1034
    %v1036 = vpop.f32.mrf.mxu0
    %1037 = vmatprep.mubr.bf16.mxu0 0
    %1038 = vmatmul.mubr.bf16.gmra.mxu0 %v826
    %v1039 = vpop.f32.mrf.mxu0
    %v1040 = vadd.f32 0.0, %v1039
    %v1041 = vpop.f32.mrf.mxu0
    %v1042 = vpop.f32.mrf.mxu0
    %v1043 = vadd.f32 0.0, %v1042
    %v1044 = vpop.f32.mrf.mxu0
    %1045 = vmatprep.mubr.bf16.mxu0 0
    %1046 = vmatmul.mubr.bf16.gmra.mxu0 %v828
    %v1047 = vpop.f32.mrf.mxu0
    %v1048 = vadd.f32 0.0, %v1047
    %v1049 = vpop.f32.mrf.mxu0
    %v1050 = vpop.f32.mrf.mxu0
    %v1051 = vadd.f32 0.0, %v1050
    %v1052 = vpop.f32.mrf.mxu0
    %1053 = vdwg.mxu0
    %v1054 = vadd.f32 %v651, %v928
    %v1055 = vadd.f32 %v654, %v931
    %v1056 = vadd.f32 %v659, %v936
    %v1057 = vadd.f32 %v662, %v939
    %v1058 = vadd.f32 %v667, %v944
    %v1059 = vadd.f32 %v670, %v947
    %v1060 = vadd.f32 %v675, %v952
    %v1061 = vadd.f32 %v678, %v955
    %v1062 = vadd.f32 %v683, %v960
    %v1063 = vadd.f32 %v686, %v963
    %v1064 = vadd.f32 %v691, %v968
    %v1065 = vadd.f32 %v694, %v971
    %v1066 = vadd.f32 %v699, %v976
    %v1067 = vadd.f32 %v702, %v979
    %v1068 = vadd.f32 %v707, %v984
    %v1069 = vadd.f32 %v710, %v987
    %v1070 = vadd.f32 %v715, %v992
    %v1071 = vadd.f32 %v718, %v995
    %v1072 = vadd.f32 %v723, %v1000
    %v1073 = vadd.f32 %v726, %v1003
    %v1074 = vadd.f32 %v731, %v1008
    %v1075 = vadd.f32 %v734, %v1011
    %v1076 = vadd.f32 %v739, %v1016
    %v1077 = vadd.f32 %v742, %v1019
    %v1078 = vadd.f32 %v747, %v1024
    %v1079 = vadd.f32 %v750, %v1027
    %v1080 = vadd.f32 %v755, %v1032
    %v1081 = vadd.f32 %v758, %v1035
    %v1082 = vadd.f32 %v763, %v1040
    %v1083 = vadd.f32 %v766, %v1043
    %v1084 = vadd.f32 %v771, %v1048
    %v1085 = vadd.f32 %v774, %v1051
    %v1086 = vld [vmem:[%s2] sm:$0x1]
    %v1088 = vlaneseq
    %v1089 = vshrl.u32 %v1088, 7
    %v1090 = vsub.s32 0, %v1089
    %v1091 = vrot.slane %v1086, %v1090
    %v1093 = vadd.f32 %v1054, %v1091
    %v1094 = vadd.f32 %v1055, %v1091
    %v1095 = vadd.f32 %v1056, %v1091
    %v1096 = vadd.f32 %v1057, %v1091
    %v1097 = vadd.f32 %v1058, %v1091
    %v1098 = vadd.f32 %v1059, %v1091
    %v1099 = vadd.f32 %v1060, %v1091
    %v1100 = vadd.f32 %v1061, %v1091
    %v1101 = vadd.f32 %v1062, %v1091
    %v1102 = vadd.f32 %v1063, %v1091
    %v1103 = vadd.f32 %v1064, %v1091
    %v1104 = vadd.f32 %v1065, %v1091
    %v1105 = vadd.f32 %v1066, %v1091
    %v1106 = vadd.f32 %v1067, %v1091
    %v1107 = vadd.f32 %v1068, %v1091
    %v1108 = vadd.f32 %v1069, %v1091
    %v1109 = vadd.f32 %v1070, %v1091
    %v1110 = vadd.f32 %v1071, %v1091
    %v1111 = vadd.f32 %v1072, %v1091
    %v1112 = vadd.f32 %v1073, %v1091
    %v1113 = vadd.f32 %v1074, %v1091
    %v1114 = vadd.f32 %v1075, %v1091
    %v1115 = vadd.f32 %v1076, %v1091
    %v1116 = vadd.f32 %v1077, %v1091
    %v1117 = vadd.f32 %v1078, %v1091
    %v1118 = vadd.f32 %v1079, %v1091
    %v1119 = vadd.f32 %v1080, %v1091
    %v1120 = vadd.f32 %v1081, %v1091
    %v1121 = vadd.f32 %v1082, %v1091
    %v1122 = vadd.f32 %v1083, %v1091
    %v1123 = vadd.f32 %v1084, %v1091
    %v1124 = vadd.f32 %v1085, %v1091
    %v1125 = vmax.f32 %v1093, 0.0
    %v1126 = vmax.f32 %v1094, 0.0
    %v1127 = vmax.f32 %v1095, 0.0
    %v1128 = vmax.f32 %v1096, 0.0
    %v1129 = vmax.f32 %v1097, 0.0
    %v1130 = vmax.f32 %v1098, 0.0
    %v1131 = vmax.f32 %v1099, 0.0
    %v1132 = vmax.f32 %v1100, 0.0
    %v1133 = vmax.f32 %v1101, 0.0
    %v1134 = vmax.f32 %v1102, 0.0
    %v1135 = vmax.f32 %v1103, 0.0
    %v1136 = vmax.f32 %v1104, 0.0
    %v1137 = vmax.f32 %v1105, 0.0
    %v1138 = vmax.f32 %v1106, 0.0
    %v1139 = vmax.f32 %v1107, 0.0
    %v1140 = vmax.f32 %v1108, 0.0
    %v1141 = vmax.f32 %v1109, 0.0
    %v1142 = vmax.f32 %v1110, 0.0
    %v1143 = vmax.f32 %v1111, 0.0
    %v1144 = vmax.f32 %v1112, 0.0
    %v1145 = vmax.f32 %v1113, 0.0
    %v1146 = vmax.f32 %v1114, 0.0
    %v1147 = vmax.f32 %v1115, 0.0
    %v1148 = vmax.f32 %v1116, 0.0
    %v1149 = vmax.f32 %v1117, 0.0
    %v1150 = vmax.f32 %v1118, 0.0
    %v1151 = vmax.f32 %v1119, 0.0
    %v1152 = vmax.f32 %v1120, 0.0
    %v1153 = vmax.f32 %v1121, 0.0
    %v1154 = vmax.f32 %v1122, 0.0
    %v1155 = vmax.f32 %v1123, 0.0
    %v1156 = vmax.f32 %v1124, 0.0
    %v1189 = vcombine.high %v1125, %v1125
    %v1191 = vunpack.c.l.s4 1966171168
    %v1192 = vunpack.c.0.s8 %v1191
    %v1193 = vlaneseq
    %v1194 = vshrl.u32 %v1193, 7
    %v1195 = vsub.s32 %v1192, %v1194
    %v1196 = vrot.slane %v1125, %v1195
    %v1198 = vunpack.c.l.s4 1966171168
    %v1199 = vunpack.c.0.s8 %v1198
    %v1200 = vlaneseq
    %v1201 = vshrl.u32 %v1200, 7
    %v1202 = vsub.s32 %v1199, %v1201
    %v1203 = vrot.slane %v1189, %v1202
    %v1204 = vcombine.high %v1196, %v1196
    %v1205 = vcombine.high %v1203, %v1203
    %v1207 = vunpack.c.l.s4 1966171168
    %v1208 = vunpack.c.0.s8 %v1207
    %v1209 = vlaneseq
    %v1210 = vshrl.u32 %v1209, 7
    %v1211 = vsub.s32 %v1208, %v1210
    %v1212 = vrot.slane %v1196, %v1211
    %v1214 = vunpack.c.l.s4 1966171168
    %v1215 = vunpack.c.0.s8 %v1214
    %v1216 = vlaneseq
    %v1217 = vshrl.u32 %v1216, 7
    %v1218 = vsub.s32 %v1215, %v1217
    %v1219 = vrot.slane %v1203, %v1218
    %v1221 = vunpack.c.l.s4 1966171168
    %v1222 = vunpack.c.0.s8 %v1221
    %v1223 = vlaneseq
    %v1224 = vshrl.u32 %v1223, 7
    %v1225 = vsub.s32 %v1222, %v1224
    %v1226 = vrot.slane %v1204, %v1225
    %v1228 = vunpack.c.l.s4 1966171168
    %v1229 = vunpack.c.0.s8 %v1228
    %v1230 = vlaneseq
    %v1231 = vshrl.u32 %v1230, 7
    %v1232 = vsub.s32 %v1229, %v1231
    %v1233 = vrot.slane %v1205, %v1232
    %v1234 = vcombine.high %v1212, %v1212
    %v1235 = vcombine.high %v1219, %v1219
    %v1236 = vcombine.high %v1226, %v1226
    %v1237 = vcombine.high %v1233, %v1233
    %v1238 = vcombine.high %v1126, %v1126
    %v1240 = vunpack.c.l.s4 1966171168
    %v1241 = vunpack.c.0.s8 %v1240
    %v1242 = vlaneseq
    %v1243 = vshrl.u32 %v1242, 7
    %v1244 = vsub.s32 %v1241, %v1243
    %v1245 = vrot.slane %v1126, %v1244
    %v1247 = vunpack.c.l.s4 1966171168
    %v1248 = vunpack.c.0.s8 %v1247
    %v1249 = vlaneseq
    %v1250 = vshrl.u32 %v1249, 7
    %v1251 = vsub.s32 %v1248, %v1250
    %v1252 = vrot.slane %v1238, %v1251
    %v1253 = vcombine.high %v1245, %v1245
    %v1254 = vcombine.high %v1252, %v1252
    %v1256 = vunpack.c.l.s4 1966171168
    %v1257 = vunpack.c.0.s8 %v1256
    %v1258 = vlaneseq
    %v1259 = vshrl.u32 %v1258, 7
    %v1260 = vsub.s32 %v1257, %v1259
    %v1261 = vrot.slane %v1245, %v1260
    %v1263 = vunpack.c.l.s4 1966171168
    %v1264 = vunpack.c.0.s8 %v1263
    %v1265 = vlaneseq
    %v1266 = vshrl.u32 %v1265, 7
    %v1267 = vsub.s32 %v1264, %v1266
    %v1268 = vrot.slane %v1252, %v1267
    %v1270 = vunpack.c.l.s4 1966171168
    %v1271 = vunpack.c.0.s8 %v1270
    %v1272 = vlaneseq
    %v1273 = vshrl.u32 %v1272, 7
    %v1274 = vsub.s32 %v1271, %v1273
    %v1275 = vrot.slane %v1253, %v1274
    %v1277 = vunpack.c.l.s4 1966171168
    %v1278 = vunpack.c.0.s8 %v1277
    %v1279 = vlaneseq
    %v1280 = vshrl.u32 %v1279, 7
    %v1281 = vsub.s32 %v1278, %v1280
    %v1282 = vrot.slane %v1254, %v1281
    %v1283 = vcombine.high %v1261, %v1261
    %v1284 = vcombine.high %v1268, %v1268
    %v1285 = vcombine.high %v1275, %v1275
    %v1286 = vcombine.high %v1282, %v1282
    %v1287 = vcombine.high %v1127, %v1127
    %v1289 = vunpack.c.l.s4 1966171168
    %v1290 = vunpack.c.0.s8 %v1289
    %v1291 = vlaneseq
    %v1292 = vshrl.u32 %v1291, 7
    %v1293 = vsub.s32 %v1290, %v1292
    %v1294 = vrot.slane %v1127, %v1293
    %v1296 = vunpack.c.l.s4 1966171168
    %v1297 = vunpack.c.0.s8 %v1296
    %v1298 = vlaneseq
    %v1299 = vshrl.u32 %v1298, 7
    %v1300 = vsub.s32 %v1297, %v1299
    %v1301 = vrot.slane %v1287, %v1300
    %v1302 = vcombine.high %v1294, %v1294
    %v1303 = vcombine.high %v1301, %v1301
    %v1305 = vunpack.c.l.s4 1966171168
    %v1306 = vunpack.c.0.s8 %v1305
    %v1307 = vlaneseq
    %v1308 = vshrl.u32 %v1307, 7
    %v1309 = vsub.s32 %v1306, %v1308
    %v1310 = vrot.slane %v1294, %v1309
    %v1312 = vunpack.c.l.s4 1966171168
    %v1313 = vunpack.c.0.s8 %v1312
    %v1314 = vlaneseq
    %v1315 = vshrl.u32 %v1314, 7
    %v1316 = vsub.s32 %v1313, %v1315
    %v1317 = vrot.slane %v1301, %v1316
    %v1319 = vunpack.c.l.s4 1966171168
    %v1320 = vunpack.c.0.s8 %v1319
    %v1321 = vlaneseq
    %v1322 = vshrl.u32 %v1321, 7
    %v1323 = vsub.s32 %v1320, %v1322
    %v1324 = vrot.slane %v1302, %v1323
    %v1326 = vunpack.c.l.s4 1966171168
    %v1327 = vunpack.c.0.s8 %v1326
    %v1328 = vlaneseq
    %v1329 = vshrl.u32 %v1328, 7
    %v1330 = vsub.s32 %v1327, %v1329
    %v1331 = vrot.slane %v1303, %v1330
    %v1332 = vcombine.high %v1310, %v1310
    %v1333 = vcombine.high %v1317, %v1317
    %v1334 = vcombine.high %v1324, %v1324
    %v1335 = vcombine.high %v1331, %v1331
    %v1336 = vcombine.high %v1128, %v1128
    %v1338 = vunpack.c.l.s4 1966171168
    %v1339 = vunpack.c.0.s8 %v1338
    %v1340 = vlaneseq
    %v1341 = vshrl.u32 %v1340, 7
    %v1342 = vsub.s32 %v1339, %v1341
    %v1343 = vrot.slane %v1128, %v1342
    %v1345 = vunpack.c.l.s4 1966171168
    %v1346 = vunpack.c.0.s8 %v1345
    %v1347 = vlaneseq
    %v1348 = vshrl.u32 %v1347, 7
    %v1349 = vsub.s32 %v1346, %v1348
    %v1350 = vrot.slane %v1336, %v1349
    %v1351 = vcombine.high %v1343, %v1343
    %v1352 = vcombine.high %v1350, %v1350
    %v1354 = vunpack.c.l.s4 1966171168
    %v1355 = vunpack.c.0.s8 %v1354
    %v1356 = vlaneseq
    %v1357 = vshrl.u32 %v1356, 7
    %v1358 = vsub.s32 %v1355, %v1357
    %v1359 = vrot.slane %v1343, %v1358
    %v1361 = vunpack.c.l.s4 1966171168
    %v1362 = vunpack.c.0.s8 %v1361
    %v1363 = vlaneseq
    %v1364 = vshrl.u32 %v1363, 7
    %v1365 = vsub.s32 %v1362, %v1364
    %v1366 = vrot.slane %v1350, %v1365
    %v1368 = vunpack.c.l.s4 1966171168
    %v1369 = vunpack.c.0.s8 %v1368
    %v1370 = vlaneseq
    %v1371 = vshrl.u32 %v1370, 7
    %v1372 = vsub.s32 %v1369, %v1371
    %v1373 = vrot.slane %v1351, %v1372
    %v1375 = vunpack.c.l.s4 1966171168
    %v1376 = vunpack.c.0.s8 %v1375
    %v1377 = vlaneseq
    %v1378 = vshrl.u32 %v1377, 7
    %v1379 = vsub.s32 %v1376, %v1378
    %v1380 = vrot.slane %v1352, %v1379
    %v1381 = vcombine.high %v1359, %v1359
    %v1382 = vcombine.high %v1373, %v1373
    %v1383 = vcombine.high %v1129, %v1129
    %v1385 = vunpack.c.l.s4 1966171168
    %v1386 = vunpack.c.0.s8 %v1385
    %v1387 = vlaneseq
    %v1388 = vshrl.u32 %v1387, 7
    %v1389 = vsub.s32 %v1386, %v1388
    %v1390 = vrot.slane %v1129, %v1389
    %v1392 = vunpack.c.l.s4 1966171168
    %v1393 = vunpack.c.0.s8 %v1392
    %v1394 = vlaneseq
    %v1395 = vshrl.u32 %v1394, 7
    %v1396 = vsub.s32 %v1393, %v1395
    %v1397 = vrot.slane %v1383, %v1396
    %v1398 = vcombine.high %v1390, %v1390
    %v1399 = vcombine.high %v1397, %v1397
    %v1401 = vunpack.c.l.s4 1966171168
    %v1402 = vunpack.c.0.s8 %v1401
    %v1403 = vlaneseq
    %v1404 = vshrl.u32 %v1403, 7
    %v1405 = vsub.s32 %v1402, %v1404
    %v1406 = vrot.slane %v1390, %v1405
    %v1408 = vunpack.c.l.s4 1966171168
    %v1409 = vunpack.c.0.s8 %v1408
    %v1410 = vlaneseq
    %v1411 = vshrl.u32 %v1410, 7
    %v1412 = vsub.s32 %v1409, %v1411
    %v1413 = vrot.slane %v1397, %v1412
    %v1415 = vunpack.c.l.s4 1966171168
    %v1416 = vunpack.c.0.s8 %v1415
    %v1417 = vlaneseq
    %v1418 = vshrl.u32 %v1417, 7
    %v1419 = vsub.s32 %v1416, %v1418
    %v1420 = vrot.slane %v1398, %v1419
    %v1422 = vunpack.c.l.s4 1966171168
    %v1423 = vunpack.c.0.s8 %v1422
    %v1424 = vlaneseq
    %v1425 = vshrl.u32 %v1424, 7
    %v1426 = vsub.s32 %v1423, %v1425
    %v1427 = vrot.slane %v1399, %v1426
    %v1428 = vcombine.high %v1406, %v1406
    %v1429 = vcombine.high %v1413, %v1413
    %v1430 = vcombine.high %v1420, %v1420
    %v1431 = vcombine.high %v1427, %v1427
    %v1432 = vcombine.high %v1130, %v1130
    %v1434 = vunpack.c.l.s4 1966171168
    %v1435 = vunpack.c.0.s8 %v1434
    %v1436 = vlaneseq
    %v1437 = vshrl.u32 %v1436, 7
    %v1438 = vsub.s32 %v1435, %v1437
    %v1439 = vrot.slane %v1130, %v1438
    %v1441 = vunpack.c.l.s4 1966171168
    %v1442 = vunpack.c.0.s8 %v1441
    %v1443 = vlaneseq
    %v1444 = vshrl.u32 %v1443, 7
    %v1445 = vsub.s32 %v1442, %v1444
    %v1446 = vrot.slane %v1432, %v1445
    %v1447 = vcombine.high %v1439, %v1439
    %v1448 = vcombine.high %v1446, %v1446
    %v1450 = vunpack.c.l.s4 1966171168
    %v1451 = vunpack.c.0.s8 %v1450
    %v1452 = vlaneseq
    %v1453 = vshrl.u32 %v1452, 7
    %v1454 = vsub.s32 %v1451, %v1453
    %v1455 = vrot.slane %v1439, %v1454
    %v1457 = vunpack.c.l.s4 1966171168
    %v1458 = vunpack.c.0.s8 %v1457
    %v1459 = vlaneseq
    %v1460 = vshrl.u32 %v1459, 7
    %v1461 = vsub.s32 %v1458, %v1460
    %v1462 = vrot.slane %v1446, %v1461
    %v1464 = vunpack.c.l.s4 1966171168
    %v1465 = vunpack.c.0.s8 %v1464
    %v1466 = vlaneseq
    %v1467 = vshrl.u32 %v1466, 7
    %v1468 = vsub.s32 %v1465, %v1467
    %v1469 = vrot.slane %v1447, %v1468
    %v1471 = vunpack.c.l.s4 1966171168
    %v1472 = vunpack.c.0.s8 %v1471
    %v1473 = vlaneseq
    %v1474 = vshrl.u32 %v1473, 7
    %v1475 = vsub.s32 %v1472, %v1474
    %v1476 = vrot.slane %v1448, %v1475
    %v1477 = vcombine.high %v1455, %v1455
    %v1478 = vcombine.high %v1462, %v1462
    %v1479 = vcombine.high %v1469, %v1469
    %v1480 = vcombine.high %v1476, %v1476
    %v1481 = vcombine.high %v1131, %v1131
    %v1483 = vunpack.c.l.s4 1966171168
    %v1484 = vunpack.c.0.s8 %v1483
    %v1485 = vlaneseq
    %v1486 = vshrl.u32 %v1485, 7
    %v1487 = vsub.s32 %v1484, %v1486
    %v1488 = vrot.slane %v1131, %v1487
    %v1490 = vunpack.c.l.s4 1966171168
    %v1491 = vunpack.c.0.s8 %v1490
    %v1492 = vlaneseq
    %v1493 = vshrl.u32 %v1492, 7
    %v1494 = vsub.s32 %v1491, %v1493
    %v1495 = vrot.slane %v1481, %v1494
    %v1496 = vcombine.high %v1488, %v1488
    %v1497 = vcombine.high %v1495, %v1495
    %v1499 = vunpack.c.l.s4 1966171168
    %v1500 = vunpack.c.0.s8 %v1499
    %v1501 = vlaneseq
    %v1502 = vshrl.u32 %v1501, 7
    %v1503 = vsub.s32 %v1500, %v1502
    %v1504 = vrot.slane %v1488, %v1503
    %v1506 = vunpack.c.l.s4 1966171168
    %v1507 = vunpack.c.0.s8 %v1506
    %v1508 = vlaneseq
    %v1509 = vshrl.u32 %v1508, 7
    %v1510 = vsub.s32 %v1507, %v1509
    %v1511 = vrot.slane %v1495, %v1510
    %v1513 = vunpack.c.l.s4 1966171168
    %v1514 = vunpack.c.0.s8 %v1513
    %v1515 = vlaneseq
    %v1516 = vshrl.u32 %v1515, 7
    %v1517 = vsub.s32 %v1514, %v1516
    %v1518 = vrot.slane %v1496, %v1517
    %v1520 = vunpack.c.l.s4 1966171168
    %v1521 = vunpack.c.0.s8 %v1520
    %v1522 = vlaneseq
    %v1523 = vshrl.u32 %v1522, 7
    %v1524 = vsub.s32 %v1521, %v1523
    %v1525 = vrot.slane %v1497, %v1524
    %v1526 = vcombine.high %v1504, %v1504
    %v1527 = vcombine.high %v1511, %v1511
    %v1528 = vcombine.high %v1518, %v1518
    %v1529 = vcombine.high %v1525, %v1525
    %v1530 = vcombine.high %v1132, %v1132
    %v1532 = vunpack.c.l.s4 1966171168
    %v1533 = vunpack.c.0.s8 %v1532
    %v1534 = vlaneseq
    %v1535 = vshrl.u32 %v1534, 7
    %v1536 = vsub.s32 %v1533, %v1535
    %v1537 = vrot.slane %v1132, %v1536
    %v1539 = vunpack.c.l.s4 1966171168
    %v1540 = vunpack.c.0.s8 %v1539
    %v1541 = vlaneseq
    %v1542 = vshrl.u32 %v1541, 7
    %v1543 = vsub.s32 %v1540, %v1542
    %v1544 = vrot.slane %v1530, %v1543
    %v1545 = vcombine.high %v1537, %v1537
    %v1546 = vcombine.high %v1544, %v1544
    %v1548 = vunpack.c.l.s4 1966171168
    %v1549 = vunpack.c.0.s8 %v1548
    %v1550 = vlaneseq
    %v1551 = vshrl.u32 %v1550, 7
    %v1552 = vsub.s32 %v1549, %v1551
    %v1553 = vrot.slane %v1537, %v1552
    %v1555 = vunpack.c.l.s4 1966171168
    %v1556 = vunpack.c.0.s8 %v1555
    %v1557 = vlaneseq
    %v1558 = vshrl.u32 %v1557, 7
    %v1559 = vsub.s32 %v1556, %v1558
    %v1560 = vrot.slane %v1544, %v1559
    %v1562 = vunpack.c.l.s4 1966171168
    %v1563 = vunpack.c.0.s8 %v1562
    %v1564 = vlaneseq
    %v1565 = vshrl.u32 %v1564, 7
    %v1566 = vsub.s32 %v1563, %v1565
    %v1567 = vrot.slane %v1545, %v1566
    %v1569 = vunpack.c.l.s4 1966171168
    %v1570 = vunpack.c.0.s8 %v1569
    %v1571 = vlaneseq
    %v1572 = vshrl.u32 %v1571, 7
    %v1573 = vsub.s32 %v1570, %v1572
    %v1574 = vrot.slane %v1546, %v1573
    %v1575 = vcombine.high %v1553, %v1553
    %v1576 = vcombine.high %v1567, %v1567
    %v1577 = vcombine.high %v1133, %v1133
    %v1579 = vunpack.c.l.s4 1966171168
    %v1580 = vunpack.c.0.s8 %v1579
    %v1581 = vlaneseq
    %v1582 = vshrl.u32 %v1581, 7
    %v1583 = vsub.s32 %v1580, %v1582
    %v1584 = vrot.slane %v1133, %v1583
    %v1586 = vunpack.c.l.s4 1966171168
    %v1587 = vunpack.c.0.s8 %v1586
    %v1588 = vlaneseq
    %v1589 = vshrl.u32 %v1588, 7
    %v1590 = vsub.s32 %v1587, %v1589
    %v1591 = vrot.slane %v1577, %v1590
    %v1592 = vcombine.high %v1584, %v1584
    %v1593 = vcombine.high %v1591, %v1591
    %v1595 = vunpack.c.l.s4 1966171168
    %v1596 = vunpack.c.0.s8 %v1595
    %v1597 = vlaneseq
    %v1598 = vshrl.u32 %v1597, 7
    %v1599 = vsub.s32 %v1596, %v1598
    %v1600 = vrot.slane %v1584, %v1599
    %v1602 = vunpack.c.l.s4 1966171168
    %v1603 = vunpack.c.0.s8 %v1602
    %v1604 = vlaneseq
    %v1605 = vshrl.u32 %v1604, 7
    %v1606 = vsub.s32 %v1603, %v1605
    %v1607 = vrot.slane %v1591, %v1606
    %v1609 = vunpack.c.l.s4 1966171168
    %v1610 = vunpack.c.0.s8 %v1609
    %v1611 = vlaneseq
    %v1612 = vshrl.u32 %v1611, 7
    %v1613 = vsub.s32 %v1610, %v1612
    %v1614 = vrot.slane %v1592, %v1613
    %v1616 = vunpack.c.l.s4 1966171168
    %v1617 = vunpack.c.0.s8 %v1616
    %v1618 = vlaneseq
    %v1619 = vshrl.u32 %v1618, 7
    %v1620 = vsub.s32 %v1617, %v1619
    %v1621 = vrot.slane %v1593, %v1620
    %v1622 = vcombine.high %v1600, %v1600
    %v1623 = vcombine.high %v1607, %v1607
    %v1624 = vcombine.high %v1614, %v1614
    %v1625 = vcombine.high %v1621, %v1621
    %v1626 = vcombine.high %v1134, %v1134
    %v1628 = vunpack.c.l.s4 1966171168
    %v1629 = vunpack.c.0.s8 %v1628
    %v1630 = vlaneseq
    %v1631 = vshrl.u32 %v1630, 7
    %v1632 = vsub.s32 %v1629, %v1631
    %v1633 = vrot.slane %v1134, %v1632
    %v1635 = vunpack.c.l.s4 1966171168
    %v1636 = vunpack.c.0.s8 %v1635
    %v1637 = vlaneseq
    %v1638 = vshrl.u32 %v1637, 7
    %v1639 = vsub.s32 %v1636, %v1638
    %v1640 = vrot.slane %v1626, %v1639
    %v1641 = vcombine.high %v1633, %v1633
    %v1642 = vcombine.high %v1640, %v1640
    %v1644 = vunpack.c.l.s4 1966171168
    %v1645 = vunpack.c.0.s8 %v1644
    %v1646 = vlaneseq
    %v1647 = vshrl.u32 %v1646, 7
    %v1648 = vsub.s32 %v1645, %v1647
    %v1649 = vrot.slane %v1633, %v1648
    %v1651 = vunpack.c.l.s4 1966171168
    %v1652 = vunpack.c.0.s8 %v1651
    %v1653 = vlaneseq
    %v1654 = vshrl.u32 %v1653, 7
    %v1655 = vsub.s32 %v1652, %v1654
    %v1656 = vrot.slane %v1640, %v1655
    %v1658 = vunpack.c.l.s4 1966171168
    %v1659 = vunpack.c.0.s8 %v1658
    %v1660 = vlaneseq
    %v1661 = vshrl.u32 %v1660, 7
    %v1662 = vsub.s32 %v1659, %v1661
    %v1663 = vrot.slane %v1641, %v1662
    %v1665 = vunpack.c.l.s4 1966171168
    %v1666 = vunpack.c.0.s8 %v1665
    %v1667 = vlaneseq
    %v1668 = vshrl.u32 %v1667, 7
    %v1669 = vsub.s32 %v1666, %v1668
    %v1670 = vrot.slane %v1642, %v1669
    %v1671 = vcombine.high %v1649, %v1649
    %v1672 = vcombine.high %v1656, %v1656
    %v1673 = vcombine.high %v1663, %v1663
    %v1674 = vcombine.high %v1670, %v1670
    %v1675 = vcombine.high %v1135, %v1135
    %v1677 = vunpack.c.l.s4 1966171168
    %v1678 = vunpack.c.0.s8 %v1677
    %v1679 = vlaneseq
    %v1680 = vshrl.u32 %v1679, 7
    %v1681 = vsub.s32 %v1678, %v1680
    %v1682 = vrot.slane %v1135, %v1681
    %v1684 = vunpack.c.l.s4 1966171168
    %v1685 = vunpack.c.0.s8 %v1684
    %v1686 = vlaneseq
    %v1687 = vshrl.u32 %v1686, 7
    %v1688 = vsub.s32 %v1685, %v1687
    %v1689 = vrot.slane %v1675, %v1688
    %v1690 = vcombine.high %v1682, %v1682
    %v1691 = vcombine.high %v1689, %v1689
    %v1693 = vunpack.c.l.s4 1966171168
    %v1694 = vunpack.c.0.s8 %v1693
    %v1695 = vlaneseq
    %v1696 = vshrl.u32 %v1695, 7
    %v1697 = vsub.s32 %v1694, %v1696
    %v1698 = vrot.slane %v1682, %v1697
    %v1700 = vunpack.c.l.s4 1966171168
    %v1701 = vunpack.c.0.s8 %v1700
    %v1702 = vlaneseq
    %v1703 = vshrl.u32 %v1702, 7
    %v1704 = vsub.s32 %v1701, %v1703
    %v1705 = vrot.slane %v1689, %v1704
    %v1707 = vunpack.c.l.s4 1966171168
    %v1708 = vunpack.c.0.s8 %v1707
    %v1709 = vlaneseq
    %v1710 = vshrl.u32 %v1709, 7
    %v1711 = vsub.s32 %v1708, %v1710
    %v1712 = vrot.slane %v1690, %v1711
    %v1714 = vunpack.c.l.s4 1966171168
    %v1715 = vunpack.c.0.s8 %v1714
    %v1716 = vlaneseq
    %v1717 = vshrl.u32 %v1716, 7
    %v1718 = vsub.s32 %v1715, %v1717
    %v1719 = vrot.slane %v1691, %v1718
    %v1720 = vcombine.high %v1698, %v1698
    %v1721 = vcombine.high %v1705, %v1705
    %v1722 = vcombine.high %v1712, %v1712
    %v1723 = vcombine.high %v1719, %v1719
    %v1724 = vcombine.high %v1136, %v1136
    %v1726 = vunpack.c.l.s4 1966171168
    %v1727 = vunpack.c.0.s8 %v1726
    %v1728 = vlaneseq
    %v1729 = vshrl.u32 %v1728, 7
    %v1730 = vsub.s32 %v1727, %v1729
    %v1731 = vrot.slane %v1136, %v1730
    %v1733 = vunpack.c.l.s4 1966171168
    %v1734 = vunpack.c.0.s8 %v1733
    %v1735 = vlaneseq
    %v1736 = vshrl.u32 %v1735, 7
    %v1737 = vsub.s32 %v1734, %v1736
    %v1738 = vrot.slane %v1724, %v1737
    %v1739 = vcombine.high %v1731, %v1731
    %v1740 = vcombine.high %v1738, %v1738
    %v1742 = vunpack.c.l.s4 1966171168
    %v1743 = vunpack.c.0.s8 %v1742
    %v1744 = vlaneseq
    %v1745 = vshrl.u32 %v1744, 7
    %v1746 = vsub.s32 %v1743, %v1745
    %v1747 = vrot.slane %v1731, %v1746
    %v1749 = vunpack.c.l.s4 1966171168
    %v1750 = vunpack.c.0.s8 %v1749
    %v1751 = vlaneseq
    %v1752 = vshrl.u32 %v1751, 7
    %v1753 = vsub.s32 %v1750, %v1752
    %v1754 = vrot.slane %v1738, %v1753
    %v1756 = vunpack.c.l.s4 1966171168
    %v1757 = vunpack.c.0.s8 %v1756
    %v1758 = vlaneseq
    %v1759 = vshrl.u32 %v1758, 7
    %v1760 = vsub.s32 %v1757, %v1759
    %v1761 = vrot.slane %v1739, %v1760
    %v1763 = vunpack.c.l.s4 1966171168
    %v1764 = vunpack.c.0.s8 %v1763
    %v1765 = vlaneseq
    %v1766 = vshrl.u32 %v1765, 7
    %v1767 = vsub.s32 %v1764, %v1766
    %v1768 = vrot.slane %v1740, %v1767
    %v1769 = vcombine.high %v1747, %v1747
    %v1770 = vcombine.high %v1761, %v1761
    %v1771 = vcombine.high %v1137, %v1137
    %v1773 = vunpack.c.l.s4 1966171168
    %v1774 = vunpack.c.0.s8 %v1773
    %v1775 = vlaneseq
    %v1776 = vshrl.u32 %v1775, 7
    %v1777 = vsub.s32 %v1774, %v1776
    %v1778 = vrot.slane %v1137, %v1777
    %v1780 = vunpack.c.l.s4 1966171168
    %v1781 = vunpack.c.0.s8 %v1780
    %v1782 = vlaneseq
    %v1783 = vshrl.u32 %v1782, 7
    %v1784 = vsub.s32 %v1781, %v1783
    %v1785 = vrot.slane %v1771, %v1784
    %v1786 = vcombine.high %v1778, %v1778
    %v1787 = vcombine.high %v1785, %v1785
    %v1789 = vunpack.c.l.s4 1966171168
    %v1790 = vunpack.c.0.s8 %v1789
    %v1791 = vlaneseq
    %v1792 = vshrl.u32 %v1791, 7
    %v1793 = vsub.s32 %v1790, %v1792
    %v1794 = vrot.slane %v1778, %v1793
    %v1796 = vunpack.c.l.s4 1966171168
    %v1797 = vunpack.c.0.s8 %v1796
    %v1798 = vlaneseq
    %v1799 = vshrl.u32 %v1798, 7
    %v1800 = vsub.s32 %v1797, %v1799
    %v1801 = vrot.slane %v1785, %v1800
    %v1803 = vunpack.c.l.s4 1966171168
    %v1804 = vunpack.c.0.s8 %v1803
    %v1805 = vlaneseq
    %v1806 = vshrl.u32 %v1805, 7
    %v1807 = vsub.s32 %v1804, %v1806
    %v1808 = vrot.slane %v1786, %v1807
    %v1810 = vunpack.c.l.s4 1966171168
    %v1811 = vunpack.c.0.s8 %v1810
    %v1812 = vlaneseq
    %v1813 = vshrl.u32 %v1812, 7
    %v1814 = vsub.s32 %v1811, %v1813
    %v1815 = vrot.slane %v1787, %v1814
    %v1816 = vcombine.high %v1794, %v1794
    %v1817 = vcombine.high %v1801, %v1801
    %v1818 = vcombine.high %v1808, %v1808
    %v1819 = vcombine.high %v1815, %v1815
    %v1820 = vcombine.high %v1138, %v1138
    %v1822 = vunpack.c.l.s4 1966171168
    %v1823 = vunpack.c.0.s8 %v1822
    %v1824 = vlaneseq
    %v1825 = vshrl.u32 %v1824, 7
    %v1826 = vsub.s32 %v1823, %v1825
    %v1827 = vrot.slane %v1138, %v1826
    %v1829 = vunpack.c.l.s4 1966171168
    %v1830 = vunpack.c.0.s8 %v1829
    %v1831 = vlaneseq
    %v1832 = vshrl.u32 %v1831, 7
    %v1833 = vsub.s32 %v1830, %v1832
    %v1834 = vrot.slane %v1820, %v1833
    %v1835 = vcombine.high %v1827, %v1827
    %v1836 = vcombine.high %v1834, %v1834
    %v1838 = vunpack.c.l.s4 1966171168
    %v1839 = vunpack.c.0.s8 %v1838
    %v1840 = vlaneseq
    %v1841 = vshrl.u32 %v1840, 7
    %v1842 = vsub.s32 %v1839, %v1841
    %v1843 = vrot.slane %v1827, %v1842
    %v1845 = vunpack.c.l.s4 1966171168
    %v1846 = vunpack.c.0.s8 %v1845
    %v1847 = vlaneseq
    %v1848 = vshrl.u32 %v1847, 7
    %v1849 = vsub.s32 %v1846, %v1848
    %v1850 = vrot.slane %v1834, %v1849
    %v1852 = vunpack.c.l.s4 1966171168
    %v1853 = vunpack.c.0.s8 %v1852
    %v1854 = vlaneseq
    %v1855 = vshrl.u32 %v1854, 7
    %v1856 = vsub.s32 %v1853, %v1855
    %v1857 = vrot.slane %v1835, %v1856
    %v1859 = vunpack.c.l.s4 1966171168
    %v1860 = vunpack.c.0.s8 %v1859
    %v1861 = vlaneseq
    %v1862 = vshrl.u32 %v1861, 7
    %v1863 = vsub.s32 %v1860, %v1862
    %v1864 = vrot.slane %v1836, %v1863
    %v1865 = vcombine.high %v1843, %v1843
    %v1866 = vcombine.high %v1850, %v1850
    %v1867 = vcombine.high %v1857, %v1857
    %v1868 = vcombine.high %v1864, %v1864
    %v1869 = vcombine.high %v1139, %v1139
    %v1871 = vunpack.c.l.s4 1966171168
    %v1872 = vunpack.c.0.s8 %v1871
    %v1873 = vlaneseq
    %v1874 = vshrl.u32 %v1873, 7
    %v1875 = vsub.s32 %v1872, %v1874
    %v1876 = vrot.slane %v1139, %v1875
    %v1878 = vunpack.c.l.s4 1966171168
    %v1879 = vunpack.c.0.s8 %v1878
    %v1880 = vlaneseq
    %v1881 = vshrl.u32 %v1880, 7
    %v1882 = vsub.s32 %v1879, %v1881
    %v1883 = vrot.slane %v1869, %v1882
    %v1884 = vcombine.high %v1876, %v1876
    %v1885 = vcombine.high %v1883, %v1883
    %v1887 = vunpack.c.l.s4 1966171168
    %v1888 = vunpack.c.0.s8 %v1887
    %v1889 = vlaneseq
    %v1890 = vshrl.u32 %v1889, 7
    %v1891 = vsub.s32 %v1888, %v1890
    %v1892 = vrot.slane %v1876, %v1891
    %v1894 = vunpack.c.l.s4 1966171168
    %v1895 = vunpack.c.0.s8 %v1894
    %v1896 = vlaneseq
    %v1897 = vshrl.u32 %v1896, 7
    %v1898 = vsub.s32 %v1895, %v1897
    %v1899 = vrot.slane %v1883, %v1898
    %v1901 = vunpack.c.l.s4 1966171168
    %v1902 = vunpack.c.0.s8 %v1901
    %v1903 = vlaneseq
    %v1904 = vshrl.u32 %v1903, 7
    %v1905 = vsub.s32 %v1902, %v1904
    %v1906 = vrot.slane %v1884, %v1905
    %v1908 = vunpack.c.l.s4 1966171168
    %v1909 = vunpack.c.0.s8 %v1908
    %v1910 = vlaneseq
    %v1911 = vshrl.u32 %v1910, 7
    %v1912 = vsub.s32 %v1909, %v1911
    %v1913 = vrot.slane %v1885, %v1912
    %v1914 = vcombine.high %v1892, %v1892
    %v1915 = vcombine.high %v1899, %v1899
    %v1916 = vcombine.high %v1906, %v1906
    %v1917 = vcombine.high %v1913, %v1913
    %v1918 = vcombine.high %v1140, %v1140
    %v1920 = vunpack.c.l.s4 1966171168
    %v1921 = vunpack.c.0.s8 %v1920
    %v1922 = vlaneseq
    %v1923 = vshrl.u32 %v1922, 7
    %v1924 = vsub.s32 %v1921, %v1923
    %v1925 = vrot.slane %v1140, %v1924
    %v1927 = vunpack.c.l.s4 1966171168
    %v1928 = vunpack.c.0.s8 %v1927
    %v1929 = vlaneseq
    %v1930 = vshrl.u32 %v1929, 7
    %v1931 = vsub.s32 %v1928, %v1930
    %v1932 = vrot.slane %v1918, %v1931
    %v1933 = vcombine.high %v1925, %v1925
    %v1934 = vcombine.high %v1932, %v1932
    %v1936 = vunpack.c.l.s4 1966171168
    %v1937 = vunpack.c.0.s8 %v1936
    %v1938 = vlaneseq
    %v1939 = vshrl.u32 %v1938, 7
    %v1940 = vsub.s32 %v1937, %v1939
    %v1941 = vrot.slane %v1925, %v1940
    %v1943 = vunpack.c.l.s4 1966171168
    %v1944 = vunpack.c.0.s8 %v1943
    %v1945 = vlaneseq
    %v1946 = vshrl.u32 %v1945, 7
    %v1947 = vsub.s32 %v1944, %v1946
    %v1948 = vrot.slane %v1932, %v1947
    %v1950 = vunpack.c.l.s4 1966171168
    %v1951 = vunpack.c.0.s8 %v1950
    %v1952 = vlaneseq
    %v1953 = vshrl.u32 %v1952, 7
    %v1954 = vsub.s32 %v1951, %v1953
    %v1955 = vrot.slane %v1933, %v1954
    %v1957 = vunpack.c.l.s4 1966171168
    %v1958 = vunpack.c.0.s8 %v1957
    %v1959 = vlaneseq
    %v1960 = vshrl.u32 %v1959, 7
    %v1961 = vsub.s32 %v1958, %v1960
    %v1962 = vrot.slane %v1934, %v1961
    %v1963 = vcombine.high %v1941, %v1941
    %v1964 = vcombine.high %v1955, %v1955
    %v1965 = vcombine.high %v1141, %v1141
    %v1967 = vunpack.c.l.s4 1966171168
    %v1968 = vunpack.c.0.s8 %v1967
    %v1969 = vlaneseq
    %v1970 = vshrl.u32 %v1969, 7
    %v1971 = vsub.s32 %v1968, %v1970
    %v1972 = vrot.slane %v1141, %v1971
    %v1974 = vunpack.c.l.s4 1966171168
    %v1975 = vunpack.c.0.s8 %v1974
    %v1976 = vlaneseq
    %v1977 = vshrl.u32 %v1976, 7
    %v1978 = vsub.s32 %v1975, %v1977
    %v1979 = vrot.slane %v1965, %v1978
    %v1980 = vcombine.high %v1972, %v1972
    %v1981 = vcombine.high %v1979, %v1979
    %v1983 = vunpack.c.l.s4 1966171168
    %v1984 = vunpack.c.0.s8 %v1983
    %v1985 = vlaneseq
    %v1986 = vshrl.u32 %v1985, 7
    %v1987 = vsub.s32 %v1984, %v1986
    %v1988 = vrot.slane %v1972, %v1987
    %v1990 = vunpack.c.l.s4 1966171168
    %v1991 = vunpack.c.0.s8 %v1990
    %v1992 = vlaneseq
    %v1993 = vshrl.u32 %v1992, 7
    %v1994 = vsub.s32 %v1991, %v1993
    %v1995 = vrot.slane %v1979, %v1994
    %v1997 = vunpack.c.l.s4 1966171168
    %v1998 = vunpack.c.0.s8 %v1997
    %v1999 = vlaneseq
    %v2000 = vshrl.u32 %v1999, 7
    %v2001 = vsub.s32 %v1998, %v2000
    %v2002 = vrot.slane %v1980, %v2001
    %v2004 = vunpack.c.l.s4 1966171168
    %v2005 = vunpack.c.0.s8 %v2004
    %v2006 = vlaneseq
    %v2007 = vshrl.u32 %v2006, 7
    %v2008 = vsub.s32 %v2005, %v2007
    %v2009 = vrot.slane %v1981, %v2008
    %v2010 = vcombine.high %v1988, %v1988
    %v2011 = vcombine.high %v1995, %v1995
    %v2012 = vcombine.high %v2002, %v2002
    %v2013 = vcombine.high %v2009, %v2009
    %v2014 = vcombine.high %v1142, %v1142
    %v2016 = vunpack.c.l.s4 1966171168
    %v2017 = vunpack.c.0.s8 %v2016
    %v2018 = vlaneseq
    %v2019 = vshrl.u32 %v2018, 7
    %v2020 = vsub.s32 %v2017, %v2019
    %v2021 = vrot.slane %v1142, %v2020
    %v2023 = vunpack.c.l.s4 1966171168
    %v2024 = vunpack.c.0.s8 %v2023
    %v2025 = vlaneseq
    %v2026 = vshrl.u32 %v2025, 7
    %v2027 = vsub.s32 %v2024, %v2026
    %v2028 = vrot.slane %v2014, %v2027
    %v2029 = vcombine.high %v2021, %v2021
    %v2030 = vcombine.high %v2028, %v2028
    %v2032 = vunpack.c.l.s4 1966171168
    %v2033 = vunpack.c.0.s8 %v2032
    %v2034 = vlaneseq
    %v2035 = vshrl.u32 %v2034, 7
    %v2036 = vsub.s32 %v2033, %v2035
    %v2037 = vrot.slane %v2021, %v2036
    %v2039 = vunpack.c.l.s4 1966171168
    %v2040 = vunpack.c.0.s8 %v2039
    %v2041 = vlaneseq
    %v2042 = vshrl.u32 %v2041, 7
    %v2043 = vsub.s32 %v2040, %v2042
    %v2044 = vrot.slane %v2028, %v2043
    %v2046 = vunpack.c.l.s4 1966171168
    %v2047 = vunpack.c.0.s8 %v2046
    %v2048 = vlaneseq
    %v2049 = vshrl.u32 %v2048, 7
    %v2050 = vsub.s32 %v2047, %v2049
    %v2051 = vrot.slane %v2029, %v2050
    %v2053 = vunpack.c.l.s4 1966171168
    %v2054 = vunpack.c.0.s8 %v2053
    %v2055 = vlaneseq
    %v2056 = vshrl.u32 %v2055, 7
    %v2057 = vsub.s32 %v2054, %v2056
    %v2058 = vrot.slane %v2030, %v2057
    %v2059 = vcombine.high %v2037, %v2037
    %v2060 = vcombine.high %v2044, %v2044
    %v2061 = vcombine.high %v2051, %v2051
    %v2062 = vcombine.high %v2058, %v2058
    %v2063 = vcombine.high %v1143, %v1143
    %v2065 = vunpack.c.l.s4 1966171168
    %v2066 = vunpack.c.0.s8 %v2065
    %v2067 = vlaneseq
    %v2068 = vshrl.u32 %v2067, 7
    %v2069 = vsub.s32 %v2066, %v2068
    %v2070 = vrot.slane %v1143, %v2069
    %v2072 = vunpack.c.l.s4 1966171168
    %v2073 = vunpack.c.0.s8 %v2072
    %v2074 = vlaneseq
    %v2075 = vshrl.u32 %v2074, 7
    %v2076 = vsub.s32 %v2073, %v2075
    %v2077 = vrot.slane %v2063, %v2076
    %v2078 = vcombine.high %v2070, %v2070
    %v2079 = vcombine.high %v2077, %v2077
    %v2081 = vunpack.c.l.s4 1966171168
    %v2082 = vunpack.c.0.s8 %v2081
    %v2083 = vlaneseq
    %v2084 = vshrl.u32 %v2083, 7
    %v2085 = vsub.s32 %v2082, %v2084
    %v2086 = vrot.slane %v2070, %v2085
    %v2088 = vunpack.c.l.s4 1966171168
    %v2089 = vunpack.c.0.s8 %v2088
    %v2090 = vlaneseq
    %v2091 = vshrl.u32 %v2090, 7
    %v2092 = vsub.s32 %v2089, %v2091
    %v2093 = vrot.slane %v2077, %v2092
    %v2095 = vunpack.c.l.s4 1966171168
    %v2096 = vunpack.c.0.s8 %v2095
    %v2097 = vlaneseq
    %v2098 = vshrl.u32 %v2097, 7
    %v2099 = vsub.s32 %v2096, %v2098
    %v2100 = vrot.slane %v2078, %v2099
    %v2102 = vunpack.c.l.s4 1966171168
    %v2103 = vunpack.c.0.s8 %v2102
    %v2104 = vlaneseq
    %v2105 = vshrl.u32 %v2104, 7
    %v2106 = vsub.s32 %v2103, %v2105
    %v2107 = vrot.slane %v2079, %v2106
    %v2108 = vcombine.high %v2086, %v2086
    %v2109 = vcombine.high %v2093, %v2093
    %v2110 = vcombine.high %v2100, %v2100
    %v2111 = vcombine.high %v2107, %v2107
    %v2112 = vcombine.high %v1144, %v1144
    %v2114 = vunpack.c.l.s4 1966171168
    %v2115 = vunpack.c.0.s8 %v2114
    %v2116 = vlaneseq
    %v2117 = vshrl.u32 %v2116, 7
    %v2118 = vsub.s32 %v2115, %v2117
    %v2119 = vrot.slane %v1144, %v2118
    %v2121 = vunpack.c.l.s4 1966171168
    %v2122 = vunpack.c.0.s8 %v2121
    %v2123 = vlaneseq
    %v2124 = vshrl.u32 %v2123, 7
    %v2125 = vsub.s32 %v2122, %v2124
    %v2126 = vrot.slane %v2112, %v2125
    %v2127 = vcombine.high %v2119, %v2119
    %v2128 = vcombine.high %v2126, %v2126
    %v2130 = vunpack.c.l.s4 1966171168
    %v2131 = vunpack.c.0.s8 %v2130
    %v2132 = vlaneseq
    %v2133 = vshrl.u32 %v2132, 7
    %v2134 = vsub.s32 %v2131, %v2133
    %v2135 = vrot.slane %v2119, %v2134
    %v2137 = vunpack.c.l.s4 1966171168
    %v2138 = vunpack.c.0.s8 %v2137
    %v2139 = vlaneseq
    %v2140 = vshrl.u32 %v2139, 7
    %v2141 = vsub.s32 %v2138, %v2140
    %v2142 = vrot.slane %v2126, %v2141
    %v2144 = vunpack.c.l.s4 1966171168
    %v2145 = vunpack.c.0.s8 %v2144
    %v2146 = vlaneseq
    %v2147 = vshrl.u32 %v2146, 7
    %v2148 = vsub.s32 %v2145, %v2147
    %v2149 = vrot.slane %v2127, %v2148
    %v2151 = vunpack.c.l.s4 1966171168
    %v2152 = vunpack.c.0.s8 %v2151
    %v2153 = vlaneseq
    %v2154 = vshrl.u32 %v2153, 7
    %v2155 = vsub.s32 %v2152, %v2154
    %v2156 = vrot.slane %v2128, %v2155
    %v2157 = vcombine.high %v2135, %v2135
    %v2158 = vcombine.high %v2149, %v2149
    %v2159 = vcombine.high %v1145, %v1145
    %v2161 = vunpack.c.l.s4 1966171168
    %v2162 = vunpack.c.0.s8 %v2161
    %v2163 = vlaneseq
    %v2164 = vshrl.u32 %v2163, 7
    %v2165 = vsub.s32 %v2162, %v2164
    %v2166 = vrot.slane %v1145, %v2165
    %v2168 = vunpack.c.l.s4 1966171168
    %v2169 = vunpack.c.0.s8 %v2168
    %v2170 = vlaneseq
    %v2171 = vshrl.u32 %v2170, 7
    %v2172 = vsub.s32 %v2169, %v2171
    %v2173 = vrot.slane %v2159, %v2172
    %v2174 = vcombine.high %v2166, %v2166
    %v2175 = vcombine.high %v2173, %v2173
    %v2177 = vunpack.c.l.s4 1966171168
    %v2178 = vunpack.c.0.s8 %v2177
    %v2179 = vlaneseq
    %v2180 = vshrl.u32 %v2179, 7
    %v2181 = vsub.s32 %v2178, %v2180
    %v2182 = vrot.slane %v2166, %v2181
    %v2184 = vunpack.c.l.s4 1966171168
    %v2185 = vunpack.c.0.s8 %v2184
    %v2186 = vlaneseq
    %v2187 = vshrl.u32 %v2186, 7
    %v2188 = vsub.s32 %v2185, %v2187
    %v2189 = vrot.slane %v2173, %v2188
    %v2191 = vunpack.c.l.s4 1966171168
    %v2192 = vunpack.c.0.s8 %v2191
    %v2193 = vlaneseq
    %v2194 = vshrl.u32 %v2193, 7
    %v2195 = vsub.s32 %v2192, %v2194
    %v2196 = vrot.slane %v2174, %v2195
    %v2198 = vunpack.c.l.s4 1966171168
    %v2199 = vunpack.c.0.s8 %v2198
    %v2200 = vlaneseq
    %v2201 = vshrl.u32 %v2200, 7
    %v2202 = vsub.s32 %v2199, %v2201
    %v2203 = vrot.slane %v2175, %v2202
    %v2204 = vcombine.high %v2182, %v2182
    %v2205 = vcombine.high %v2189, %v2189
    %v2206 = vcombine.high %v2196, %v2196
    %v2207 = vcombine.high %v2203, %v2203
    %v2208 = vcombine.high %v1146, %v1146
    %v2210 = vunpack.c.l.s4 1966171168
    %v2211 = vunpack.c.0.s8 %v2210
    %v2212 = vlaneseq
    %v2213 = vshrl.u32 %v2212, 7
    %v2214 = vsub.s32 %v2211, %v2213
    %v2215 = vrot.slane %v1146, %v2214
    %v2217 = vunpack.c.l.s4 1966171168
    %v2218 = vunpack.c.0.s8 %v2217
    %v2219 = vlaneseq
    %v2220 = vshrl.u32 %v2219, 7
    %v2221 = vsub.s32 %v2218, %v2220
    %v2222 = vrot.slane %v2208, %v2221
    %v2223 = vcombine.high %v2215, %v2215
    %v2224 = vcombine.high %v2222, %v2222
    %v2226 = vunpack.c.l.s4 1966171168
    %v2227 = vunpack.c.0.s8 %v2226
    %v2228 = vlaneseq
    %v2229 = vshrl.u32 %v2228, 7
    %v2230 = vsub.s32 %v2227, %v2229
    %v2231 = vrot.slane %v2215, %v2230
    %v2233 = vunpack.c.l.s4 1966171168
    %v2234 = vunpack.c.0.s8 %v2233
    %v2235 = vlaneseq
    %v2236 = vshrl.u32 %v2235, 7
    %v2237 = vsub.s32 %v2234, %v2236
    %v2238 = vrot.slane %v2222, %v2237
    %v2240 = vunpack.c.l.s4 1966171168
    %v2241 = vunpack.c.0.s8 %v2240
    %v2242 = vlaneseq
    %v2243 = vshrl.u32 %v2242, 7
    %v2244 = vsub.s32 %v2241, %v2243
    %v2245 = vrot.slane %v2223, %v2244
    %v2247 = vunpack.c.l.s4 1966171168
    %v2248 = vunpack.c.0.s8 %v2247
    %v2249 = vlaneseq
    %v2250 = vshrl.u32 %v2249, 7
    %v2251 = vsub.s32 %v2248, %v2250
    %v2252 = vrot.slane %v2224, %v2251
    %v2253 = vcombine.high %v2231, %v2231
    %v2254 = vcombine.high %v2238, %v2238
    %v2255 = vcombine.high %v2245, %v2245
    %v2256 = vcombine.high %v2252, %v2252
    %v2257 = vcombine.high %v1147, %v1147
    %v2259 = vunpack.c.l.s4 1966171168
    %v2260 = vunpack.c.0.s8 %v2259
    %v2261 = vlaneseq
    %v2262 = vshrl.u32 %v2261, 7
    %v2263 = vsub.s32 %v2260, %v2262
    %v2264 = vrot.slane %v1147, %v2263
    %v2266 = vunpack.c.l.s4 1966171168
    %v2267 = vunpack.c.0.s8 %v2266
    %v2268 = vlaneseq
    %v2269 = vshrl.u32 %v2268, 7
    %v2270 = vsub.s32 %v2267, %v2269
    %v2271 = vrot.slane %v2257, %v2270
    %v2272 = vcombine.high %v2264, %v2264
    %v2273 = vcombine.high %v2271, %v2271
    %v2275 = vunpack.c.l.s4 1966171168
    %v2276 = vunpack.c.0.s8 %v2275
    %v2277 = vlaneseq
    %v2278 = vshrl.u32 %v2277, 7
    %v2279 = vsub.s32 %v2276, %v2278
    %v2280 = vrot.slane %v2264, %v2279
    %v2282 = vunpack.c.l.s4 1966171168
    %v2283 = vunpack.c.0.s8 %v2282
    %v2284 = vlaneseq
    %v2285 = vshrl.u32 %v2284, 7
    %v2286 = vsub.s32 %v2283, %v2285
    %v2287 = vrot.slane %v2271, %v2286
    %v2289 = vunpack.c.l.s4 1966171168
    %v2290 = vunpack.c.0.s8 %v2289
    %v2291 = vlaneseq
    %v2292 = vshrl.u32 %v2291, 7
    %v2293 = vsub.s32 %v2290, %v2292
    %v2294 = vrot.slane %v2272, %v2293
    %v2296 = vunpack.c.l.s4 1966171168
    %v2297 = vunpack.c.0.s8 %v2296
    %v2298 = vlaneseq
    %v2299 = vshrl.u32 %v2298, 7
    %v2300 = vsub.s32 %v2297, %v2299
    %v2301 = vrot.slane %v2273, %v2300
    %v2302 = vcombine.high %v2280, %v2280
    %v2303 = vcombine.high %v2287, %v2287
    %v2304 = vcombine.high %v2294, %v2294
    %v2305 = vcombine.high %v2301, %v2301
    %v2306 = vcombine.high %v1148, %v1148
    %v2308 = vunpack.c.l.s4 1966171168
    %v2309 = vunpack.c.0.s8 %v2308
    %v2310 = vlaneseq
    %v2311 = vshrl.u32 %v2310, 7
    %v2312 = vsub.s32 %v2309, %v2311
    %v2313 = vrot.slane %v1148, %v2312
    %v2315 = vunpack.c.l.s4 1966171168
    %v2316 = vunpack.c.0.s8 %v2315
    %v2317 = vlaneseq
    %v2318 = vshrl.u32 %v2317, 7
    %v2319 = vsub.s32 %v2316, %v2318
    %v2320 = vrot.slane %v2306, %v2319
    %v2321 = vcombine.high %v2313, %v2313
    %v2322 = vcombine.high %v2320, %v2320
    %v2324 = vunpack.c.l.s4 1966171168
    %v2325 = vunpack.c.0.s8 %v2324
    %v2326 = vlaneseq
    %v2327 = vshrl.u32 %v2326, 7
    %v2328 = vsub.s32 %v2325, %v2327
    %v2329 = vrot.slane %v2313, %v2328
    %v2331 = vunpack.c.l.s4 1966171168
    %v2332 = vunpack.c.0.s8 %v2331
    %v2333 = vlaneseq
    %v2334 = vshrl.u32 %v2333, 7
    %v2335 = vsub.s32 %v2332, %v2334
    %v2336 = vrot.slane %v2320, %v2335
    %v2338 = vunpack.c.l.s4 1966171168
    %v2339 = vunpack.c.0.s8 %v2338
    %v2340 = vlaneseq
    %v2341 = vshrl.u32 %v2340, 7
    %v2342 = vsub.s32 %v2339, %v2341
    %v2343 = vrot.slane %v2321, %v2342
    %v2345 = vunpack.c.l.s4 1966171168
    %v2346 = vunpack.c.0.s8 %v2345
    %v2347 = vlaneseq
    %v2348 = vshrl.u32 %v2347, 7
    %v2349 = vsub.s32 %v2346, %v2348
    %v2350 = vrot.slane %v2322, %v2349
    %v2351 = vcombine.high %v2329, %v2329
    %v2352 = vcombine.high %v2343, %v2343
    %v2353 = vcombine.high %v1149, %v1149
    %v2355 = vunpack.c.l.s4 1966171168
    %v2356 = vunpack.c.0.s8 %v2355
    %v2357 = vlaneseq
    %v2358 = vshrl.u32 %v2357, 7
    %v2359 = vsub.s32 %v2356, %v2358
    %v2360 = vrot.slane %v1149, %v2359
    %v2362 = vunpack.c.l.s4 1966171168
    %v2363 = vunpack.c.0.s8 %v2362
    %v2364 = vlaneseq
    %v2365 = vshrl.u32 %v2364, 7
    %v2366 = vsub.s32 %v2363, %v2365
    %v2367 = vrot.slane %v2353, %v2366
    %v2368 = vcombine.high %v2360, %v2360
    %v2369 = vcombine.high %v2367, %v2367
    %v2371 = vunpack.c.l.s4 1966171168
    %v2372 = vunpack.c.0.s8 %v2371
    %v2373 = vlaneseq
    %v2374 = vshrl.u32 %v2373, 7
    %v2375 = vsub.s32 %v2372, %v2374
    %v2376 = vrot.slane %v2360, %v2375
    %v2378 = vunpack.c.l.s4 1966171168
    %v2379 = vunpack.c.0.s8 %v2378
    %v2380 = vlaneseq
    %v2381 = vshrl.u32 %v2380, 7
    %v2382 = vsub.s32 %v2379, %v2381
    %v2383 = vrot.slane %v2367, %v2382
    %v2385 = vunpack.c.l.s4 1966171168
    %v2386 = vunpack.c.0.s8 %v2385
    %v2387 = vlaneseq
    %v2388 = vshrl.u32 %v2387, 7
    %v2389 = vsub.s32 %v2386, %v2388
    %v2390 = vrot.slane %v2368, %v2389
    %v2392 = vunpack.c.l.s4 1966171168
    %v2393 = vunpack.c.0.s8 %v2392
    %v2394 = vlaneseq
    %v2395 = vshrl.u32 %v2394, 7
    %v2396 = vsub.s32 %v2393, %v2395
    %v2397 = vrot.slane %v2369, %v2396
    %v2398 = vcombine.high %v2376, %v2376
    %v2399 = vcombine.high %v2383, %v2383
    %v2400 = vcombine.high %v2390, %v2390
    %v2401 = vcombine.high %v2397, %v2397
    %v2402 = vcombine.high %v1150, %v1150
    %v2404 = vunpack.c.l.s4 1966171168
    %v2405 = vunpack.c.0.s8 %v2404
    %v2406 = vlaneseq
    %v2407 = vshrl.u32 %v2406, 7
    %v2408 = vsub.s32 %v2405, %v2407
    %v2409 = vrot.slane %v1150, %v2408
    %v2411 = vunpack.c.l.s4 1966171168
    %v2412 = vunpack.c.0.s8 %v2411
    %v2413 = vlaneseq
    %v2414 = vshrl.u32 %v2413, 7
    %v2415 = vsub.s32 %v2412, %v2414
    %v2416 = vrot.slane %v2402, %v2415
    %v2417 = vcombine.high %v2409, %v2409
    %v2418 = vcombine.high %v2416, %v2416
    %v2420 = vunpack.c.l.s4 1966171168
    %v2421 = vunpack.c.0.s8 %v2420
    %v2422 = vlaneseq
    %v2423 = vshrl.u32 %v2422, 7
    %v2424 = vsub.s32 %v2421, %v2423
    %v2425 = vrot.slane %v2409, %v2424
    %v2427 = vunpack.c.l.s4 1966171168
    %v2428 = vunpack.c.0.s8 %v2427
    %v2429 = vlaneseq
    %v2430 = vshrl.u32 %v2429, 7
    %v2431 = vsub.s32 %v2428, %v2430
    %v2432 = vrot.slane %v2416, %v2431
    %v2434 = vunpack.c.l.s4 1966171168
    %v2435 = vunpack.c.0.s8 %v2434
    %v2436 = vlaneseq
    %v2437 = vshrl.u32 %v2436, 7
    %v2438 = vsub.s32 %v2435, %v2437
    %v2439 = vrot.slane %v2417, %v2438
    %v2441 = vunpack.c.l.s4 1966171168
    %v2442 = vunpack.c.0.s8 %v2441
    %v2443 = vlaneseq
    %v2444 = vshrl.u32 %v2443, 7
    %v2445 = vsub.s32 %v2442, %v2444
    %v2446 = vrot.slane %v2418, %v2445
    %v2447 = vcombine.high %v2425, %v2425
    %v2448 = vcombine.high %v2432, %v2432
    %v2449 = vcombine.high %v2439, %v2439
    %v2450 = vcombine.high %v2446, %v2446
    %v2451 = vcombine.high %v1151, %v1151
    %v2453 = vunpack.c.l.s4 1966171168
    %v2454 = vunpack.c.0.s8 %v2453
    %v2455 = vlaneseq
    %v2456 = vshrl.u32 %v2455, 7
    %v2457 = vsub.s32 %v2454, %v2456
    %v2458 = vrot.slane %v1151, %v2457
    %v2460 = vunpack.c.l.s4 1966171168
    %v2461 = vunpack.c.0.s8 %v2460
    %v2462 = vlaneseq
    %v2463 = vshrl.u32 %v2462, 7
    %v2464 = vsub.s32 %v2461, %v2463
    %v2465 = vrot.slane %v2451, %v2464
    %v2466 = vcombine.high %v2458, %v2458
    %v2467 = vcombine.high %v2465, %v2465
    %v2469 = vunpack.c.l.s4 1966171168
    %v2470 = vunpack.c.0.s8 %v2469
    %v2471 = vlaneseq
    %v2472 = vshrl.u32 %v2471, 7
    %v2473 = vsub.s32 %v2470, %v2472
    %v2474 = vrot.slane %v2458, %v2473
    %v2476 = vunpack.c.l.s4 1966171168
    %v2477 = vunpack.c.0.s8 %v2476
    %v2478 = vlaneseq
    %v2479 = vshrl.u32 %v2478, 7
    %v2480 = vsub.s32 %v2477, %v2479
    %v2481 = vrot.slane %v2465, %v2480
    %v2483 = vunpack.c.l.s4 1966171168
    %v2484 = vunpack.c.0.s8 %v2483
    %v2485 = vlaneseq
    %v2486 = vshrl.u32 %v2485, 7
    %v2487 = vsub.s32 %v2484, %v2486
    %v2488 = vrot.slane %v2466, %v2487
    %v2490 = vunpack.c.l.s4 1966171168
    %v2491 = vunpack.c.0.s8 %v2490
    %v2492 = vlaneseq
    %v2493 = vshrl.u32 %v2492, 7
    %v2494 = vsub.s32 %v2491, %v2493
    %v2495 = vrot.slane %v2467, %v2494
    %v2496 = vcombine.high %v2474, %v2474
    %v2497 = vcombine.high %v2481, %v2481
    %v2498 = vcombine.high %v2488, %v2488
    %v2499 = vcombine.high %v2495, %v2495
    %v2500 = vcombine.high %v1152, %v1152
    %v2502 = vunpack.c.l.s4 1966171168
    %v2503 = vunpack.c.0.s8 %v2502
    %v2504 = vlaneseq
    %v2505 = vshrl.u32 %v2504, 7
    %v2506 = vsub.s32 %v2503, %v2505
    %v2507 = vrot.slane %v1152, %v2506
    %v2509 = vunpack.c.l.s4 1966171168
    %v2510 = vunpack.c.0.s8 %v2509
    %v2511 = vlaneseq
    %v2512 = vshrl.u32 %v2511, 7
    %v2513 = vsub.s32 %v2510, %v2512
    %v2514 = vrot.slane %v2500, %v2513
    %v2515 = vcombine.high %v2507, %v2507
    %v2516 = vcombine.high %v2514, %v2514
    %v2518 = vunpack.c.l.s4 1966171168
    %v2519 = vunpack.c.0.s8 %v2518
    %v2520 = vlaneseq
    %v2521 = vshrl.u32 %v2520, 7
    %v2522 = vsub.s32 %v2519, %v2521
    %v2523 = vrot.slane %v2507, %v2522
    %v2525 = vunpack.c.l.s4 1966171168
    %v2526 = vunpack.c.0.s8 %v2525
    %v2527 = vlaneseq
    %v2528 = vshrl.u32 %v2527, 7
    %v2529 = vsub.s32 %v2526, %v2528
    %v2530 = vrot.slane %v2514, %v2529
    %v2532 = vunpack.c.l.s4 1966171168
    %v2533 = vunpack.c.0.s8 %v2532
    %v2534 = vlaneseq
    %v2535 = vshrl.u32 %v2534, 7
    %v2536 = vsub.s32 %v2533, %v2535
    %v2537 = vrot.slane %v2515, %v2536
    %v2539 = vunpack.c.l.s4 1966171168
    %v2540 = vunpack.c.0.s8 %v2539
    %v2541 = vlaneseq
    %v2542 = vshrl.u32 %v2541, 7
    %v2543 = vsub.s32 %v2540, %v2542
    %v2544 = vrot.slane %v2516, %v2543
    %v2545 = vcombine.high %v2523, %v2523
    %v2546 = vcombine.high %v2537, %v2537
    %v2547 = vcombine.high %v1153, %v1153
    %v2549 = vunpack.c.l.s4 1966171168
    %v2550 = vunpack.c.0.s8 %v2549
    %v2551 = vlaneseq
    %v2552 = vshrl.u32 %v2551, 7
    %v2553 = vsub.s32 %v2550, %v2552
    %v2554 = vrot.slane %v1153, %v2553
    %v2556 = vunpack.c.l.s4 1966171168
    %v2557 = vunpack.c.0.s8 %v2556
    %v2558 = vlaneseq
    %v2559 = vshrl.u32 %v2558, 7
    %v2560 = vsub.s32 %v2557, %v2559
    %v2561 = vrot.slane %v2547, %v2560
    %v2562 = vcombine.high %v2554, %v2554
    %v2563 = vcombine.high %v2561, %v2561
    %v2565 = vunpack.c.l.s4 1966171168
    %v2566 = vunpack.c.0.s8 %v2565
    %v2567 = vlaneseq
    %v2568 = vshrl.u32 %v2567, 7
    %v2569 = vsub.s32 %v2566, %v2568
    %v2570 = vrot.slane %v2554, %v2569
    %v2572 = vunpack.c.l.s4 1966171168
    %v2573 = vunpack.c.0.s8 %v2572
    %v2574 = vlaneseq
    %v2575 = vshrl.u32 %v2574, 7
    %v2576 = vsub.s32 %v2573, %v2575
    %v2577 = vrot.slane %v2561, %v2576
    %v2579 = vunpack.c.l.s4 1966171168
    %v2580 = vunpack.c.0.s8 %v2579
    %v2581 = vlaneseq
    %v2582 = vshrl.u32 %v2581, 7
    %v2583 = vsub.s32 %v2580, %v2582
    %v2584 = vrot.slane %v2562, %v2583
    %v2586 = vunpack.c.l.s4 1966171168
    %v2587 = vunpack.c.0.s8 %v2586
    %v2588 = vlaneseq
    %v2589 = vshrl.u32 %v2588, 7
    %v2590 = vsub.s32 %v2587, %v2589
    %v2591 = vrot.slane %v2563, %v2590
    %v2592 = vcombine.high %v2570, %v2570
    %v2593 = vcombine.high %v2577, %v2577
    %v2594 = vcombine.high %v2584, %v2584
    %v2595 = vcombine.high %v2591, %v2591
    %v2596 = vcombine.high %v1154, %v1154
    %v2598 = vunpack.c.l.s4 1966171168
    %v2599 = vunpack.c.0.s8 %v2598
    %v2600 = vlaneseq
    %v2601 = vshrl.u32 %v2600, 7
    %v2602 = vsub.s32 %v2599, %v2601
    %v2603 = vrot.slane %v1154, %v2602
    %v2605 = vunpack.c.l.s4 1966171168
    %v2606 = vunpack.c.0.s8 %v2605
    %v2607 = vlaneseq
    %v2608 = vshrl.u32 %v2607, 7
    %v2609 = vsub.s32 %v2606, %v2608
    %v2610 = vrot.slane %v2596, %v2609
    %v2611 = vcombine.high %v2603, %v2603
    %v2612 = vcombine.high %v2610, %v2610
    %v2614 = vunpack.c.l.s4 1966171168
    %v2615 = vunpack.c.0.s8 %v2614
    %v2616 = vlaneseq
    %v2617 = vshrl.u32 %v2616, 7
    %v2618 = vsub.s32 %v2615, %v2617
    %v2619 = vrot.slane %v2603, %v2618
    %v2621 = vunpack.c.l.s4 1966171168
    %v2622 = vunpack.c.0.s8 %v2621
    %v2623 = vlaneseq
    %v2624 = vshrl.u32 %v2623, 7
    %v2625 = vsub.s32 %v2622, %v2624
    %v2626 = vrot.slane %v2610, %v2625
    %v2628 = vunpack.c.l.s4 1966171168
    %v2629 = vunpack.c.0.s8 %v2628
    %v2630 = vlaneseq
    %v2631 = vshrl.u32 %v2630, 7
    %v2632 = vsub.s32 %v2629, %v2631
    %v2633 = vrot.slane %v2611, %v2632
    %v2635 = vunpack.c.l.s4 1966171168
    %v2636 = vunpack.c.0.s8 %v2635
    %v2637 = vlaneseq
    %v2638 = vshrl.u32 %v2637, 7
    %v2639 = vsub.s32 %v2636, %v2638
    %v2640 = vrot.slane %v2612, %v2639
    %v2641 = vcombine.high %v2619, %v2619
    %v2642 = vcombine.high %v2626, %v2626
    %v2643 = vcombine.high %v2633, %v2633
    %v2644 = vcombine.high %v2640, %v2640
    %v2645 = vcombine.high %v1155, %v1155
    %v2647 = vunpack.c.l.s4 1966171168
    %v2648 = vunpack.c.0.s8 %v2647
    %v2649 = vlaneseq
    %v2650 = vshrl.u32 %v2649, 7
    %v2651 = vsub.s32 %v2648, %v2650
    %v2652 = vrot.slane %v1155, %v2651
    %v2654 = vunpack.c.l.s4 1966171168
    %v2655 = vunpack.c.0.s8 %v2654
    %v2656 = vlaneseq
    %v2657 = vshrl.u32 %v2656, 7
    %v2658 = vsub.s32 %v2655, %v2657
    %v2659 = vrot.slane %v2645, %v2658
    %v2660 = vcombine.high %v2652, %v2652
    %v2661 = vcombine.high %v2659, %v2659
    %v2663 = vunpack.c.l.s4 1966171168
    %v2664 = vunpack.c.0.s8 %v2663
    %v2665 = vlaneseq
    %v2666 = vshrl.u32 %v2665, 7
    %v2667 = vsub.s32 %v2664, %v2666
    %v2668 = vrot.slane %v2652, %v2667
    %v2670 = vunpack.c.l.s4 1966171168
    %v2671 = vunpack.c.0.s8 %v2670
    %v2672 = vlaneseq
    %v2673 = vshrl.u32 %v2672, 7
    %v2674 = vsub.s32 %v2671, %v2673
    %v2675 = vrot.slane %v2659, %v2674
    %v2677 = vunpack.c.l.s4 1966171168
    %v2678 = vunpack.c.0.s8 %v2677
    %v2679 = vlaneseq
    %v2680 = vshrl.u32 %v2679, 7
    %v2681 = vsub.s32 %v2678, %v2680
    %v2682 = vrot.slane %v2660, %v2681
    %v2684 = vunpack.c.l.s4 1966171168
    %v2685 = vunpack.c.0.s8 %v2684
    %v2686 = vlaneseq
    %v2687 = vshrl.u32 %v2686, 7
    %v2688 = vsub.s32 %v2685, %v2687
    %v2689 = vrot.slane %v2661, %v2688
    %v2690 = vcombine.high %v2668, %v2668
    %v2691 = vcombine.high %v2675, %v2675
    %v2692 = vcombine.high %v2682, %v2682
    %v2693 = vcombine.high %v2689, %v2689
    %v2694 = vcombine.high %v1156, %v1156
    %v2696 = vunpack.c.l.s4 1966171168
    %v2697 = vunpack.c.0.s8 %v2696
    %v2698 = vlaneseq
    %v2699 = vshrl.u32 %v2698, 7
    %v2700 = vsub.s32 %v2697, %v2699
    %v2701 = vrot.slane %v1156, %v2700
    %v2703 = vunpack.c.l.s4 1966171168
    %v2704 = vunpack.c.0.s8 %v2703
    %v2705 = vlaneseq
    %v2706 = vshrl.u32 %v2705, 7
    %v2707 = vsub.s32 %v2704, %v2706
    %v2708 = vrot.slane %v2694, %v2707
    %v2709 = vcombine.high %v2701, %v2701
    %v2710 = vcombine.high %v2708, %v2708
    %v2712 = vunpack.c.l.s4 1966171168
    %v2713 = vunpack.c.0.s8 %v2712
    %v2714 = vlaneseq
    %v2715 = vshrl.u32 %v2714, 7
    %v2716 = vsub.s32 %v2713, %v2715
    %v2717 = vrot.slane %v2701, %v2716
    %v2719 = vunpack.c.l.s4 1966171168
    %v2720 = vunpack.c.0.s8 %v2719
    %v2721 = vlaneseq
    %v2722 = vshrl.u32 %v2721, 7
    %v2723 = vsub.s32 %v2720, %v2722
    %v2724 = vrot.slane %v2708, %v2723
    %v2726 = vunpack.c.l.s4 1966171168
    %v2727 = vunpack.c.0.s8 %v2726
    %v2728 = vlaneseq
    %v2729 = vshrl.u32 %v2728, 7
    %v2730 = vsub.s32 %v2727, %v2729
    %v2731 = vrot.slane %v2709, %v2730
    %v2733 = vunpack.c.l.s4 1966171168
    %v2734 = vunpack.c.0.s8 %v2733
    %v2735 = vlaneseq
    %v2736 = vshrl.u32 %v2735, 7
    %v2737 = vsub.s32 %v2734, %v2736
    %v2738 = vrot.slane %v2710, %v2737
    %v2739 = vcombine.high %v2717, %v2717
    %v2740 = vcombine.high %v2731, %v2731
    %v2741 = vcombine.low %v1212, %v1226
    %v2743 = vunpack.c.l.s4 1966171168
    %v2744 = vunpack.c.0.s8 %v2743
    %v2745 = vlaneseq
    %v2746 = vshrl.u32 %v2745, 7
    %v2747 = vsub.s32 %v2744, %v2746
    %v2748 = vrot.slane %v2741, %v2747
    %v2750 = vunpack.c.l.s4 1966171168
    %v2751 = vunpack.c.0.s8 %v2750
    %v2752 = vlaneseq
    %v2753 = vshrl.u32 %v2752, 7
    %v2754 = vsub.s32 %v2751, %v2753
    %v2755 = vrot.slane %v1234, %v2754
    %v2756 = vcombine.low %v2748, %v2755
    %v2758 = vunpack.c.l.s4 1966171168
    %v2759 = vunpack.c.0.s8 %v2758
    %v2760 = vlaneseq
    %v2761 = vshrl.u32 %v2760, 7
    %v2762 = vsub.s32 %v2759, %v2761
    %v2763 = vrot.slane %v2756, %v2762
    %v2764 = vcombine.low %v1236, %v1219
    %v2766 = vunpack.c.l.s4 1966171168
    %v2767 = vunpack.c.0.s8 %v2766
    %v2768 = vlaneseq
    %v2769 = vshrl.u32 %v2768, 7
    %v2770 = vsub.s32 %v2767, %v2769
    %v2771 = vrot.slane %v2764, %v2770
    %v2773 = vunpack.c.l.s4 1966171168
    %v2774 = vunpack.c.0.s8 %v2773
    %v2775 = vlaneseq
    %v2776 = vshrl.u32 %v2775, 7
    %v2777 = vsub.s32 %v2774, %v2776
    %v2778 = vrot.slane %v1233, %v2777
    %v2779 = vcombine.low %v2771, %v2778
    %v2781 = vunpack.c.l.s4 1966171168
    %v2782 = vunpack.c.0.s8 %v2781
    %v2783 = vlaneseq
    %v2784 = vshrl.u32 %v2783, 7
    %v2785 = vsub.s32 %v2782, %v2784
    %v2786 = vrot.slane %v2779, %v2785
    %v2787 = vcombine.low %v1235, %v1237
    %v2789 = vunpack.c.l.s4 1966171168
    %v2790 = vunpack.c.0.s8 %v2789
    %v2791 = vlaneseq
    %v2792 = vshrl.u32 %v2791, 7
    %v2793 = vsub.s32 %v2790, %v2792
    %v2794 = vrot.slane %v2787, %v2793
    %v2796 = vunpack.c.l.s4 1966171168
    %v2797 = vunpack.c.0.s8 %v2796
    %v2798 = vlaneseq
    %v2799 = vshrl.u32 %v2798, 7
    %v2800 = vsub.s32 %v2797, %v2799
    %v2801 = vrot.slane %v1261, %v2800
    %v2802 = vcombine.low %v2794, %v2801
    %v2804 = vunpack.c.l.s4 1966171168
    %v2805 = vunpack.c.0.s8 %v2804
    %v2806 = vlaneseq
    %v2807 = vshrl.u32 %v2806, 7
    %v2808 = vsub.s32 %v2805, %v2807
    %v2809 = vrot.slane %v2802, %v2808
    %v2810 = vcombine.low %v1275, %v1283
    %v2812 = vunpack.c.l.s4 1966171168
    %v2813 = vunpack.c.0.s8 %v2812
    %v2814 = vlaneseq
    %v2815 = vshrl.u32 %v2814, 7
    %v2816 = vsub.s32 %v2813, %v2815
    %v2817 = vrot.slane %v2810, %v2816
    %v2819 = vunpack.c.l.s4 1966171168
    %v2820 = vunpack.c.0.s8 %v2819
    %v2821 = vlaneseq
    %v2822 = vshrl.u32 %v2821, 7
    %v2823 = vsub.s32 %v2820, %v2822
    %v2824 = vrot.slane %v1285, %v2823
    %v2825 = vcombine.low %v2817, %v2824
    %v2827 = vunpack.c.l.s4 1966171168
    %v2828 = vunpack.c.0.s8 %v2827
    %v2829 = vlaneseq
    %v2830 = vshrl.u32 %v2829, 7
    %v2831 = vsub.s32 %v2828, %v2830
    %v2832 = vrot.slane %v2825, %v2831
    %v2833 = vcombine.low %v1268, %v1282
    %v2835 = vunpack.c.l.s4 1966171168
    %v2836 = vunpack.c.0.s8 %v2835
    %v2837 = vlaneseq
    %v2838 = vshrl.u32 %v2837, 7
    %v2839 = vsub.s32 %v2836, %v2838
    %v2840 = vrot.slane %v2833, %v2839
    %v2842 = vunpack.c.l.s4 1966171168
    %v2843 = vunpack.c.0.s8 %v2842
    %v2844 = vlaneseq
    %v2845 = vshrl.u32 %v2844, 7
    %v2846 = vsub.s32 %v2843, %v2845
    %v2847 = vrot.slane %v1284, %v2846
    %v2848 = vcombine.low %v2840, %v2847
    %v2850 = vunpack.c.l.s4 1966171168
    %v2851 = vunpack.c.0.s8 %v2850
    %v2852 = vlaneseq
    %v2853 = vshrl.u32 %v2852, 7
    %v2854 = vsub.s32 %v2851, %v2853
    %v2855 = vrot.slane %v2848, %v2854
    %v2856 = vcombine.low %v1286, %v1310
    %v2858 = vunpack.c.l.s4 1966171168
    %v2859 = vunpack.c.0.s8 %v2858
    %v2860 = vlaneseq
    %v2861 = vshrl.u32 %v2860, 7
    %v2862 = vsub.s32 %v2859, %v2861
    %v2863 = vrot.slane %v2856, %v2862
    %v2865 = vunpack.c.l.s4 1966171168
    %v2866 = vunpack.c.0.s8 %v2865
    %v2867 = vlaneseq
    %v2868 = vshrl.u32 %v2867, 7
    %v2869 = vsub.s32 %v2866, %v2868
    %v2870 = vrot.slane %v1324, %v2869
    %v2871 = vcombine.low %v2863, %v2870
    %v2873 = vunpack.c.l.s4 1966171168
    %v2874 = vunpack.c.0.s8 %v2873
    %v2875 = vlaneseq
    %v2876 = vshrl.u32 %v2875, 7
    %v2877 = vsub.s32 %v2874, %v2876
    %v2878 = vrot.slane %v2871, %v2877
    %v2879 = vcombine.low %v1332, %v1334
    %v2881 = vunpack.c.l.s4 1966171168
    %v2882 = vunpack.c.0.s8 %v2881
    %v2883 = vlaneseq
    %v2884 = vshrl.u32 %v2883, 7
    %v2885 = vsub.s32 %v2882, %v2884
    %v2886 = vrot.slane %v2879, %v2885
    %v2888 = vunpack.c.l.s4 1966171168
    %v2889 = vunpack.c.0.s8 %v2888
    %v2890 = vlaneseq
    %v2891 = vshrl.u32 %v2890, 7
    %v2892 = vsub.s32 %v2889, %v2891
    %v2893 = vrot.slane %v1317, %v2892
    %v2894 = vcombine.low %v2886, %v2893
    %v2896 = vunpack.c.l.s4 1966171168
    %v2897 = vunpack.c.0.s8 %v2896
    %v2898 = vlaneseq
    %v2899 = vshrl.u32 %v2898, 7
    %v2900 = vsub.s32 %v2897, %v2899
    %v2901 = vrot.slane %v2894, %v2900
    %v2902 = vcombine.low %v1331, %v1333
    %v2904 = vunpack.c.l.s4 1966171168
    %v2905 = vunpack.c.0.s8 %v2904
    %v2906 = vlaneseq
    %v2907 = vshrl.u32 %v2906, 7
    %v2908 = vsub.s32 %v2905, %v2907
    %v2909 = vrot.slane %v2902, %v2908
    %v2911 = vunpack.c.l.s4 1966171168
    %v2912 = vunpack.c.0.s8 %v2911
    %v2913 = vlaneseq
    %v2914 = vshrl.u32 %v2913, 7
    %v2915 = vsub.s32 %v2912, %v2914
    %v2916 = vrot.slane %v1335, %v2915
    %v2917 = vcombine.low %v2909, %v2916
    %v2919 = vunpack.c.l.s4 1966171168
    %v2920 = vunpack.c.0.s8 %v2919
    %v2921 = vlaneseq
    %v2922 = vshrl.u32 %v2921, 7
    %v2923 = vsub.s32 %v2920, %v2922
    %v2924 = vrot.slane %v2917, %v2923
    %v2925 = vcombine.low %v1359, %v1373
    %v2927 = vunpack.c.l.s4 1966171168
    %v2928 = vunpack.c.0.s8 %v2927
    %v2929 = vlaneseq
    %v2930 = vshrl.u32 %v2929, 7
    %v2931 = vsub.s32 %v2928, %v2930
    %v2932 = vrot.slane %v2925, %v2931
    %v2934 = vunpack.c.l.s4 1966171168
    %v2935 = vunpack.c.0.s8 %v2934
    %v2936 = vlaneseq
    %v2937 = vshrl.u32 %v2936, 7
    %v2938 = vsub.s32 %v2935, %v2937
    %v2939 = vrot.slane %v1381, %v2938
    %v2940 = vcombine.low %v2932, %v2939
    %v2942 = vunpack.c.l.s4 1966171168
    %v2943 = vunpack.c.0.s8 %v2942
    %v2944 = vlaneseq
    %v2945 = vshrl.u32 %v2944, 7
    %v2946 = vsub.s32 %v2943, %v2945
    %v2947 = vrot.slane %v2940, %v2946
    %v2948 = vcombine.low %v1382, %v1366
    %v2950 = vunpack.c.l.s4 1966171168
    %v2951 = vunpack.c.0.s8 %v2950
    %v2952 = vlaneseq
    %v2953 = vshrl.u32 %v2952, 7
    %v2954 = vsub.s32 %v2951, %v2953
    %v2955 = vrot.slane %v2948, %v2954
    %v2957 = vunpack.c.l.s4 1966171168
    %v2958 = vunpack.c.0.s8 %v2957
    %v2959 = vlaneseq
    %v2960 = vshrl.u32 %v2959, 7
    %v2961 = vsub.s32 %v2958, %v2960
    %v2962 = vrot.slane %v1380, %v2961
    %v2963 = vcombine.low %v2955, %v2962
    %v2965 = vunpack.c.l.s4 1966171168
    %v2966 = vunpack.c.0.s8 %v2965
    %v2967 = vlaneseq
    %v2968 = vshrl.u32 %v2967, 7
    %v2969 = vsub.s32 %v2966, %v2968
    %v2970 = vrot.slane %v2963, %v2969
    %v2971 = vcombine.low %v1406, %v1420
    %v2973 = vunpack.c.l.s4 1966171168
    %v2974 = vunpack.c.0.s8 %v2973
    %v2975 = vlaneseq
    %v2976 = vshrl.u32 %v2975, 7
    %v2977 = vsub.s32 %v2974, %v2976
    %v2978 = vrot.slane %v2971, %v2977
    %v2980 = vunpack.c.l.s4 1966171168
    %v2981 = vunpack.c.0.s8 %v2980
    %v2982 = vlaneseq
    %v2983 = vshrl.u32 %v2982, 7
    %v2984 = vsub.s32 %v2981, %v2983
    %v2985 = vrot.slane %v1428, %v2984
    %v2986 = vcombine.low %v2978, %v2985
    %v2988 = vunpack.c.l.s4 1966171168
    %v2989 = vunpack.c.0.s8 %v2988
    %v2990 = vlaneseq
    %v2991 = vshrl.u32 %v2990, 7
    %v2992 = vsub.s32 %v2989, %v2991
    %v2993 = vrot.slane %v2986, %v2992
    %v2994 = vcombine.low %v1430, %v1413
    %v2996 = vunpack.c.l.s4 1966171168
    %v2997 = vunpack.c.0.s8 %v2996
    %v2998 = vlaneseq
    %v2999 = vshrl.u32 %v2998, 7
    %v3000 = vsub.s32 %v2997, %v2999
    %v3001 = vrot.slane %v2994, %v3000
    %v3003 = vunpack.c.l.s4 1966171168
    %v3004 = vunpack.c.0.s8 %v3003
    %v3005 = vlaneseq
    %v3006 = vshrl.u32 %v3005, 7
    %v3007 = vsub.s32 %v3004, %v3006
    %v3008 = vrot.slane %v1427, %v3007
    %v3009 = vcombine.low %v3001, %v3008
    %v3011 = vunpack.c.l.s4 1966171168
    %v3012 = vunpack.c.0.s8 %v3011
    %v3013 = vlaneseq
    %v3014 = vshrl.u32 %v3013, 7
    %v3015 = vsub.s32 %v3012, %v3014
    %v3016 = vrot.slane %v3009, %v3015
    %v3017 = vcombine.low %v1429, %v1431
    %v3019 = vunpack.c.l.s4 1966171168
    %v3020 = vunpack.c.0.s8 %v3019
    %v3021 = vlaneseq
    %v3022 = vshrl.u32 %v3021, 7
    %v3023 = vsub.s32 %v3020, %v3022
    %v3024 = vrot.slane %v3017, %v3023
    %v3026 = vunpack.c.l.s4 1966171168
    %v3027 = vunpack.c.0.s8 %v3026
    %v3028 = vlaneseq
    %v3029 = vshrl.u32 %v3028, 7
    %v3030 = vsub.s32 %v3027, %v3029
    %v3031 = vrot.slane %v1455, %v3030
    %v3032 = vcombine.low %v3024, %v3031
    %v3034 = vunpack.c.l.s4 1966171168
    %v3035 = vunpack.c.0.s8 %v3034
    %v3036 = vlaneseq
    %v3037 = vshrl.u32 %v3036, 7
    %v3038 = vsub.s32 %v3035, %v3037
    %v3039 = vrot.slane %v3032, %v3038
    %v3040 = vcombine.low %v1469, %v1477
    %v3042 = vunpack.c.l.s4 1966171168
    %v3043 = vunpack.c.0.s8 %v3042
    %v3044 = vlaneseq
    %v3045 = vshrl.u32 %v3044, 7
    %v3046 = vsub.s32 %v3043, %v3045
    %v3047 = vrot.slane %v3040, %v3046
    %v3049 = vunpack.c.l.s4 1966171168
    %v3050 = vunpack.c.0.s8 %v3049
    %v3051 = vlaneseq
    %v3052 = vshrl.u32 %v3051, 7
    %v3053 = vsub.s32 %v3050, %v3052
    %v3054 = vrot.slane %v1479, %v3053
    %v3055 = vcombine.low %v3047, %v3054
    %v3057 = vunpack.c.l.s4 1966171168
    %v3058 = vunpack.c.0.s8 %v3057
    %v3059 = vlaneseq
    %v3060 = vshrl.u32 %v3059, 7
    %v3061 = vsub.s32 %v3058, %v3060
    %v3062 = vrot.slane %v3055, %v3061
    %v3063 = vcombine.low %v1462, %v1476
    %v3065 = vunpack.c.l.s4 1966171168
    %v3066 = vunpack.c.0.s8 %v3065
    %v3067 = vlaneseq
    %v3068 = vshrl.u32 %v3067, 7
    %v3069 = vsub.s32 %v3066, %v3068
    %v3070 = vrot.slane %v3063, %v3069
    %v3072 = vunpack.c.l.s4 1966171168
    %v3073 = vunpack.c.0.s8 %v3072
    %v3074 = vlaneseq
    %v3075 = vshrl.u32 %v3074, 7
    %v3076 = vsub.s32 %v3073, %v3075
    %v3077 = vrot.slane %v1478, %v3076
    %v3078 = vcombine.low %v3070, %v3077
    %v3080 = vunpack.c.l.s4 1966171168
    %v3081 = vunpack.c.0.s8 %v3080
    %v3082 = vlaneseq
    %v3083 = vshrl.u32 %v3082, 7
    %v3084 = vsub.s32 %v3081, %v3083
    %v3085 = vrot.slane %v3078, %v3084
    %v3086 = vcombine.low %v1480, %v1504
    %v3088 = vunpack.c.l.s4 1966171168
    %v3089 = vunpack.c.0.s8 %v3088
    %v3090 = vlaneseq
    %v3091 = vshrl.u32 %v3090, 7
    %v3092 = vsub.s32 %v3089, %v3091
    %v3093 = vrot.slane %v3086, %v3092
    %v3095 = vunpack.c.l.s4 1966171168
    %v3096 = vunpack.c.0.s8 %v3095
    %v3097 = vlaneseq
    %v3098 = vshrl.u32 %v3097, 7
    %v3099 = vsub.s32 %v3096, %v3098
    %v3100 = vrot.slane %v1518, %v3099
    %v3101 = vcombine.low %v3093, %v3100
    %v3103 = vunpack.c.l.s4 1966171168
    %v3104 = vunpack.c.0.s8 %v3103
    %v3105 = vlaneseq
    %v3106 = vshrl.u32 %v3105, 7
    %v3107 = vsub.s32 %v3104, %v3106
    %v3108 = vrot.slane %v3101, %v3107
    %v3109 = vcombine.low %v1526, %v1528
    %v3111 = vunpack.c.l.s4 1966171168
    %v3112 = vunpack.c.0.s8 %v3111
    %v3113 = vlaneseq
    %v3114 = vshrl.u32 %v3113, 7
    %v3115 = vsub.s32 %v3112, %v3114
    %v3116 = vrot.slane %v3109, %v3115
    %v3118 = vunpack.c.l.s4 1966171168
    %v3119 = vunpack.c.0.s8 %v3118
    %v3120 = vlaneseq
    %v3121 = vshrl.u32 %v3120, 7
    %v3122 = vsub.s32 %v3119, %v3121
    %v3123 = vrot.slane %v1511, %v3122
    %v3124 = vcombine.low %v3116, %v3123
    %v3126 = vunpack.c.l.s4 1966171168
    %v3127 = vunpack.c.0.s8 %v3126
    %v3128 = vlaneseq
    %v3129 = vshrl.u32 %v3128, 7
    %v3130 = vsub.s32 %v3127, %v3129
    %v3131 = vrot.slane %v3124, %v3130
    %v3132 = vcombine.low %v1525, %v1527
    %v3134 = vunpack.c.l.s4 1966171168
    %v3135 = vunpack.c.0.s8 %v3134
    %v3136 = vlaneseq
    %v3137 = vshrl.u32 %v3136, 7
    %v3138 = vsub.s32 %v3135, %v3137
    %v3139 = vrot.slane %v3132, %v3138
    %v3141 = vunpack.c.l.s4 1966171168
    %v3142 = vunpack.c.0.s8 %v3141
    %v3143 = vlaneseq
    %v3144 = vshrl.u32 %v3143, 7
    %v3145 = vsub.s32 %v3142, %v3144
    %v3146 = vrot.slane %v1529, %v3145
    %v3147 = vcombine.low %v3139, %v3146
    %v3149 = vunpack.c.l.s4 1966171168
    %v3150 = vunpack.c.0.s8 %v3149
    %v3151 = vlaneseq
    %v3152 = vshrl.u32 %v3151, 7
    %v3153 = vsub.s32 %v3150, %v3152
    %v3154 = vrot.slane %v3147, %v3153
    %v3155 = vcombine.low %v1553, %v1567
    %v3157 = vunpack.c.l.s4 1966171168
    %v3158 = vunpack.c.0.s8 %v3157
    %v3159 = vlaneseq
    %v3160 = vshrl.u32 %v3159, 7
    %v3161 = vsub.s32 %v3158, %v3160
    %v3162 = vrot.slane %v3155, %v3161
    %v3164 = vunpack.c.l.s4 1966171168
    %v3165 = vunpack.c.0.s8 %v3164
    %v3166 = vlaneseq
    %v3167 = vshrl.u32 %v3166, 7
    %v3168 = vsub.s32 %v3165, %v3167
    %v3169 = vrot.slane %v1575, %v3168
    %v3170 = vcombine.low %v3162, %v3169
    %v3172 = vunpack.c.l.s4 1966171168
    %v3173 = vunpack.c.0.s8 %v3172
    %v3174 = vlaneseq
    %v3175 = vshrl.u32 %v3174, 7
    %v3176 = vsub.s32 %v3173, %v3175
    %v3177 = vrot.slane %v3170, %v3176
    %v3178 = vcombine.low %v1576, %v1560
    %v3180 = vunpack.c.l.s4 1966171168
    %v3181 = vunpack.c.0.s8 %v3180
    %v3182 = vlaneseq
    %v3183 = vshrl.u32 %v3182, 7
    %v3184 = vsub.s32 %v3181, %v3183
    %v3185 = vrot.slane %v3178, %v3184
    %v3187 = vunpack.c.l.s4 1966171168
    %v3188 = vunpack.c.0.s8 %v3187
    %v3189 = vlaneseq
    %v3190 = vshrl.u32 %v3189, 7
    %v3191 = vsub.s32 %v3188, %v3190
    %v3192 = vrot.slane %v1574, %v3191
    %v3193 = vcombine.low %v3185, %v3192
    %v3195 = vunpack.c.l.s4 1966171168
    %v3196 = vunpack.c.0.s8 %v3195
    %v3197 = vlaneseq
    %v3198 = vshrl.u32 %v3197, 7
    %v3199 = vsub.s32 %v3196, %v3198
    %v3200 = vrot.slane %v3193, %v3199
    %v3201 = vcombine.low %v1600, %v1614
    %v3203 = vunpack.c.l.s4 1966171168
    %v3204 = vunpack.c.0.s8 %v3203
    %v3205 = vlaneseq
    %v3206 = vshrl.u32 %v3205, 7
    %v3207 = vsub.s32 %v3204, %v3206
    %v3208 = vrot.slane %v3201, %v3207
    %v3210 = vunpack.c.l.s4 1966171168
    %v3211 = vunpack.c.0.s8 %v3210
    %v3212 = vlaneseq
    %v3213 = vshrl.u32 %v3212, 7
    %v3214 = vsub.s32 %v3211, %v3213
    %v3215 = vrot.slane %v1622, %v3214
    %v3216 = vcombine.low %v3208, %v3215
    %v3218 = vunpack.c.l.s4 1966171168
    %v3219 = vunpack.c.0.s8 %v3218
    %v3220 = vlaneseq
    %v3221 = vshrl.u32 %v3220, 7
    %v3222 = vsub.s32 %v3219, %v3221
    %v3223 = vrot.slane %v3216, %v3222
    %v3224 = vcombine.low %v1624, %v1607
    %v3226 = vunpack.c.l.s4 1966171168
    %v3227 = vunpack.c.0.s8 %v3226
    %v3228 = vlaneseq
    %v3229 = vshrl.u32 %v3228, 7
    %v3230 = vsub.s32 %v3227, %v3229
    %v3231 = vrot.slane %v3224, %v3230
    %v3233 = vunpack.c.l.s4 1966171168
    %v3234 = vunpack.c.0.s8 %v3233
    %v3235 = vlaneseq
    %v3236 = vshrl.u32 %v3235, 7
    %v3237 = vsub.s32 %v3234, %v3236
    %v3238 = vrot.slane %v1621, %v3237
    %v3239 = vcombine.low %v3231, %v3238
    %v3241 = vunpack.c.l.s4 1966171168
    %v3242 = vunpack.c.0.s8 %v3241
    %v3243 = vlaneseq
    %v3244 = vshrl.u32 %v3243, 7
    %v3245 = vsub.s32 %v3242, %v3244
    %v3246 = vrot.slane %v3239, %v3245
    %v3247 = vcombine.low %v1623, %v1625
    %v3249 = vunpack.c.l.s4 1966171168
    %v3250 = vunpack.c.0.s8 %v3249
    %v3251 = vlaneseq
    %v3252 = vshrl.u32 %v3251, 7
    %v3253 = vsub.s32 %v3250, %v3252
    %v3254 = vrot.slane %v3247, %v3253
    %v3256 = vunpack.c.l.s4 1966171168
    %v3257 = vunpack.c.0.s8 %v3256
    %v3258 = vlaneseq
    %v3259 = vshrl.u32 %v3258, 7
    %v3260 = vsub.s32 %v3257, %v3259
    %v3261 = vrot.slane %v1649, %v3260
    %v3262 = vcombine.low %v3254, %v3261
    %v3264 = vunpack.c.l.s4 1966171168
    %v3265 = vunpack.c.0.s8 %v3264
    %v3266 = vlaneseq
    %v3267 = vshrl.u32 %v3266, 7
    %v3268 = vsub.s32 %v3265, %v3267
    %v3269 = vrot.slane %v3262, %v3268
    %v3270 = vcombine.low %v1663, %v1671
    %v3272 = vunpack.c.l.s4 1966171168
    %v3273 = vunpack.c.0.s8 %v3272
    %v3274 = vlaneseq
    %v3275 = vshrl.u32 %v3274, 7
    %v3276 = vsub.s32 %v3273, %v3275
    %v3277 = vrot.slane %v3270, %v3276
    %v3279 = vunpack.c.l.s4 1966171168
    %v3280 = vunpack.c.0.s8 %v3279
    %v3281 = vlaneseq
    %v3282 = vshrl.u32 %v3281, 7
    %v3283 = vsub.s32 %v3280, %v3282
    %v3284 = vrot.slane %v1673, %v3283
    %v3285 = vcombine.low %v3277, %v3284
    %v3287 = vunpack.c.l.s4 1966171168
    %v3288 = vunpack.c.0.s8 %v3287
    %v3289 = vlaneseq
    %v3290 = vshrl.u32 %v3289, 7
    %v3291 = vsub.s32 %v3288, %v3290
    %v3292 = vrot.slane %v3285, %v3291
    %v3293 = vcombine.low %v1656, %v1670
    %v3295 = vunpack.c.l.s4 1966171168
    %v3296 = vunpack.c.0.s8 %v3295
    %v3297 = vlaneseq
    %v3298 = vshrl.u32 %v3297, 7
    %v3299 = vsub.s32 %v3296, %v3298
    %v3300 = vrot.slane %v3293, %v3299
    %v3302 = vunpack.c.l.s4 1966171168
    %v3303 = vunpack.c.0.s8 %v3302
    %v3304 = vlaneseq
    %v3305 = vshrl.u32 %v3304, 7
    %v3306 = vsub.s32 %v3303, %v3305
    %v3307 = vrot.slane %v1672, %v3306
    %v3308 = vcombine.low %v3300, %v3307
    %v3310 = vunpack.c.l.s4 1966171168
    %v3311 = vunpack.c.0.s8 %v3310
    %v3312 = vlaneseq
    %v3313 = vshrl.u32 %v3312, 7
    %v3314 = vsub.s32 %v3311, %v3313
    %v3315 = vrot.slane %v3308, %v3314
    %v3316 = vcombine.low %v1674, %v1698
    %v3318 = vunpack.c.l.s4 1966171168
    %v3319 = vunpack.c.0.s8 %v3318
    %v3320 = vlaneseq
    %v3321 = vshrl.u32 %v3320, 7
    %v3322 = vsub.s32 %v3319, %v3321
    %v3323 = vrot.slane %v3316, %v3322
    %v3325 = vunpack.c.l.s4 1966171168
    %v3326 = vunpack.c.0.s8 %v3325
    %v3327 = vlaneseq
    %v3328 = vshrl.u32 %v3327, 7
    %v3329 = vsub.s32 %v3326, %v3328
    %v3330 = vrot.slane %v1712, %v3329
    %v3331 = vcombine.low %v3323, %v3330
    %v3333 = vunpack.c.l.s4 1966171168
    %v3334 = vunpack.c.0.s8 %v3333
    %v3335 = vlaneseq
    %v3336 = vshrl.u32 %v3335, 7
    %v3337 = vsub.s32 %v3334, %v3336
    %v3338 = vrot.slane %v3331, %v3337
    %v3339 = vcombine.low %v1720, %v1722
    %v3341 = vunpack.c.l.s4 1966171168
    %v3342 = vunpack.c.0.s8 %v3341
    %v3343 = vlaneseq
    %v3344 = vshrl.u32 %v3343, 7
    %v3345 = vsub.s32 %v3342, %v3344
    %v3346 = vrot.slane %v3339, %v3345
    %v3348 = vunpack.c.l.s4 1966171168
    %v3349 = vunpack.c.0.s8 %v3348
    %v3350 = vlaneseq
    %v3351 = vshrl.u32 %v3350, 7
    %v3352 = vsub.s32 %v3349, %v3351
    %v3353 = vrot.slane %v1705, %v3352
    %v3354 = vcombine.low %v3346, %v3353
    %v3356 = vunpack.c.l.s4 1966171168
    %v3357 = vunpack.c.0.s8 %v3356
    %v3358 = vlaneseq
    %v3359 = vshrl.u32 %v3358, 7
    %v3360 = vsub.s32 %v3357, %v3359
    %v3361 = vrot.slane %v3354, %v3360
    %v3362 = vcombine.low %v1719, %v1721
    %v3364 = vunpack.c.l.s4 1966171168
    %v3365 = vunpack.c.0.s8 %v3364
    %v3366 = vlaneseq
    %v3367 = vshrl.u32 %v3366, 7
    %v3368 = vsub.s32 %v3365, %v3367
    %v3369 = vrot.slane %v3362, %v3368
    %v3371 = vunpack.c.l.s4 1966171168
    %v3372 = vunpack.c.0.s8 %v3371
    %v3373 = vlaneseq
    %v3374 = vshrl.u32 %v3373, 7
    %v3375 = vsub.s32 %v3372, %v3374
    %v3376 = vrot.slane %v1723, %v3375
    %v3377 = vcombine.low %v3369, %v3376
    %v3379 = vunpack.c.l.s4 1966171168
    %v3380 = vunpack.c.0.s8 %v3379
    %v3381 = vlaneseq
    %v3382 = vshrl.u32 %v3381, 7
    %v3383 = vsub.s32 %v3380, %v3382
    %v3384 = vrot.slane %v3377, %v3383
    %v3385 = vcombine.low %v1747, %v1761
    %v3387 = vunpack.c.l.s4 1966171168
    %v3388 = vunpack.c.0.s8 %v3387
    %v3389 = vlaneseq
    %v3390 = vshrl.u32 %v3389, 7
    %v3391 = vsub.s32 %v3388, %v3390
    %v3392 = vrot.slane %v3385, %v3391
    %v3394 = vunpack.c.l.s4 1966171168
    %v3395 = vunpack.c.0.s8 %v3394
    %v3396 = vlaneseq
    %v3397 = vshrl.u32 %v3396, 7
    %v3398 = vsub.s32 %v3395, %v3397
    %v3399 = vrot.slane %v1769, %v3398
    %v3400 = vcombine.low %v3392, %v3399
    %v3402 = vunpack.c.l.s4 1966171168
    %v3403 = vunpack.c.0.s8 %v3402
    %v3404 = vlaneseq
    %v3405 = vshrl.u32 %v3404, 7
    %v3406 = vsub.s32 %v3403, %v3405
    %v3407 = vrot.slane %v3400, %v3406
    %v3408 = vcombine.low %v1770, %v1754
    %v3410 = vunpack.c.l.s4 1966171168
    %v3411 = vunpack.c.0.s8 %v3410
    %v3412 = vlaneseq
    %v3413 = vshrl.u32 %v3412, 7
    %v3414 = vsub.s32 %v3411, %v3413
    %v3415 = vrot.slane %v3408, %v3414
    %v3417 = vunpack.c.l.s4 1966171168
    %v3418 = vunpack.c.0.s8 %v3417
    %v3419 = vlaneseq
    %v3420 = vshrl.u32 %v3419, 7
    %v3421 = vsub.s32 %v3418, %v3420
    %v3422 = vrot.slane %v1768, %v3421
    %v3423 = vcombine.low %v3415, %v3422
    %v3425 = vunpack.c.l.s4 1966171168
    %v3426 = vunpack.c.0.s8 %v3425
    %v3427 = vlaneseq
    %v3428 = vshrl.u32 %v3427, 7
    %v3429 = vsub.s32 %v3426, %v3428
    %v3430 = vrot.slane %v3423, %v3429
    %v3431 = vcombine.low %v1794, %v1808
    %v3433 = vunpack.c.l.s4 1966171168
    %v3434 = vunpack.c.0.s8 %v3433
    %v3435 = vlaneseq
    %v3436 = vshrl.u32 %v3435, 7
    %v3437 = vsub.s32 %v3434, %v3436
    %v3438 = vrot.slane %v3431, %v3437
    %v3440 = vunpack.c.l.s4 1966171168
    %v3441 = vunpack.c.0.s8 %v3440
    %v3442 = vlaneseq
    %v3443 = vshrl.u32 %v3442, 7
    %v3444 = vsub.s32 %v3441, %v3443
    %v3445 = vrot.slane %v1816, %v3444
    %v3446 = vcombine.low %v3438, %v3445
    %v3448 = vunpack.c.l.s4 1966171168
    %v3449 = vunpack.c.0.s8 %v3448
    %v3450 = vlaneseq
    %v3451 = vshrl.u32 %v3450, 7
    %v3452 = vsub.s32 %v3449, %v3451
    %v3453 = vrot.slane %v3446, %v3452
    %v3454 = vcombine.low %v1818, %v1801
    %v3456 = vunpack.c.l.s4 1966171168
    %v3457 = vunpack.c.0.s8 %v3456
    %v3458 = vlaneseq
    %v3459 = vshrl.u32 %v3458, 7
    %v3460 = vsub.s32 %v3457, %v3459
    %v3461 = vrot.slane %v3454, %v3460
    %v3463 = vunpack.c.l.s4 1966171168
    %v3464 = vunpack.c.0.s8 %v3463
    %v3465 = vlaneseq
    %v3466 = vshrl.u32 %v3465, 7
    %v3467 = vsub.s32 %v3464, %v3466
    %v3468 = vrot.slane %v1815, %v3467
    %v3469 = vcombine.low %v3461, %v3468
    %v3471 = vunpack.c.l.s4 1966171168
    %v3472 = vunpack.c.0.s8 %v3471
    %v3473 = vlaneseq
    %v3474 = vshrl.u32 %v3473, 7
    %v3475 = vsub.s32 %v3472, %v3474
    %v3476 = vrot.slane %v3469, %v3475
    %v3477 = vcombine.low %v1817, %v1819
    %v3479 = vunpack.c.l.s4 1966171168
    %v3480 = vunpack.c.0.s8 %v3479
    %v3481 = vlaneseq
    %v3482 = vshrl.u32 %v3481, 7
    %v3483 = vsub.s32 %v3480, %v3482
    %v3484 = vrot.slane %v3477, %v3483
    %v3486 = vunpack.c.l.s4 1966171168
    %v3487 = vunpack.c.0.s8 %v3486
    %v3488 = vlaneseq
    %v3489 = vshrl.u32 %v3488, 7
    %v3490 = vsub.s32 %v3487, %v3489
    %v3491 = vrot.slane %v1843, %v3490
    %v3492 = vcombine.low %v3484, %v3491
    %v3494 = vunpack.c.l.s4 1966171168
    %v3495 = vunpack.c.0.s8 %v3494
    %v3496 = vlaneseq
    %v3497 = vshrl.u32 %v3496, 7
    %v3498 = vsub.s32 %v3495, %v3497
    %v3499 = vrot.slane %v3492, %v3498
    %v3500 = vcombine.low %v1857, %v1865
    %v3502 = vunpack.c.l.s4 1966171168
    %v3503 = vunpack.c.0.s8 %v3502
    %v3504 = vlaneseq
    %v3505 = vshrl.u32 %v3504, 7
    %v3506 = vsub.s32 %v3503, %v3505
    %v3507 = vrot.slane %v3500, %v3506
    %v3509 = vunpack.c.l.s4 1966171168
    %v3510 = vunpack.c.0.s8 %v3509
    %v3511 = vlaneseq
    %v3512 = vshrl.u32 %v3511, 7
    %v3513 = vsub.s32 %v3510, %v3512
    %v3514 = vrot.slane %v1867, %v3513
    %v3515 = vcombine.low %v3507, %v3514
    %v3517 = vunpack.c.l.s4 1966171168
    %v3518 = vunpack.c.0.s8 %v3517
    %v3519 = vlaneseq
    %v3520 = vshrl.u32 %v3519, 7
    %v3521 = vsub.s32 %v3518, %v3520
    %v3522 = vrot.slane %v3515, %v3521
    %v3523 = vcombine.low %v1850, %v1864
    %v3525 = vunpack.c.l.s4 1966171168
    %v3526 = vunpack.c.0.s8 %v3525
    %v3527 = vlaneseq
    %v3528 = vshrl.u32 %v3527, 7
    %v3529 = vsub.s32 %v3526, %v3528
    %v3530 = vrot.slane %v3523, %v3529
    %v3532 = vunpack.c.l.s4 1966171168
    %v3533 = vunpack.c.0.s8 %v3532
    %v3534 = vlaneseq
    %v3535 = vshrl.u32 %v3534, 7
    %v3536 = vsub.s32 %v3533, %v3535
    %v3537 = vrot.slane %v1866, %v3536
    %v3538 = vcombine.low %v3530, %v3537
    %v3540 = vunpack.c.l.s4 1966171168
    %v3541 = vunpack.c.0.s8 %v3540
    %v3542 = vlaneseq
    %v3543 = vshrl.u32 %v3542, 7
    %v3544 = vsub.s32 %v3541, %v3543
    %v3545 = vrot.slane %v3538, %v3544
    %v3546 = vcombine.low %v1868, %v1892
    %v3548 = vunpack.c.l.s4 1966171168
    %v3549 = vunpack.c.0.s8 %v3548
    %v3550 = vlaneseq
    %v3551 = vshrl.u32 %v3550, 7
    %v3552 = vsub.s32 %v3549, %v3551
    %v3553 = vrot.slane %v3546, %v3552
    %v3555 = vunpack.c.l.s4 1966171168
    %v3556 = vunpack.c.0.s8 %v3555
    %v3557 = vlaneseq
    %v3558 = vshrl.u32 %v3557, 7
    %v3559 = vsub.s32 %v3556, %v3558
    %v3560 = vrot.slane %v1906, %v3559
    %v3561 = vcombine.low %v3553, %v3560
    %v3563 = vunpack.c.l.s4 1966171168
    %v3564 = vunpack.c.0.s8 %v3563
    %v3565 = vlaneseq
    %v3566 = vshrl.u32 %v3565, 7
    %v3567 = vsub.s32 %v3564, %v3566
    %v3568 = vrot.slane %v3561, %v3567
    %v3569 = vcombine.low %v1914, %v1916
    %v3571 = vunpack.c.l.s4 1966171168
    %v3572 = vunpack.c.0.s8 %v3571
    %v3573 = vlaneseq
    %v3574 = vshrl.u32 %v3573, 7
    %v3575 = vsub.s32 %v3572, %v3574
    %v3576 = vrot.slane %v3569, %v3575
    %v3578 = vunpack.c.l.s4 1966171168
    %v3579 = vunpack.c.0.s8 %v3578
    %v3580 = vlaneseq
    %v3581 = vshrl.u32 %v3580, 7
    %v3582 = vsub.s32 %v3579, %v3581
    %v3583 = vrot.slane %v1899, %v3582
    %v3584 = vcombine.low %v3576, %v3583
    %v3586 = vunpack.c.l.s4 1966171168
    %v3587 = vunpack.c.0.s8 %v3586
    %v3588 = vlaneseq
    %v3589 = vshrl.u32 %v3588, 7
    %v3590 = vsub.s32 %v3587, %v3589
    %v3591 = vrot.slane %v3584, %v3590
    %v3592 = vcombine.low %v1913, %v1915
    %v3594 = vunpack.c.l.s4 1966171168
    %v3595 = vunpack.c.0.s8 %v3594
    %v3596 = vlaneseq
    %v3597 = vshrl.u32 %v3596, 7
    %v3598 = vsub.s32 %v3595, %v3597
    %v3599 = vrot.slane %v3592, %v3598
    %v3601 = vunpack.c.l.s4 1966171168
    %v3602 = vunpack.c.0.s8 %v3601
    %v3603 = vlaneseq
    %v3604 = vshrl.u32 %v3603, 7
    %v3605 = vsub.s32 %v3602, %v3604
    %v3606 = vrot.slane %v1917, %v3605
    %v3607 = vcombine.low %v3599, %v3606
    %v3609 = vunpack.c.l.s4 1966171168
    %v3610 = vunpack.c.0.s8 %v3609
    %v3611 = vlaneseq
    %v3612 = vshrl.u32 %v3611, 7
    %v3613 = vsub.s32 %v3610, %v3612
    %v3614 = vrot.slane %v3607, %v3613
    %v3615 = vcombine.low %v1941, %v1955
    %v3617 = vunpack.c.l.s4 1966171168
    %v3618 = vunpack.c.0.s8 %v3617
    %v3619 = vlaneseq
    %v3620 = vshrl.u32 %v3619, 7
    %v3621 = vsub.s32 %v3618, %v3620
    %v3622 = vrot.slane %v3615, %v3621
    %v3624 = vunpack.c.l.s4 1966171168
    %v3625 = vunpack.c.0.s8 %v3624
    %v3626 = vlaneseq
    %v3627 = vshrl.u32 %v3626, 7
    %v3628 = vsub.s32 %v3625, %v3627
    %v3629 = vrot.slane %v1963, %v3628
    %v3630 = vcombine.low %v3622, %v3629
    %v3632 = vunpack.c.l.s4 1966171168
    %v3633 = vunpack.c.0.s8 %v3632
    %v3634 = vlaneseq
    %v3635 = vshrl.u32 %v3634, 7
    %v3636 = vsub.s32 %v3633, %v3635
    %v3637 = vrot.slane %v3630, %v3636
    %v3638 = vcombine.low %v1964, %v1948
    %v3640 = vunpack.c.l.s4 1966171168
    %v3641 = vunpack.c.0.s8 %v3640
    %v3642 = vlaneseq
    %v3643 = vshrl.u32 %v3642, 7
    %v3644 = vsub.s32 %v3641, %v3643
    %v3645 = vrot.slane %v3638, %v3644
    %v3647 = vunpack.c.l.s4 1966171168
    %v3648 = vunpack.c.0.s8 %v3647
    %v3649 = vlaneseq
    %v3650 = vshrl.u32 %v3649, 7
    %v3651 = vsub.s32 %v3648, %v3650
    %v3652 = vrot.slane %v1962, %v3651
    %v3653 = vcombine.low %v3645, %v3652
    %v3655 = vunpack.c.l.s4 1966171168
    %v3656 = vunpack.c.0.s8 %v3655
    %v3657 = vlaneseq
    %v3658 = vshrl.u32 %v3657, 7
    %v3659 = vsub.s32 %v3656, %v3658
    %v3660 = vrot.slane %v3653, %v3659
    %v3661 = vcombine.low %v1988, %v2002
    %v3663 = vunpack.c.l.s4 1966171168
    %v3664 = vunpack.c.0.s8 %v3663
    %v3665 = vlaneseq
    %v3666 = vshrl.u32 %v3665, 7
    %v3667 = vsub.s32 %v3664, %v3666
    %v3668 = vrot.slane %v3661, %v3667
    %v3670 = vunpack.c.l.s4 1966171168
    %v3671 = vunpack.c.0.s8 %v3670
    %v3672 = vlaneseq
    %v3673 = vshrl.u32 %v3672, 7
    %v3674 = vsub.s32 %v3671, %v3673
    %v3675 = vrot.slane %v2010, %v3674
    %v3676 = vcombine.low %v3668, %v3675
    %v3678 = vunpack.c.l.s4 1966171168
    %v3679 = vunpack.c.0.s8 %v3678
    %v3680 = vlaneseq
    %v3681 = vshrl.u32 %v3680, 7
    %v3682 = vsub.s32 %v3679, %v3681
    %v3683 = vrot.slane %v3676, %v3682
    %v3684 = vcombine.low %v2012, %v1995
    %v3686 = vunpack.c.l.s4 1966171168
    %v3687 = vunpack.c.0.s8 %v3686
    %v3688 = vlaneseq
    %v3689 = vshrl.u32 %v3688, 7
    %v3690 = vsub.s32 %v3687, %v3689
    %v3691 = vrot.slane %v3684, %v3690
    %v3693 = vunpack.c.l.s4 1966171168
    %v3694 = vunpack.c.0.s8 %v3693
    %v3695 = vlaneseq
    %v3696 = vshrl.u32 %v3695, 7
    %v3697 = vsub.s32 %v3694, %v3696
    %v3698 = vrot.slane %v2009, %v3697
    %v3699 = vcombine.low %v3691, %v3698
    %v3701 = vunpack.c.l.s4 1966171168
    %v3702 = vunpack.c.0.s8 %v3701
    %v3703 = vlaneseq
    %v3704 = vshrl.u32 %v3703, 7
    %v3705 = vsub.s32 %v3702, %v3704
    %v3706 = vrot.slane %v3699, %v3705
    %v3707 = vcombine.low %v2011, %v2013
    %v3709 = vunpack.c.l.s4 1966171168
    %v3710 = vunpack.c.0.s8 %v3709
    %v3711 = vlaneseq
    %v3712 = vshrl.u32 %v3711, 7
    %v3713 = vsub.s32 %v3710, %v3712
    %v3714 = vrot.slane %v3707, %v3713
    %v3716 = vunpack.c.l.s4 1966171168
    %v3717 = vunpack.c.0.s8 %v3716
    %v3718 = vlaneseq
    %v3719 = vshrl.u32 %v3718, 7
    %v3720 = vsub.s32 %v3717, %v3719
    %v3721 = vrot.slane %v2037, %v3720
    %v3722 = vcombine.low %v3714, %v3721
    %v3724 = vunpack.c.l.s4 1966171168
    %v3725 = vunpack.c.0.s8 %v3724
    %v3726 = vlaneseq
    %v3727 = vshrl.u32 %v3726, 7
    %v3728 = vsub.s32 %v3725, %v3727
    %v3729 = vrot.slane %v3722, %v3728
    %v3730 = vcombine.low %v2051, %v2059
    %v3732 = vunpack.c.l.s4 1966171168
    %v3733 = vunpack.c.0.s8 %v3732
    %v3734 = vlaneseq
    %v3735 = vshrl.u32 %v3734, 7
    %v3736 = vsub.s32 %v3733, %v3735
    %v3737 = vrot.slane %v3730, %v3736
    %v3739 = vunpack.c.l.s4 1966171168
    %v3740 = vunpack.c.0.s8 %v3739
    %v3741 = vlaneseq
    %v3742 = vshrl.u32 %v3741, 7
    %v3743 = vsub.s32 %v3740, %v3742
    %v3744 = vrot.slane %v2061, %v3743
    %v3745 = vcombine.low %v3737, %v3744
    %v3747 = vunpack.c.l.s4 1966171168
    %v3748 = vunpack.c.0.s8 %v3747
    %v3749 = vlaneseq
    %v3750 = vshrl.u32 %v3749, 7
    %v3751 = vsub.s32 %v3748, %v3750
    %v3752 = vrot.slane %v3745, %v3751
    %v3753 = vcombine.low %v2044, %v2058
    %v3755 = vunpack.c.l.s4 1966171168
    %v3756 = vunpack.c.0.s8 %v3755
    %v3757 = vlaneseq
    %v3758 = vshrl.u32 %v3757, 7
    %v3759 = vsub.s32 %v3756, %v3758
    %v3760 = vrot.slane %v3753, %v3759
    %v3762 = vunpack.c.l.s4 1966171168
    %v3763 = vunpack.c.0.s8 %v3762
    %v3764 = vlaneseq
    %v3765 = vshrl.u32 %v3764, 7
    %v3766 = vsub.s32 %v3763, %v3765
    %v3767 = vrot.slane %v2060, %v3766
    %v3768 = vcombine.low %v3760, %v3767
    %v3770 = vunpack.c.l.s4 1966171168
    %v3771 = vunpack.c.0.s8 %v3770
    %v3772 = vlaneseq
    %v3773 = vshrl.u32 %v3772, 7
    %v3774 = vsub.s32 %v3771, %v3773
    %v3775 = vrot.slane %v3768, %v3774
    %v3776 = vcombine.low %v2062, %v2086
    %v3778 = vunpack.c.l.s4 1966171168
    %v3779 = vunpack.c.0.s8 %v3778
    %v3780 = vlaneseq
    %v3781 = vshrl.u32 %v3780, 7
    %v3782 = vsub.s32 %v3779, %v3781
    %v3783 = vrot.slane %v3776, %v3782
    %v3785 = vunpack.c.l.s4 1966171168
    %v3786 = vunpack.c.0.s8 %v3785
    %v3787 = vlaneseq
    %v3788 = vshrl.u32 %v3787, 7
    %v3789 = vsub.s32 %v3786, %v3788
    %v3790 = vrot.slane %v2100, %v3789
    %v3791 = vcombine.low %v3783, %v3790
    %v3793 = vunpack.c.l.s4 1966171168
    %v3794 = vunpack.c.0.s8 %v3793
    %v3795 = vlaneseq
    %v3796 = vshrl.u32 %v3795, 7
    %v3797 = vsub.s32 %v3794, %v3796
    %v3798 = vrot.slane %v3791, %v3797
    %v3799 = vcombine.low %v2108, %v2110
    %v3801 = vunpack.c.l.s4 1966171168
    %v3802 = vunpack.c.0.s8 %v3801
    %v3803 = vlaneseq
    %v3804 = vshrl.u32 %v3803, 7
    %v3805 = vsub.s32 %v3802, %v3804
    %v3806 = vrot.slane %v3799, %v3805
    %v3808 = vunpack.c.l.s4 1966171168
    %v3809 = vunpack.c.0.s8 %v3808
    %v3810 = vlaneseq
    %v3811 = vshrl.u32 %v3810, 7
    %v3812 = vsub.s32 %v3809, %v3811
    %v3813 = vrot.slane %v2093, %v3812
    %v3814 = vcombine.low %v3806, %v3813
    %v3816 = vunpack.c.l.s4 1966171168
    %v3817 = vunpack.c.0.s8 %v3816
    %v3818 = vlaneseq
    %v3819 = vshrl.u32 %v3818, 7
    %v3820 = vsub.s32 %v3817, %v3819
    %v3821 = vrot.slane %v3814, %v3820
    %v3822 = vcombine.low %v2107, %v2109
    %v3824 = vunpack.c.l.s4 1966171168
    %v3825 = vunpack.c.0.s8 %v3824
    %v3826 = vlaneseq
    %v3827 = vshrl.u32 %v3826, 7
    %v3828 = vsub.s32 %v3825, %v3827
    %v3829 = vrot.slane %v3822, %v3828
    %v3831 = vunpack.c.l.s4 1966171168
    %v3832 = vunpack.c.0.s8 %v3831
    %v3833 = vlaneseq
    %v3834 = vshrl.u32 %v3833, 7
    %v3835 = vsub.s32 %v3832, %v3834
    %v3836 = vrot.slane %v2111, %v3835
    %v3837 = vcombine.low %v3829, %v3836
    %v3839 = vunpack.c.l.s4 1966171168
    %v3840 = vunpack.c.0.s8 %v3839
    %v3841 = vlaneseq
    %v3842 = vshrl.u32 %v3841, 7
    %v3843 = vsub.s32 %v3840, %v3842
    %v3844 = vrot.slane %v3837, %v3843
    %v3845 = vcombine.low %v2135, %v2149
    %v3847 = vunpack.c.l.s4 1966171168
    %v3848 = vunpack.c.0.s8 %v3847
    %v3849 = vlaneseq
    %v3850 = vshrl.u32 %v3849, 7
    %v3851 = vsub.s32 %v3848, %v3850
    %v3852 = vrot.slane %v3845, %v3851
    %v3854 = vunpack.c.l.s4 1966171168
    %v3855 = vunpack.c.0.s8 %v3854
    %v3856 = vlaneseq
    %v3857 = vshrl.u32 %v3856, 7
    %v3858 = vsub.s32 %v3855, %v3857
    %v3859 = vrot.slane %v2157, %v3858
    %v3860 = vcombine.low %v3852, %v3859
    %v3862 = vunpack.c.l.s4 1966171168
    %v3863 = vunpack.c.0.s8 %v3862
    %v3864 = vlaneseq
    %v3865 = vshrl.u32 %v3864, 7
    %v3866 = vsub.s32 %v3863, %v3865
    %v3867 = vrot.slane %v3860, %v3866
    %v3868 = vcombine.low %v2158, %v2142
    %v3870 = vunpack.c.l.s4 1966171168
    %v3871 = vunpack.c.0.s8 %v3870
    %v3872 = vlaneseq
    %v3873 = vshrl.u32 %v3872, 7
    %v3874 = vsub.s32 %v3871, %v3873
    %v3875 = vrot.slane %v3868, %v3874
    %v3877 = vunpack.c.l.s4 1966171168
    %v3878 = vunpack.c.0.s8 %v3877
    %v3879 = vlaneseq
    %v3880 = vshrl.u32 %v3879, 7
    %v3881 = vsub.s32 %v3878, %v3880
    %v3882 = vrot.slane %v2156, %v3881
    %v3883 = vcombine.low %v3875, %v3882
    %v3885 = vunpack.c.l.s4 1966171168
    %v3886 = vunpack.c.0.s8 %v3885
    %v3887 = vlaneseq
    %v3888 = vshrl.u32 %v3887, 7
    %v3889 = vsub.s32 %v3886, %v3888
    %v3890 = vrot.slane %v3883, %v3889
    %v3891 = vcombine.low %v2182, %v2196
    %v3893 = vunpack.c.l.s4 1966171168
    %v3894 = vunpack.c.0.s8 %v3893
    %v3895 = vlaneseq
    %v3896 = vshrl.u32 %v3895, 7
    %v3897 = vsub.s32 %v3894, %v3896
    %v3898 = vrot.slane %v3891, %v3897
    %v3900 = vunpack.c.l.s4 1966171168
    %v3901 = vunpack.c.0.s8 %v3900
    %v3902 = vlaneseq
    %v3903 = vshrl.u32 %v3902, 7
    %v3904 = vsub.s32 %v3901, %v3903
    %v3905 = vrot.slane %v2204, %v3904
    %v3906 = vcombine.low %v3898, %v3905
    %v3908 = vunpack.c.l.s4 1966171168
    %v3909 = vunpack.c.0.s8 %v3908
    %v3910 = vlaneseq
    %v3911 = vshrl.u32 %v3910, 7
    %v3912 = vsub.s32 %v3909, %v3911
    %v3913 = vrot.slane %v3906, %v3912
    %v3914 = vcombine.low %v2206, %v2189
    %v3916 = vunpack.c.l.s4 1966171168
    %v3917 = vunpack.c.0.s8 %v3916
    %v3918 = vlaneseq
    %v3919 = vshrl.u32 %v3918, 7
    %v3920 = vsub.s32 %v3917, %v3919
    %v3921 = vrot.slane %v3914, %v3920
    %v3923 = vunpack.c.l.s4 1966171168
    %v3924 = vunpack.c.0.s8 %v3923
    %v3925 = vlaneseq
    %v3926 = vshrl.u32 %v3925, 7
    %v3927 = vsub.s32 %v3924, %v3926
    %v3928 = vrot.slane %v2203, %v3927
    %v3929 = vcombine.low %v3921, %v3928
    %v3931 = vunpack.c.l.s4 1966171168
    %v3932 = vunpack.c.0.s8 %v3931
    %v3933 = vlaneseq
    %v3934 = vshrl.u32 %v3933, 7
    %v3935 = vsub.s32 %v3932, %v3934
    %v3936 = vrot.slane %v3929, %v3935
    %v3937 = vcombine.low %v2205, %v2207
    %v3939 = vunpack.c.l.s4 1966171168
    %v3940 = vunpack.c.0.s8 %v3939
    %v3941 = vlaneseq
    %v3942 = vshrl.u32 %v3941, 7
    %v3943 = vsub.s32 %v3940, %v3942
    %v3944 = vrot.slane %v3937, %v3943
    %v3946 = vunpack.c.l.s4 1966171168
    %v3947 = vunpack.c.0.s8 %v3946
    %v3948 = vlaneseq
    %v3949 = vshrl.u32 %v3948, 7
    %v3950 = vsub.s32 %v3947, %v3949
    %v3951 = vrot.slane %v2231, %v3950
    %v3952 = vcombine.low %v3944, %v3951
    %v3954 = vunpack.c.l.s4 1966171168
    %v3955 = vunpack.c.0.s8 %v3954
    %v3956 = vlaneseq
    %v3957 = vshrl.u32 %v3956, 7
    %v3958 = vsub.s32 %v3955, %v3957
    %v3959 = vrot.slane %v3952, %v3958
    %v3960 = vcombine.low %v2245, %v2253
    %v3962 = vunpack.c.l.s4 1966171168
    %v3963 = vunpack.c.0.s8 %v3962
    %v3964 = vlaneseq
    %v3965 = vshrl.u32 %v3964, 7
    %v3966 = vsub.s32 %v3963, %v3965
    %v3967 = vrot.slane %v3960, %v3966
    %v3969 = vunpack.c.l.s4 1966171168
    %v3970 = vunpack.c.0.s8 %v3969
    %v3971 = vlaneseq
    %v3972 = vshrl.u32 %v3971, 7
    %v3973 = vsub.s32 %v3970, %v3972
    %v3974 = vrot.slane %v2255, %v3973
    %v3975 = vcombine.low %v3967, %v3974
    %v3977 = vunpack.c.l.s4 1966171168
    %v3978 = vunpack.c.0.s8 %v3977
    %v3979 = vlaneseq
    %v3980 = vshrl.u32 %v3979, 7
    %v3981 = vsub.s32 %v3978, %v3980
    %v3982 = vrot.slane %v3975, %v3981
    %v3983 = vcombine.low %v2238, %v2252
    %v3985 = vunpack.c.l.s4 1966171168
    %v3986 = vunpack.c.0.s8 %v3985
    %v3987 = vlaneseq
    %v3988 = vshrl.u32 %v3987, 7
    %v3989 = vsub.s32 %v3986, %v3988
    %v3990 = vrot.slane %v3983, %v3989
    %v3992 = vunpack.c.l.s4 1966171168
    %v3993 = vunpack.c.0.s8 %v3992
    %v3994 = vlaneseq
    %v3995 = vshrl.u32 %v3994, 7
    %v3996 = vsub.s32 %v3993, %v3995
    %v3997 = vrot.slane %v2254, %v3996
    %v3998 = vcombine.low %v3990, %v3997
    %v4000 = vunpack.c.l.s4 1966171168
    %v4001 = vunpack.c.0.s8 %v4000
    %v4002 = vlaneseq
    %v4003 = vshrl.u32 %v4002, 7
    %v4004 = vsub.s32 %v4001, %v4003
    %v4005 = vrot.slane %v3998, %v4004
    %v4006 = vcombine.low %v2256, %v2280
    %v4008 = vunpack.c.l.s4 1966171168
    %v4009 = vunpack.c.0.s8 %v4008
    %v4010 = vlaneseq
    %v4011 = vshrl.u32 %v4010, 7
    %v4012 = vsub.s32 %v4009, %v4011
    %v4013 = vrot.slane %v4006, %v4012
    %v4015 = vunpack.c.l.s4 1966171168
    %v4016 = vunpack.c.0.s8 %v4015
    %v4017 = vlaneseq
    %v4018 = vshrl.u32 %v4017, 7
    %v4019 = vsub.s32 %v4016, %v4018
    %v4020 = vrot.slane %v2294, %v4019
    %v4021 = vcombine.low %v4013, %v4020
    %v4023 = vunpack.c.l.s4 1966171168
    %v4024 = vunpack.c.0.s8 %v4023
    %v4025 = vlaneseq
    %v4026 = vshrl.u32 %v4025, 7
    %v4027 = vsub.s32 %v4024, %v4026
    %v4028 = vrot.slane %v4021, %v4027
    %v4029 = vcombine.low %v2302, %v2304
    %v4031 = vunpack.c.l.s4 1966171168
    %v4032 = vunpack.c.0.s8 %v4031
    %v4033 = vlaneseq
    %v4034 = vshrl.u32 %v4033, 7
    %v4035 = vsub.s32 %v4032, %v4034
    %v4036 = vrot.slane %v4029, %v4035
    %v4038 = vunpack.c.l.s4 1966171168
    %v4039 = vunpack.c.0.s8 %v4038
    %v4040 = vlaneseq
    %v4041 = vshrl.u32 %v4040, 7
    %v4042 = vsub.s32 %v4039, %v4041
    %v4043 = vrot.slane %v2287, %v4042
    %v4044 = vcombine.low %v4036, %v4043
    %v4046 = vunpack.c.l.s4 1966171168
    %v4047 = vunpack.c.0.s8 %v4046
    %v4048 = vlaneseq
    %v4049 = vshrl.u32 %v4048, 7
    %v4050 = vsub.s32 %v4047, %v4049
    %v4051 = vrot.slane %v4044, %v4050
    %v4052 = vcombine.low %v2301, %v2303
    %v4054 = vunpack.c.l.s4 1966171168
    %v4055 = vunpack.c.0.s8 %v4054
    %v4056 = vlaneseq
    %v4057 = vshrl.u32 %v4056, 7
    %v4058 = vsub.s32 %v4055, %v4057
    %v4059 = vrot.slane %v4052, %v4058
    %v4061 = vunpack.c.l.s4 1966171168
    %v4062 = vunpack.c.0.s8 %v4061
    %v4063 = vlaneseq
    %v4064 = vshrl.u32 %v4063, 7
    %v4065 = vsub.s32 %v4062, %v4064
    %v4066 = vrot.slane %v2305, %v4065
    %v4067 = vcombine.low %v4059, %v4066
    %v4069 = vunpack.c.l.s4 1966171168
    %v4070 = vunpack.c.0.s8 %v4069
    %v4071 = vlaneseq
    %v4072 = vshrl.u32 %v4071, 7
    %v4073 = vsub.s32 %v4070, %v4072
    %v4074 = vrot.slane %v4067, %v4073
    %v4075 = vcombine.low %v2329, %v2343
    %v4077 = vunpack.c.l.s4 1966171168
    %v4078 = vunpack.c.0.s8 %v4077
    %v4079 = vlaneseq
    %v4080 = vshrl.u32 %v4079, 7
    %v4081 = vsub.s32 %v4078, %v4080
    %v4082 = vrot.slane %v4075, %v4081
    %v4084 = vunpack.c.l.s4 1966171168
    %v4085 = vunpack.c.0.s8 %v4084
    %v4086 = vlaneseq
    %v4087 = vshrl.u32 %v4086, 7
    %v4088 = vsub.s32 %v4085, %v4087
    %v4089 = vrot.slane %v2351, %v4088
    %v4090 = vcombine.low %v4082, %v4089
    %v4092 = vunpack.c.l.s4 1966171168
    %v4093 = vunpack.c.0.s8 %v4092
    %v4094 = vlaneseq
    %v4095 = vshrl.u32 %v4094, 7
    %v4096 = vsub.s32 %v4093, %v4095
    %v4097 = vrot.slane %v4090, %v4096
    %v4098 = vcombine.low %v2352, %v2336
    %v4100 = vunpack.c.l.s4 1966171168
    %v4101 = vunpack.c.0.s8 %v4100
    %v4102 = vlaneseq
    %v4103 = vshrl.u32 %v4102, 7
    %v4104 = vsub.s32 %v4101, %v4103
    %v4105 = vrot.slane %v4098, %v4104
    %v4107 = vunpack.c.l.s4 1966171168
    %v4108 = vunpack.c.0.s8 %v4107
    %v4109 = vlaneseq
    %v4110 = vshrl.u32 %v4109, 7
    %v4111 = vsub.s32 %v4108, %v4110
    %v4112 = vrot.slane %v2350, %v4111
    %v4113 = vcombine.low %v4105, %v4112
    %v4115 = vunpack.c.l.s4 1966171168
    %v4116 = vunpack.c.0.s8 %v4115
    %v4117 = vlaneseq
    %v4118 = vshrl.u32 %v4117, 7
    %v4119 = vsub.s32 %v4116, %v4118
    %v4120 = vrot.slane %v4113, %v4119
    %v4121 = vcombine.low %v2376, %v2390
    %v4123 = vunpack.c.l.s4 1966171168
    %v4124 = vunpack.c.0.s8 %v4123
    %v4125 = vlaneseq
    %v4126 = vshrl.u32 %v4125, 7
    %v4127 = vsub.s32 %v4124, %v4126
    %v4128 = vrot.slane %v4121, %v4127
    %v4130 = vunpack.c.l.s4 1966171168
    %v4131 = vunpack.c.0.s8 %v4130
    %v4132 = vlaneseq
    %v4133 = vshrl.u32 %v4132, 7
    %v4134 = vsub.s32 %v4131, %v4133
    %v4135 = vrot.slane %v2398, %v4134
    %v4136 = vcombine.low %v4128, %v4135
    %v4138 = vunpack.c.l.s4 1966171168
    %v4139 = vunpack.c.0.s8 %v4138
    %v4140 = vlaneseq
    %v4141 = vshrl.u32 %v4140, 7
    %v4142 = vsub.s32 %v4139, %v4141
    %v4143 = vrot.slane %v4136, %v4142
    %v4144 = vcombine.low %v2400, %v2383
    %v4146 = vunpack.c.l.s4 1966171168
    %v4147 = vunpack.c.0.s8 %v4146
    %v4148 = vlaneseq
    %v4149 = vshrl.u32 %v4148, 7
    %v4150 = vsub.s32 %v4147, %v4149
    %v4151 = vrot.slane %v4144, %v4150
    %v4153 = vunpack.c.l.s4 1966171168
    %v4154 = vunpack.c.0.s8 %v4153
    %v4155 = vlaneseq
    %v4156 = vshrl.u32 %v4155, 7
    %v4157 = vsub.s32 %v4154, %v4156
    %v4158 = vrot.slane %v2397, %v4157
    %v4159 = vcombine.low %v4151, %v4158
    %v4161 = vunpack.c.l.s4 1966171168
    %v4162 = vunpack.c.0.s8 %v4161
    %v4163 = vlaneseq
    %v4164 = vshrl.u32 %v4163, 7
    %v4165 = vsub.s32 %v4162, %v4164
    %v4166 = vrot.slane %v4159, %v4165
    %v4167 = vcombine.low %v2399, %v2401
    %v4169 = vunpack.c.l.s4 1966171168
    %v4170 = vunpack.c.0.s8 %v4169
    %v4171 = vlaneseq
    %v4172 = vshrl.u32 %v4171, 7
    %v4173 = vsub.s32 %v4170, %v4172
    %v4174 = vrot.slane %v4167, %v4173
    %v4176 = vunpack.c.l.s4 1966171168
    %v4177 = vunpack.c.0.s8 %v4176
    %v4178 = vlaneseq
    %v4179 = vshrl.u32 %v4178, 7
    %v4180 = vsub.s32 %v4177, %v4179
    %v4181 = vrot.slane %v2425, %v4180
    %v4182 = vcombine.low %v4174, %v4181
    %v4184 = vunpack.c.l.s4 1966171168
    %v4185 = vunpack.c.0.s8 %v4184
    %v4186 = vlaneseq
    %v4187 = vshrl.u32 %v4186, 7
    %v4188 = vsub.s32 %v4185, %v4187
    %v4189 = vrot.slane %v4182, %v4188
    %v4190 = vcombine.low %v2439, %v2447
    %v4192 = vunpack.c.l.s4 1966171168
    %v4193 = vunpack.c.0.s8 %v4192
    %v4194 = vlaneseq
    %v4195 = vshrl.u32 %v4194, 7
    %v4196 = vsub.s32 %v4193, %v4195
    %v4197 = vrot.slane %v4190, %v4196
    %v4199 = vunpack.c.l.s4 1966171168
    %v4200 = vunpack.c.0.s8 %v4199
    %v4201 = vlaneseq
    %v4202 = vshrl.u32 %v4201, 7
    %v4203 = vsub.s32 %v4200, %v4202
    %v4204 = vrot.slane %v2449, %v4203
    %v4205 = vcombine.low %v4197, %v4204
    %v4207 = vunpack.c.l.s4 1966171168
    %v4208 = vunpack.c.0.s8 %v4207
    %v4209 = vlaneseq
    %v4210 = vshrl.u32 %v4209, 7
    %v4211 = vsub.s32 %v4208, %v4210
    %v4212 = vrot.slane %v4205, %v4211
    %v4213 = vcombine.low %v2432, %v2446
    %v4215 = vunpack.c.l.s4 1966171168
    %v4216 = vunpack.c.0.s8 %v4215
    %v4217 = vlaneseq
    %v4218 = vshrl.u32 %v4217, 7
    %v4219 = vsub.s32 %v4216, %v4218
    %v4220 = vrot.slane %v4213, %v4219
    %v4222 = vunpack.c.l.s4 1966171168
    %v4223 = vunpack.c.0.s8 %v4222
    %v4224 = vlaneseq
    %v4225 = vshrl.u32 %v4224, 7
    %v4226 = vsub.s32 %v4223, %v4225
    %v4227 = vrot.slane %v2448, %v4226
    %v4228 = vcombine.low %v4220, %v4227
    %v4230 = vunpack.c.l.s4 1966171168
    %v4231 = vunpack.c.0.s8 %v4230
    %v4232 = vlaneseq
    %v4233 = vshrl.u32 %v4232, 7
    %v4234 = vsub.s32 %v4231, %v4233
    %v4235 = vrot.slane %v4228, %v4234
    %v4236 = vcombine.low %v2450, %v2474
    %v4238 = vunpack.c.l.s4 1966171168
    %v4239 = vunpack.c.0.s8 %v4238
    %v4240 = vlaneseq
    %v4241 = vshrl.u32 %v4240, 7
    %v4242 = vsub.s32 %v4239, %v4241
    %v4243 = vrot.slane %v4236, %v4242
    %v4245 = vunpack.c.l.s4 1966171168
    %v4246 = vunpack.c.0.s8 %v4245
    %v4247 = vlaneseq
    %v4248 = vshrl.u32 %v4247, 7
    %v4249 = vsub.s32 %v4246, %v4248
    %v4250 = vrot.slane %v2488, %v4249
    %v4251 = vcombine.low %v4243, %v4250
    %v4253 = vunpack.c.l.s4 1966171168
    %v4254 = vunpack.c.0.s8 %v4253
    %v4255 = vlaneseq
    %v4256 = vshrl.u32 %v4255, 7
    %v4257 = vsub.s32 %v4254, %v4256
    %v4258 = vrot.slane %v4251, %v4257
    %v4259 = vcombine.low %v2496, %v2498
    %v4261 = vunpack.c.l.s4 1966171168
    %v4262 = vunpack.c.0.s8 %v4261
    %v4263 = vlaneseq
    %v4264 = vshrl.u32 %v4263, 7
    %v4265 = vsub.s32 %v4262, %v4264
    %v4266 = vrot.slane %v4259, %v4265
    %v4268 = vunpack.c.l.s4 1966171168
    %v4269 = vunpack.c.0.s8 %v4268
    %v4270 = vlaneseq
    %v4271 = vshrl.u32 %v4270, 7
    %v4272 = vsub.s32 %v4269, %v4271
    %v4273 = vrot.slane %v2481, %v4272
    %v4274 = vcombine.low %v4266, %v4273
    %v4276 = vunpack.c.l.s4 1966171168
    %v4277 = vunpack.c.0.s8 %v4276
    %v4278 = vlaneseq
    %v4279 = vshrl.u32 %v4278, 7
    %v4280 = vsub.s32 %v4277, %v4279
    %v4281 = vrot.slane %v4274, %v4280
    %v4282 = vcombine.low %v2495, %v2497
    %v4284 = vunpack.c.l.s4 1966171168
    %v4285 = vunpack.c.0.s8 %v4284
    %v4286 = vlaneseq
    %v4287 = vshrl.u32 %v4286, 7
    %v4288 = vsub.s32 %v4285, %v4287
    %v4289 = vrot.slane %v4282, %v4288
    %v4291 = vunpack.c.l.s4 1966171168
    %v4292 = vunpack.c.0.s8 %v4291
    %v4293 = vlaneseq
    %v4294 = vshrl.u32 %v4293, 7
    %v4295 = vsub.s32 %v4292, %v4294
    %v4296 = vrot.slane %v2499, %v4295
    %v4297 = vcombine.low %v4289, %v4296
    %v4299 = vunpack.c.l.s4 1966171168
    %v4300 = vunpack.c.0.s8 %v4299
    %v4301 = vlaneseq
    %v4302 = vshrl.u32 %v4301, 7
    %v4303 = vsub.s32 %v4300, %v4302
    %v4304 = vrot.slane %v4297, %v4303
    %v4305 = vcombine.low %v2523, %v2537
    %v4307 = vunpack.c.l.s4 1966171168
    %v4308 = vunpack.c.0.s8 %v4307
    %v4309 = vlaneseq
    %v4310 = vshrl.u32 %v4309, 7
    %v4311 = vsub.s32 %v4308, %v4310
    %v4312 = vrot.slane %v4305, %v4311
    %v4314 = vunpack.c.l.s4 1966171168
    %v4315 = vunpack.c.0.s8 %v4314
    %v4316 = vlaneseq
    %v4317 = vshrl.u32 %v4316, 7
    %v4318 = vsub.s32 %v4315, %v4317
    %v4319 = vrot.slane %v2545, %v4318
    %v4320 = vcombine.low %v4312, %v4319
    %v4322 = vunpack.c.l.s4 1966171168
    %v4323 = vunpack.c.0.s8 %v4322
    %v4324 = vlaneseq
    %v4325 = vshrl.u32 %v4324, 7
    %v4326 = vsub.s32 %v4323, %v4325
    %v4327 = vrot.slane %v4320, %v4326
    %v4328 = vcombine.low %v2546, %v2530
    %v4330 = vunpack.c.l.s4 1966171168
    %v4331 = vunpack.c.0.s8 %v4330
    %v4332 = vlaneseq
    %v4333 = vshrl.u32 %v4332, 7
    %v4334 = vsub.s32 %v4331, %v4333
    %v4335 = vrot.slane %v4328, %v4334
    %v4337 = vunpack.c.l.s4 1966171168
    %v4338 = vunpack.c.0.s8 %v4337
    %v4339 = vlaneseq
    %v4340 = vshrl.u32 %v4339, 7
    %v4341 = vsub.s32 %v4338, %v4340
    %v4342 = vrot.slane %v2544, %v4341
    %v4343 = vcombine.low %v4335, %v4342
    %v4345 = vunpack.c.l.s4 1966171168
    %v4346 = vunpack.c.0.s8 %v4345
    %v4347 = vlaneseq
    %v4348 = vshrl.u32 %v4347, 7
    %v4349 = vsub.s32 %v4346, %v4348
    %v4350 = vrot.slane %v4343, %v4349
    %v4351 = vcombine.low %v2570, %v2584
    %v4353 = vunpack.c.l.s4 1966171168
    %v4354 = vunpack.c.0.s8 %v4353
    %v4355 = vlaneseq
    %v4356 = vshrl.u32 %v4355, 7
    %v4357 = vsub.s32 %v4354, %v4356
    %v4358 = vrot.slane %v4351, %v4357
    %v4360 = vunpack.c.l.s4 1966171168
    %v4361 = vunpack.c.0.s8 %v4360
    %v4362 = vlaneseq
    %v4363 = vshrl.u32 %v4362, 7
    %v4364 = vsub.s32 %v4361, %v4363
    %v4365 = vrot.slane %v2592, %v4364
    %v4366 = vcombine.low %v4358, %v4365
    %v4368 = vunpack.c.l.s4 1966171168
    %v4369 = vunpack.c.0.s8 %v4368
    %v4370 = vlaneseq
    %v4371 = vshrl.u32 %v4370, 7
    %v4372 = vsub.s32 %v4369, %v4371
    %v4373 = vrot.slane %v4366, %v4372
    %v4374 = vcombine.low %v2594, %v2577
    %v4376 = vunpack.c.l.s4 1966171168
    %v4377 = vunpack.c.0.s8 %v4376
    %v4378 = vlaneseq
    %v4379 = vshrl.u32 %v4378, 7
    %v4380 = vsub.s32 %v4377, %v4379
    %v4381 = vrot.slane %v4374, %v4380
    %v4383 = vunpack.c.l.s4 1966171168
    %v4384 = vunpack.c.0.s8 %v4383
    %v4385 = vlaneseq
    %v4386 = vshrl.u32 %v4385, 7
    %v4387 = vsub.s32 %v4384, %v4386
    %v4388 = vrot.slane %v2591, %v4387
    %v4389 = vcombine.low %v4381, %v4388
    %v4391 = vunpack.c.l.s4 1966171168
    %v4392 = vunpack.c.0.s8 %v4391
    %v4393 = vlaneseq
    %v4394 = vshrl.u32 %v4393, 7
    %v4395 = vsub.s32 %v4392, %v4394
    %v4396 = vrot.slane %v4389, %v4395
    %v4397 = vcombine.low %v2593, %v2595
    %v4399 = vunpack.c.l.s4 1966171168
    %v4400 = vunpack.c.0.s8 %v4399
    %v4401 = vlaneseq
    %v4402 = vshrl.u32 %v4401, 7
    %v4403 = vsub.s32 %v4400, %v4402
    %v4404 = vrot.slane %v4397, %v4403
    %v4406 = vunpack.c.l.s4 1966171168
    %v4407 = vunpack.c.0.s8 %v4406
    %v4408 = vlaneseq
    %v4409 = vshrl.u32 %v4408, 7
    %v4410 = vsub.s32 %v4407, %v4409
    %v4411 = vrot.slane %v2619, %v4410
    %v4412 = vcombine.low %v4404, %v4411
    %v4414 = vunpack.c.l.s4 1966171168
    %v4415 = vunpack.c.0.s8 %v4414
    %v4416 = vlaneseq
    %v4417 = vshrl.u32 %v4416, 7
    %v4418 = vsub.s32 %v4415, %v4417
    %v4419 = vrot.slane %v4412, %v4418
    %v4420 = vcombine.low %v2633, %v2641
    %v4422 = vunpack.c.l.s4 1966171168
    %v4423 = vunpack.c.0.s8 %v4422
    %v4424 = vlaneseq
    %v4425 = vshrl.u32 %v4424, 7
    %v4426 = vsub.s32 %v4423, %v4425
    %v4427 = vrot.slane %v4420, %v4426
    %v4429 = vunpack.c.l.s4 1966171168
    %v4430 = vunpack.c.0.s8 %v4429
    %v4431 = vlaneseq
    %v4432 = vshrl.u32 %v4431, 7
    %v4433 = vsub.s32 %v4430, %v4432
    %v4434 = vrot.slane %v2643, %v4433
    %v4435 = vcombine.low %v4427, %v4434
    %v4437 = vunpack.c.l.s4 1966171168
    %v4438 = vunpack.c.0.s8 %v4437
    %v4439 = vlaneseq
    %v4440 = vshrl.u32 %v4439, 7
    %v4441 = vsub.s32 %v4438, %v4440
    %v4442 = vrot.slane %v4435, %v4441
    %v4443 = vcombine.low %v2626, %v2640
    %v4445 = vunpack.c.l.s4 1966171168
    %v4446 = vunpack.c.0.s8 %v4445
    %v4447 = vlaneseq
    %v4448 = vshrl.u32 %v4447, 7
    %v4449 = vsub.s32 %v4446, %v4448
    %v4450 = vrot.slane %v4443, %v4449
    %v4452 = vunpack.c.l.s4 1966171168
    %v4453 = vunpack.c.0.s8 %v4452
    %v4454 = vlaneseq
    %v4455 = vshrl.u32 %v4454, 7
    %v4456 = vsub.s32 %v4453, %v4455
    %v4457 = vrot.slane %v2642, %v4456
    %v4458 = vcombine.low %v4450, %v4457
    %v4460 = vunpack.c.l.s4 1966171168
    %v4461 = vunpack.c.0.s8 %v4460
    %v4462 = vlaneseq
    %v4463 = vshrl.u32 %v4462, 7
    %v4464 = vsub.s32 %v4461, %v4463
    %v4465 = vrot.slane %v4458, %v4464
    %v4466 = vcombine.low %v2644, %v2668
    %v4468 = vunpack.c.l.s4 1966171168
    %v4469 = vunpack.c.0.s8 %v4468
    %v4470 = vlaneseq
    %v4471 = vshrl.u32 %v4470, 7
    %v4472 = vsub.s32 %v4469, %v4471
    %v4473 = vrot.slane %v4466, %v4472
    %v4475 = vunpack.c.l.s4 1966171168
    %v4476 = vunpack.c.0.s8 %v4475
    %v4477 = vlaneseq
    %v4478 = vshrl.u32 %v4477, 7
    %v4479 = vsub.s32 %v4476, %v4478
    %v4480 = vrot.slane %v2682, %v4479
    %v4481 = vcombine.low %v4473, %v4480
    %v4483 = vunpack.c.l.s4 1966171168
    %v4484 = vunpack.c.0.s8 %v4483
    %v4485 = vlaneseq
    %v4486 = vshrl.u32 %v4485, 7
    %v4487 = vsub.s32 %v4484, %v4486
    %v4488 = vrot.slane %v4481, %v4487
    %v4489 = vcombine.low %v2690, %v2692
    %v4491 = vunpack.c.l.s4 1966171168
    %v4492 = vunpack.c.0.s8 %v4491
    %v4493 = vlaneseq
    %v4494 = vshrl.u32 %v4493, 7
    %v4495 = vsub.s32 %v4492, %v4494
    %v4496 = vrot.slane %v4489, %v4495
    %v4498 = vunpack.c.l.s4 1966171168
    %v4499 = vunpack.c.0.s8 %v4498
    %v4500 = vlaneseq
    %v4501 = vshrl.u32 %v4500, 7
    %v4502 = vsub.s32 %v4499, %v4501
    %v4503 = vrot.slane %v2675, %v4502
    %v4504 = vcombine.low %v4496, %v4503
    %v4506 = vunpack.c.l.s4 1966171168
    %v4507 = vunpack.c.0.s8 %v4506
    %v4508 = vlaneseq
    %v4509 = vshrl.u32 %v4508, 7
    %v4510 = vsub.s32 %v4507, %v4509
    %v4511 = vrot.slane %v4504, %v4510
    %v4512 = vcombine.low %v2689, %v2691
    %v4514 = vunpack.c.l.s4 1966171168
    %v4515 = vunpack.c.0.s8 %v4514
    %v4516 = vlaneseq
    %v4517 = vshrl.u32 %v4516, 7
    %v4518 = vsub.s32 %v4515, %v4517
    %v4519 = vrot.slane %v4512, %v4518
    %v4521 = vunpack.c.l.s4 1966171168
    %v4522 = vunpack.c.0.s8 %v4521
    %v4523 = vlaneseq
    %v4524 = vshrl.u32 %v4523, 7
    %v4525 = vsub.s32 %v4522, %v4524
    %v4526 = vrot.slane %v2693, %v4525
    %v4527 = vcombine.low %v4519, %v4526
    %v4529 = vunpack.c.l.s4 1966171168
    %v4530 = vunpack.c.0.s8 %v4529
    %v4531 = vlaneseq
    %v4532 = vshrl.u32 %v4531, 7
    %v4533 = vsub.s32 %v4530, %v4532
    %v4534 = vrot.slane %v4527, %v4533
    %v4535 = vcombine.low %v2717, %v2731
    %v4537 = vunpack.c.l.s4 1966171168
    %v4538 = vunpack.c.0.s8 %v4537
    %v4539 = vlaneseq
    %v4540 = vshrl.u32 %v4539, 7
    %v4541 = vsub.s32 %v4538, %v4540
    %v4542 = vrot.slane %v4535, %v4541
    %v4544 = vunpack.c.l.s4 1966171168
    %v4545 = vunpack.c.0.s8 %v4544
    %v4546 = vlaneseq
    %v4547 = vshrl.u32 %v4546, 7
    %v4548 = vsub.s32 %v4545, %v4547
    %v4549 = vrot.slane %v2739, %v4548
    %v4550 = vcombine.low %v4542, %v4549
    %v4552 = vunpack.c.l.s4 1966171168
    %v4553 = vunpack.c.0.s8 %v4552
    %v4554 = vlaneseq
    %v4555 = vshrl.u32 %v4554, 7
    %v4556 = vsub.s32 %v4553, %v4555
    %v4557 = vrot.slane %v4550, %v4556
    %v4558 = vcombine.low %v2740, %v2724
    %v4560 = vunpack.c.l.s4 1966171168
    %v4561 = vunpack.c.0.s8 %v4560
    %v4562 = vlaneseq
    %v4563 = vshrl.u32 %v4562, 7
    %v4564 = vsub.s32 %v4561, %v4563
    %v4565 = vrot.slane %v4558, %v4564
    %v4567 = vunpack.c.l.s4 1966171168
    %v4568 = vunpack.c.0.s8 %v4567
    %v4569 = vlaneseq
    %v4570 = vshrl.u32 %v4569, 7
    %v4571 = vsub.s32 %v4568, %v4570
    %v4572 = vrot.slane %v2738, %v4571
    %v4573 = vcombine.low %v4565, %v4572
    %v4575 = vunpack.c.l.s4 1966171168
    %v4576 = vunpack.c.0.s8 %v4575
    %v4577 = vlaneseq
    %v4578 = vshrl.u32 %v4577, 7
    %v4579 = vsub.s32 %v4576, %v4578
    %v4580 = vrot.slane %v4573, %v4579
    %vm4661 = vcmask 1042432
    %v4662 = vsel %vm4661, %v2763, -inf
    %v4663 = vrot.slane %v4662, 4
    %v4664 = vmax.f32 %v4662, %v4663
    %v4665 = vrot.slane %v4664, 2
    %v4666 = vmax.f32 %v4664, %v4665
    %v4667 = vrot.slane %v4666, 1
    %v4668 = vmax.f32 %v4666, %v4667
    %v4669 = vsel %vm4661, %v2786, -inf
    %v4670 = vrot.slane %v4669, 4
    %v4671 = vmax.f32 %v4669, %v4670
    %v4672 = vrot.slane %v4671, 2
    %v4673 = vmax.f32 %v4671, %v4672
    %v4674 = vrot.slane %v4673, 1
    %v4675 = vmax.f32 %v4673, %v4674
    %v4676 = vsel %vm4661, %v2809, -inf
    %v4677 = vrot.slane %v4676, 4
    %v4678 = vmax.f32 %v4676, %v4677
    %v4679 = vrot.slane %v4678, 2
    %v4680 = vmax.f32 %v4678, %v4679
    %v4681 = vrot.slane %v4680, 1
    %v4682 = vmax.f32 %v4680, %v4681
    %v4683 = vsel %vm4661, %v2832, -inf
    %v4684 = vrot.slane %v4683, 4
    %v4685 = vmax.f32 %v4683, %v4684
    %v4686 = vrot.slane %v4685, 2
    %v4687 = vmax.f32 %v4685, %v4686
    %v4688 = vrot.slane %v4687, 1
    %v4689 = vmax.f32 %v4687, %v4688
    %v4690 = vsel %vm4661, %v2855, -inf
    %v4691 = vrot.slane %v4690, 4
    %v4692 = vmax.f32 %v4690, %v4691
    %v4693 = vrot.slane %v4692, 2
    %v4694 = vmax.f32 %v4692, %v4693
    %v4695 = vrot.slane %v4694, 1
    %v4696 = vmax.f32 %v4694, %v4695
    %v4697 = vsel %vm4661, %v2878, -inf
    %v4698 = vrot.slane %v4697, 4
    %v4699 = vmax.f32 %v4697, %v4698
    %v4700 = vrot.slane %v4699, 2
    %v4701 = vmax.f32 %v4699, %v4700
    %v4702 = vrot.slane %v4701, 1
    %v4703 = vmax.f32 %v4701, %v4702
    %v4704 = vsel %vm4661, %v2901, -inf
    %v4705 = vrot.slane %v4704, 4
    %v4706 = vmax.f32 %v4704, %v4705
    %v4707 = vrot.slane %v4706, 2
    %v4708 = vmax.f32 %v4706, %v4707
    %v4709 = vrot.slane %v4708, 1
    %v4710 = vmax.f32 %v4708, %v4709
    %v4711 = vsel %vm4661, %v2924, -inf
    %v4712 = vrot.slane %v4711, 4
    %v4713 = vmax.f32 %v4711, %v4712
    %v4714 = vrot.slane %v4713, 2
    %v4715 = vmax.f32 %v4713, %v4714
    %v4716 = vrot.slane %v4715, 1
    %v4717 = vmax.f32 %v4715, %v4716
    %v4718 = vsel %vm4661, %v2947, -inf
    %v4719 = vrot.slane %v4718, 4
    %v4720 = vmax.f32 %v4718, %v4719
    %v4721 = vrot.slane %v4720, 2
    %v4722 = vmax.f32 %v4720, %v4721
    %v4723 = vrot.slane %v4722, 1
    %v4724 = vmax.f32 %v4722, %v4723
    %v4725 = vsel %vm4661, %v2970, -inf
    %v4726 = vrot.slane %v4725, 4
    %v4727 = vmax.f32 %v4725, %v4726
    %v4728 = vrot.slane %v4727, 2
    %v4729 = vmax.f32 %v4727, %v4728
    %v4730 = vrot.slane %v4729, 1
    %v4731 = vmax.f32 %v4729, %v4730
    %v4732 = vsel %vm4661, %v2993, -inf
    %v4733 = vrot.slane %v4732, 4
    %v4734 = vmax.f32 %v4732, %v4733
    %v4735 = vrot.slane %v4734, 2
    %v4736 = vmax.f32 %v4734, %v4735
    %v4737 = vrot.slane %v4736, 1
    %v4738 = vmax.f32 %v4736, %v4737
    %v4739 = vsel %vm4661, %v3016, -inf
    %v4740 = vrot.slane %v4739, 4
    %v4741 = vmax.f32 %v4739, %v4740
    %v4742 = vrot.slane %v4741, 2
    %v4743 = vmax.f32 %v4741, %v4742
    %v4744 = vrot.slane %v4743, 1
    %v4745 = vmax.f32 %v4743, %v4744
    %v4746 = vsel %vm4661, %v3039, -inf
    %v4747 = vrot.slane %v4746, 4
    %v4748 = vmax.f32 %v4746, %v4747
    %v4749 = vrot.slane %v4748, 2
    %v4750 = vmax.f32 %v4748, %v4749
    %v4751 = vrot.slane %v4750, 1
    %v4752 = vmax.f32 %v4750, %v4751
    %v4753 = vsel %vm4661, %v3062, -inf
    %v4754 = vrot.slane %v4753, 4
    %v4755 = vmax.f32 %v4753, %v4754
    %v4756 = vrot.slane %v4755, 2
    %v4757 = vmax.f32 %v4755, %v4756
    %v4758 = vrot.slane %v4757, 1
    %v4759 = vmax.f32 %v4757, %v4758
    %v4760 = vsel %vm4661, %v3085, -inf
    %v4761 = vrot.slane %v4760, 4
    %v4762 = vmax.f32 %v4760, %v4761
    %v4763 = vrot.slane %v4762, 2
    %v4764 = vmax.f32 %v4762, %v4763
    %v4765 = vrot.slane %v4764, 1
    %v4766 = vmax.f32 %v4764, %v4765
    %v4767 = vsel %vm4661, %v3108, -inf
    %v4768 = vrot.slane %v4767, 4
    %v4769 = vmax.f32 %v4767, %v4768
    %v4770 = vrot.slane %v4769, 2
    %v4771 = vmax.f32 %v4769, %v4770
    %v4772 = vrot.slane %v4771, 1
    %v4773 = vmax.f32 %v4771, %v4772
    %v4774 = vsel %vm4661, %v3131, -inf
    %v4775 = vrot.slane %v4774, 4
    %v4776 = vmax.f32 %v4774, %v4775
    %v4777 = vrot.slane %v4776, 2
    %v4778 = vmax.f32 %v4776, %v4777
    %v4779 = vrot.slane %v4778, 1
    %v4780 = vmax.f32 %v4778, %v4779
    %v4781 = vsel %vm4661, %v3154, -inf
    %v4782 = vrot.slane %v4781, 4
    %v4783 = vmax.f32 %v4781, %v4782
    %v4784 = vrot.slane %v4783, 2
    %v4785 = vmax.f32 %v4783, %v4784
    %v4786 = vrot.slane %v4785, 1
    %v4787 = vmax.f32 %v4785, %v4786
    %v4788 = vsel %vm4661, %v3177, -inf
    %v4789 = vrot.slane %v4788, 4
    %v4790 = vmax.f32 %v4788, %v4789
    %v4791 = vrot.slane %v4790, 2
    %v4792 = vmax.f32 %v4790, %v4791
    %v4793 = vrot.slane %v4792, 1
    %v4794 = vmax.f32 %v4792, %v4793
    %v4795 = vsel %vm4661, %v3200, -inf
    %v4796 = vrot.slane %v4795, 4
    %v4797 = vmax.f32 %v4795, %v4796
    %v4798 = vrot.slane %v4797, 2
    %v4799 = vmax.f32 %v4797, %v4798
    %v4800 = vrot.slane %v4799, 1
    %v4801 = vmax.f32 %v4799, %v4800
    %v4802 = vsel %vm4661, %v3223, -inf
    %v4803 = vrot.slane %v4802, 4
    %v4804 = vmax.f32 %v4802, %v4803
    %v4805 = vrot.slane %v4804, 2
    %v4806 = vmax.f32 %v4804, %v4805
    %v4807 = vrot.slane %v4806, 1
    %v4808 = vmax.f32 %v4806, %v4807
    %v4809 = vsel %vm4661, %v3246, -inf
    %v4810 = vrot.slane %v4809, 4
    %v4811 = vmax.f32 %v4809, %v4810
    %v4812 = vrot.slane %v4811, 2
    %v4813 = vmax.f32 %v4811, %v4812
    %v4814 = vrot.slane %v4813, 1
    %v4815 = vmax.f32 %v4813, %v4814
    %v4816 = vsel %vm4661, %v3269, -inf
    %v4817 = vrot.slane %v4816, 4
    %v4818 = vmax.f32 %v4816, %v4817
    %v4819 = vrot.slane %v4818, 2
    %v4820 = vmax.f32 %v4818, %v4819
    %v4821 = vrot.slane %v4820, 1
    %v4822 = vmax.f32 %v4820, %v4821
    %v4823 = vsel %vm4661, %v3292, -inf
    %v4824 = vrot.slane %v4823, 4
    %v4825 = vmax.f32 %v4823, %v4824
    %v4826 = vrot.slane %v4825, 2
    %v4827 = vmax.f32 %v4825, %v4826
    %v4828 = vrot.slane %v4827, 1
    %v4829 = vmax.f32 %v4827, %v4828
    %v4830 = vsel %vm4661, %v3315, -inf
    %v4831 = vrot.slane %v4830, 4
    %v4832 = vmax.f32 %v4830, %v4831
    %v4833 = vrot.slane %v4832, 2
    %v4834 = vmax.f32 %v4832, %v4833
    %v4835 = vrot.slane %v4834, 1
    %v4836 = vmax.f32 %v4834, %v4835
    %v4837 = vsel %vm4661, %v3338, -inf
    %v4838 = vrot.slane %v4837, 4
    %v4839 = vmax.f32 %v4837, %v4838
    %v4840 = vrot.slane %v4839, 2
    %v4841 = vmax.f32 %v4839, %v4840
    %v4842 = vrot.slane %v4841, 1
    %v4843 = vmax.f32 %v4841, %v4842
    %v4844 = vsel %vm4661, %v3361, -inf
    %v4845 = vrot.slane %v4844, 4
    %v4846 = vmax.f32 %v4844, %v4845
    %v4847 = vrot.slane %v4846, 2
    %v4848 = vmax.f32 %v4846, %v4847
    %v4849 = vrot.slane %v4848, 1
    %v4850 = vmax.f32 %v4848, %v4849
    %v4851 = vsel %vm4661, %v3384, -inf
    %v4852 = vrot.slane %v4851, 4
    %v4853 = vmax.f32 %v4851, %v4852
    %v4854 = vrot.slane %v4853, 2
    %v4855 = vmax.f32 %v4853, %v4854
    %v4856 = vrot.slane %v4855, 1
    %v4857 = vmax.f32 %v4855, %v4856
    %v4858 = vsel %vm4661, %v3407, -inf
    %v4859 = vrot.slane %v4858, 4
    %v4860 = vmax.f32 %v4858, %v4859
    %v4861 = vrot.slane %v4860, 2
    %v4862 = vmax.f32 %v4860, %v4861
    %v4863 = vrot.slane %v4862, 1
    %v4864 = vmax.f32 %v4862, %v4863
    %v4865 = vsel %vm4661, %v3430, -inf
    %v4866 = vrot.slane %v4865, 4
    %v4867 = vmax.f32 %v4865, %v4866
    %v4868 = vrot.slane %v4867, 2
    %v4869 = vmax.f32 %v4867, %v4868
    %v4870 = vrot.slane %v4869, 1
    %v4871 = vmax.f32 %v4869, %v4870
    %v4872 = vsel %vm4661, %v3453, -inf
    %v4873 = vrot.slane %v4872, 4
    %v4874 = vmax.f32 %v4872, %v4873
    %v4875 = vrot.slane %v4874, 2
    %v4876 = vmax.f32 %v4874, %v4875
    %v4877 = vrot.slane %v4876, 1
    %v4878 = vmax.f32 %v4876, %v4877
    %v4879 = vsel %vm4661, %v3476, -inf
    %v4880 = vrot.slane %v4879, 4
    %v4881 = vmax.f32 %v4879, %v4880
    %v4882 = vrot.slane %v4881, 2
    %v4883 = vmax.f32 %v4881, %v4882
    %v4884 = vrot.slane %v4883, 1
    %v4885 = vmax.f32 %v4883, %v4884
    %v4886 = vsel %vm4661, %v3499, -inf
    %v4887 = vrot.slane %v4886, 4
    %v4888 = vmax.f32 %v4886, %v4887
    %v4889 = vrot.slane %v4888, 2
    %v4890 = vmax.f32 %v4888, %v4889
    %v4891 = vrot.slane %v4890, 1
    %v4892 = vmax.f32 %v4890, %v4891
    %v4893 = vsel %vm4661, %v3522, -inf
    %v4894 = vrot.slane %v4893, 4
    %v4895 = vmax.f32 %v4893, %v4894
    %v4896 = vrot.slane %v4895, 2
    %v4897 = vmax.f32 %v4895, %v4896
    %v4898 = vrot.slane %v4897, 1
    %v4899 = vmax.f32 %v4897, %v4898
    %v4900 = vsel %vm4661, %v3545, -inf
    %v4901 = vrot.slane %v4900, 4
    %v4902 = vmax.f32 %v4900, %v4901
    %v4903 = vrot.slane %v4902, 2
    %v4904 = vmax.f32 %v4902, %v4903
    %v4905 = vrot.slane %v4904, 1
    %v4906 = vmax.f32 %v4904, %v4905
    %v4907 = vsel %vm4661, %v3568, -inf
    %v4908 = vrot.slane %v4907, 4
    %v4909 = vmax.f32 %v4907, %v4908
    %v4910 = vrot.slane %v4909, 2
    %v4911 = vmax.f32 %v4909, %v4910
    %v4912 = vrot.slane %v4911, 1
    %v4913 = vmax.f32 %v4911, %v4912
    %v4914 = vsel %vm4661, %v3591, -inf
    %v4915 = vrot.slane %v4914, 4
    %v4916 = vmax.f32 %v4914, %v4915
    %v4917 = vrot.slane %v4916, 2
    %v4918 = vmax.f32 %v4916, %v4917
    %v4919 = vrot.slane %v4918, 1
    %v4920 = vmax.f32 %v4918, %v4919
    %v4921 = vsel %vm4661, %v3614, -inf
    %v4922 = vrot.slane %v4921, 4
    %v4923 = vmax.f32 %v4921, %v4922
    %v4924 = vrot.slane %v4923, 2
    %v4925 = vmax.f32 %v4923, %v4924
    %v4926 = vrot.slane %v4925, 1
    %v4927 = vmax.f32 %v4925, %v4926
    %v4928 = vsel %vm4661, %v3637, -inf
    %v4929 = vrot.slane %v4928, 4
    %v4930 = vmax.f32 %v4928, %v4929
    %v4931 = vrot.slane %v4930, 2
    %v4932 = vmax.f32 %v4930, %v4931
    %v4933 = vrot.slane %v4932, 1
    %v4934 = vmax.f32 %v4932, %v4933
    %v4935 = vsel %vm4661, %v3660, -inf
    %v4936 = vrot.slane %v4935, 4
    %v4937 = vmax.f32 %v4935, %v4936
    %v4938 = vrot.slane %v4937, 2
    %v4939 = vmax.f32 %v4937, %v4938
    %v4940 = vrot.slane %v4939, 1
    %v4941 = vmax.f32 %v4939, %v4940
    %v4942 = vsel %vm4661, %v3683, -inf
    %v4943 = vrot.slane %v4942, 4
    %v4944 = vmax.f32 %v4942, %v4943
    %v4945 = vrot.slane %v4944, 2
    %v4946 = vmax.f32 %v4944, %v4945
    %v4947 = vrot.slane %v4946, 1
    %v4948 = vmax.f32 %v4946, %v4947
    %v4949 = vsel %vm4661, %v3706, -inf
    %v4950 = vrot.slane %v4949, 4
    %v4951 = vmax.f32 %v4949, %v4950
    %v4952 = vrot.slane %v4951, 2
    %v4953 = vmax.f32 %v4951, %v4952
    %v4954 = vrot.slane %v4953, 1
    %v4955 = vmax.f32 %v4953, %v4954
    %v4956 = vsel %vm4661, %v3729, -inf
    %v4957 = vrot.slane %v4956, 4
    %v4958 = vmax.f32 %v4956, %v4957
    %v4959 = vrot.slane %v4958, 2
    %v4960 = vmax.f32 %v4958, %v4959
    %v4961 = vrot.slane %v4960, 1
    %v4962 = vmax.f32 %v4960, %v4961
    %v4963 = vsel %vm4661, %v3752, -inf
    %v4964 = vrot.slane %v4963, 4
    %v4965 = vmax.f32 %v4963, %v4964
    %v4966 = vrot.slane %v4965, 2
    %v4967 = vmax.f32 %v4965, %v4966
    %v4968 = vrot.slane %v4967, 1
    %v4969 = vmax.f32 %v4967, %v4968
    %v4970 = vsel %vm4661, %v3775, -inf
    %v4971 = vrot.slane %v4970, 4
    %v4972 = vmax.f32 %v4970, %v4971
    %v4973 = vrot.slane %v4972, 2
    %v4974 = vmax.f32 %v4972, %v4973
    %v4975 = vrot.slane %v4974, 1
    %v4976 = vmax.f32 %v4974, %v4975
    %v4977 = vsel %vm4661, %v3798, -inf
    %v4978 = vrot.slane %v4977, 4
    %v4979 = vmax.f32 %v4977, %v4978
    %v4980 = vrot.slane %v4979, 2
    %v4981 = vmax.f32 %v4979, %v4980
    %v4982 = vrot.slane %v4981, 1
    %v4983 = vmax.f32 %v4981, %v4982
    %v4984 = vsel %vm4661, %v3821, -inf
    %v4985 = vrot.slane %v4984, 4
    %v4986 = vmax.f32 %v4984, %v4985
    %v4987 = vrot.slane %v4986, 2
    %v4988 = vmax.f32 %v4986, %v4987
    %v4989 = vrot.slane %v4988, 1
    %v4990 = vmax.f32 %v4988, %v4989
    %v4991 = vsel %vm4661, %v3844, -inf
    %v4992 = vrot.slane %v4991, 4
    %v4993 = vmax.f32 %v4991, %v4992
    %v4994 = vrot.slane %v4993, 2
    %v4995 = vmax.f32 %v4993, %v4994
    %v4996 = vrot.slane %v4995, 1
    %v4997 = vmax.f32 %v4995, %v4996
    %v4998 = vsel %vm4661, %v3867, -inf
    %v4999 = vrot.slane %v4998, 4
    %v5000 = vmax.f32 %v4998, %v4999
    %v5001 = vrot.slane %v5000, 2
    %v5002 = vmax.f32 %v5000, %v5001
    %v5003 = vrot.slane %v5002, 1
    %v5004 = vmax.f32 %v5002, %v5003
    %v5005 = vsel %vm4661, %v3890, -inf
    %v5006 = vrot.slane %v5005, 4
    %v5007 = vmax.f32 %v5005, %v5006
    %v5008 = vrot.slane %v5007, 2
    %v5009 = vmax.f32 %v5007, %v5008
    %v5010 = vrot.slane %v5009, 1
    %v5011 = vmax.f32 %v5009, %v5010
    %v5012 = vsel %vm4661, %v3913, -inf
    %v5013 = vrot.slane %v5012, 4
    %v5014 = vmax.f32 %v5012, %v5013
    %v5015 = vrot.slane %v5014, 2
    %v5016 = vmax.f32 %v5014, %v5015
    %v5017 = vrot.slane %v5016, 1
    %v5018 = vmax.f32 %v5016, %v5017
    %v5019 = vsel %vm4661, %v3936, -inf
    %v5020 = vrot.slane %v5019, 4
    %v5021 = vmax.f32 %v5019, %v5020
    %v5022 = vrot.slane %v5021, 2
    %v5023 = vmax.f32 %v5021, %v5022
    %v5024 = vrot.slane %v5023, 1
    %v5025 = vmax.f32 %v5023, %v5024
    %v5026 = vsel %vm4661, %v3959, -inf
    %v5027 = vrot.slane %v5026, 4
    %v5028 = vmax.f32 %v5026, %v5027
    %v5029 = vrot.slane %v5028, 2
    %v5030 = vmax.f32 %v5028, %v5029
    %v5031 = vrot.slane %v5030, 1
    %v5032 = vmax.f32 %v5030, %v5031
    %v5033 = vsel %vm4661, %v3982, -inf
    %v5034 = vrot.slane %v5033, 4
    %v5035 = vmax.f32 %v5033, %v5034
    %v5036 = vrot.slane %v5035, 2
    %v5037 = vmax.f32 %v5035, %v5036
    %v5038 = vrot.slane %v5037, 1
    %v5039 = vmax.f32 %v5037, %v5038
    %v5040 = vsel %vm4661, %v4005, -inf
    %v5041 = vrot.slane %v5040, 4
    %v5042 = vmax.f32 %v5040, %v5041
    %v5043 = vrot.slane %v5042, 2
    %v5044 = vmax.f32 %v5042, %v5043
    %v5045 = vrot.slane %v5044, 1
    %v5046 = vmax.f32 %v5044, %v5045
    %v5047 = vsel %vm4661, %v4028, -inf
    %v5048 = vrot.slane %v5047, 4
    %v5049 = vmax.f32 %v5047, %v5048
    %v5050 = vrot.slane %v5049, 2
    %v5051 = vmax.f32 %v5049, %v5050
    %v5052 = vrot.slane %v5051, 1
    %v5053 = vmax.f32 %v5051, %v5052
    %v5054 = vsel %vm4661, %v4051, -inf
    %v5055 = vrot.slane %v5054, 4
    %v5056 = vmax.f32 %v5054, %v5055
    %v5057 = vrot.slane %v5056, 2
    %v5058 = vmax.f32 %v5056, %v5057
    %v5059 = vrot.slane %v5058, 1
    %v5060 = vmax.f32 %v5058, %v5059
    %v5061 = vsel %vm4661, %v4074, -inf
    %v5062 = vrot.slane %v5061, 4
    %v5063 = vmax.f32 %v5061, %v5062
    %v5064 = vrot.slane %v5063, 2
    %v5065 = vmax.f32 %v5063, %v5064
    %v5066 = vrot.slane %v5065, 1
    %v5067 = vmax.f32 %v5065, %v5066
    %v5068 = vsel %vm4661, %v4097, -inf
    %v5069 = vrot.slane %v5068, 4
    %v5070 = vmax.f32 %v5068, %v5069
    %v5071 = vrot.slane %v5070, 2
    %v5072 = vmax.f32 %v5070, %v5071
    %v5073 = vrot.slane %v5072, 1
    %v5074 = vmax.f32 %v5072, %v5073
    %v5075 = vsel %vm4661, %v4120, -inf
    %v5076 = vrot.slane %v5075, 4
    %v5077 = vmax.f32 %v5075, %v5076
    %v5078 = vrot.slane %v5077, 2
    %v5079 = vmax.f32 %v5077, %v5078
    %v5080 = vrot.slane %v5079, 1
    %v5081 = vmax.f32 %v5079, %v5080
    %v5082 = vsel %vm4661, %v4143, -inf
    %v5083 = vrot.slane %v5082, 4
    %v5084 = vmax.f32 %v5082, %v5083
    %v5085 = vrot.slane %v5084, 2
    %v5086 = vmax.f32 %v5084, %v5085
    %v5087 = vrot.slane %v5086, 1
    %v5088 = vmax.f32 %v5086, %v5087
    %v5089 = vsel %vm4661, %v4166, -inf
    %v5090 = vrot.slane %v5089, 4
    %v5091 = vmax.f32 %v5089, %v5090
    %v5092 = vrot.slane %v5091, 2
    %v5093 = vmax.f32 %v5091, %v5092
    %v5094 = vrot.slane %v5093, 1
    %v5095 = vmax.f32 %v5093, %v5094
    %v5096 = vsel %vm4661, %v4189, -inf
    %v5097 = vrot.slane %v5096, 4
    %v5098 = vmax.f32 %v5096, %v5097
    %v5099 = vrot.slane %v5098, 2
    %v5100 = vmax.f32 %v5098, %v5099
    %v5101 = vrot.slane %v5100, 1
    %v5102 = vmax.f32 %v5100, %v5101
    %v5103 = vsel %vm4661, %v4212, -inf
    %v5104 = vrot.slane %v5103, 4
    %v5105 = vmax.f32 %v5103, %v5104
    %v5106 = vrot.slane %v5105, 2
    %v5107 = vmax.f32 %v5105, %v5106
    %v5108 = vrot.slane %v5107, 1
    %v5109 = vmax.f32 %v5107, %v5108
    %v5110 = vsel %vm4661, %v4235, -inf
    %v5111 = vrot.slane %v5110, 4
    %v5112 = vmax.f32 %v5110, %v5111
    %v5113 = vrot.slane %v5112, 2
    %v5114 = vmax.f32 %v5112, %v5113
    %v5115 = vrot.slane %v5114, 1
    %v5116 = vmax.f32 %v5114, %v5115
    %v5117 = vsel %vm4661, %v4258, -inf
    %v5118 = vrot.slane %v5117, 4
    %v5119 = vmax.f32 %v5117, %v5118
    %v5120 = vrot.slane %v5119, 2
    %v5121 = vmax.f32 %v5119, %v5120
    %v5122 = vrot.slane %v5121, 1
    %v5123 = vmax.f32 %v5121, %v5122
    %v5124 = vsel %vm4661, %v4281, -inf
    %v5125 = vrot.slane %v5124, 4
    %v5126 = vmax.f32 %v5124, %v5125
    %v5127 = vrot.slane %v5126, 2
    %v5128 = vmax.f32 %v5126, %v5127
    %v5129 = vrot.slane %v5128, 1
    %v5130 = vmax.f32 %v5128, %v5129
    %v5131 = vsel %vm4661, %v4304, -inf
    %v5132 = vrot.slane %v5131, 4
    %v5133 = vmax.f32 %v5131, %v5132
    %v5134 = vrot.slane %v5133, 2
    %v5135 = vmax.f32 %v5133, %v5134
    %v5136 = vrot.slane %v5135, 1
    %v5137 = vmax.f32 %v5135, %v5136
    %v5138 = vsel %vm4661, %v4327, -inf
    %v5139 = vrot.slane %v5138, 4
    %v5140 = vmax.f32 %v5138, %v5139
    %v5141 = vrot.slane %v5140, 2
    %v5142 = vmax.f32 %v5140, %v5141
    %v5143 = vrot.slane %v5142, 1
    %v5144 = vmax.f32 %v5142, %v5143
    %v5145 = vsel %vm4661, %v4350, -inf
    %v5146 = vrot.slane %v5145, 4
    %v5147 = vmax.f32 %v5145, %v5146
    %v5148 = vrot.slane %v5147, 2
    %v5149 = vmax.f32 %v5147, %v5148
    %v5150 = vrot.slane %v5149, 1
    %v5151 = vmax.f32 %v5149, %v5150
    %v5152 = vsel %vm4661, %v4373, -inf
    %v5153 = vrot.slane %v5152, 4
    %v5154 = vmax.f32 %v5152, %v5153
    %v5155 = vrot.slane %v5154, 2
    %v5156 = vmax.f32 %v5154, %v5155
    %v5157 = vrot.slane %v5156, 1
    %v5158 = vmax.f32 %v5156, %v5157
    %v5159 = vsel %vm4661, %v4396, -inf
    %v5160 = vrot.slane %v5159, 4
    %v5161 = vmax.f32 %v5159, %v5160
    %v5162 = vrot.slane %v5161, 2
    %v5163 = vmax.f32 %v5161, %v5162
    %v5164 = vrot.slane %v5163, 1
    %v5165 = vmax.f32 %v5163, %v5164
    %v5166 = vsel %vm4661, %v4419, -inf
    %v5167 = vrot.slane %v5166, 4
    %v5168 = vmax.f32 %v5166, %v5167
    %v5169 = vrot.slane %v5168, 2
    %v5170 = vmax.f32 %v5168, %v5169
    %v5171 = vrot.slane %v5170, 1
    %v5172 = vmax.f32 %v5170, %v5171
    %v5173 = vsel %vm4661, %v4442, -inf
    %v5174 = vrot.slane %v5173, 4
    %v5175 = vmax.f32 %v5173, %v5174
    %v5176 = vrot.slane %v5175, 2
    %v5177 = vmax.f32 %v5175, %v5176
    %v5178 = vrot.slane %v5177, 1
    %v5179 = vmax.f32 %v5177, %v5178
    %v5180 = vsel %vm4661, %v4465, -inf
    %v5181 = vrot.slane %v5180, 4
    %v5182 = vmax.f32 %v5180, %v5181
    %v5183 = vrot.slane %v5182, 2
    %v5184 = vmax.f32 %v5182, %v5183
    %v5185 = vrot.slane %v5184, 1
    %v5186 = vmax.f32 %v5184, %v5185
    %v5187 = vsel %vm4661, %v4488, -inf
    %v5188 = vrot.slane %v5187, 4
    %v5189 = vmax.f32 %v5187, %v5188
    %v5190 = vrot.slane %v5189, 2
    %v5191 = vmax.f32 %v5189, %v5190
    %v5192 = vrot.slane %v5191, 1
    %v5193 = vmax.f32 %v5191, %v5192
    %v5194 = vsel %vm4661, %v4511, -inf
    %v5195 = vrot.slane %v5194, 4
    %v5196 = vmax.f32 %v5194, %v5195
    %v5197 = vrot.slane %v5196, 2
    %v5198 = vmax.f32 %v5196, %v5197
    %v5199 = vrot.slane %v5198, 1
    %v5200 = vmax.f32 %v5198, %v5199
    %v5201 = vsel %vm4661, %v4534, -inf
    %v5202 = vrot.slane %v5201, 4
    %v5203 = vmax.f32 %v5201, %v5202
    %v5204 = vrot.slane %v5203, 2
    %v5205 = vmax.f32 %v5203, %v5204
    %v5206 = vrot.slane %v5205, 1
    %v5207 = vmax.f32 %v5205, %v5206
    %v5208 = vsel %vm4661, %v4557, -inf
    %v5209 = vrot.slane %v5208, 4
    %v5210 = vmax.f32 %v5208, %v5209
    %v5211 = vrot.slane %v5210, 2
    %v5212 = vmax.f32 %v5210, %v5211
    %v5213 = vrot.slane %v5212, 1
    %v5214 = vmax.f32 %v5212, %v5213
    %v5215 = vsel %vm4661, %v4580, -inf
    %v5216 = vrot.slane %v5215, 4
    %v5217 = vmax.f32 %v5215, %v5216
    %v5218 = vrot.slane %v5217, 2
    %v5219 = vmax.f32 %v5217, %v5218
    %v5220 = vrot.slane %v5219, 1
    %v5221 = vmax.f32 %v5219, %v5220
    %v5222 = vpack.c.bf16 %v4668, %v4668
    %v5223 = vpack.c.bf16 %v4675, %v4675
    %v5224 = vpack.c.bf16 %v4682, %v4682
    %v5225 = vpack.c.bf16 %v4689, %v4689
    %v5226 = vpack.c.bf16 %v4696, %v4696
    %v5227 = vpack.c.bf16 %v4703, %v4703
    %v5228 = vpack.c.bf16 %v4710, %v4710
    %v5229 = vpack.c.bf16 %v4717, %v4717
    %v5230 = vpack.c.bf16 %v4724, %v4724
    %v5231 = vpack.c.bf16 %v4731, %v4731
    %v5232 = vpack.c.bf16 %v4738, %v4738
    %v5233 = vpack.c.bf16 %v4745, %v4745
    %v5234 = vpack.c.bf16 %v4752, %v4752
    %v5235 = vpack.c.bf16 %v4759, %v4759
    %v5236 = vpack.c.bf16 %v4766, %v4766
    %v5237 = vpack.c.bf16 %v4773, %v4773
    %v5238 = vpack.c.bf16 %v4780, %v4780
    %v5239 = vpack.c.bf16 %v4787, %v4787
    %v5240 = vpack.c.bf16 %v4794, %v4794
    %v5241 = vpack.c.bf16 %v4801, %v4801
    %v5242 = vpack.c.bf16 %v4808, %v4808
    %v5243 = vpack.c.bf16 %v4815, %v4815
    %v5244 = vpack.c.bf16 %v4822, %v4822
    %v5245 = vpack.c.bf16 %v4829, %v4829
    %v5246 = vpack.c.bf16 %v4836, %v4836
    %v5247 = vpack.c.bf16 %v4843, %v4843
    %v5248 = vpack.c.bf16 %v4850, %v4850
    %v5249 = vpack.c.bf16 %v4857, %v4857
    %v5250 = vpack.c.bf16 %v4864, %v4864
    %v5251 = vpack.c.bf16 %v4871, %v4871
    %v5252 = vpack.c.bf16 %v4878, %v4878
    %v5253 = vpack.c.bf16 %v4885, %v4885
    %v5254 = vpack.c.bf16 %v4892, %v4892
    %v5255 = vpack.c.bf16 %v4899, %v4899
    %v5256 = vpack.c.bf16 %v4906, %v4906
    %v5257 = vpack.c.bf16 %v4913, %v4913
    %v5258 = vpack.c.bf16 %v4920, %v4920
    %v5259 = vpack.c.bf16 %v4927, %v4927
    %v5260 = vpack.c.bf16 %v4934, %v4934
    %v5261 = vpack.c.bf16 %v4941, %v4941
    %v5262 = vpack.c.bf16 %v4948, %v4948
    %v5263 = vpack.c.bf16 %v4955, %v4955
    %v5264 = vpack.c.bf16 %v4962, %v4962
    %v5265 = vpack.c.bf16 %v4969, %v4969
    %v5266 = vpack.c.bf16 %v4976, %v4976
    %v5267 = vpack.c.bf16 %v4983, %v4983
    %v5268 = vpack.c.bf16 %v4990, %v4990
    %v5269 = vpack.c.bf16 %v4997, %v4997
    %v5270 = vpack.c.bf16 %v5004, %v5004
    %v5271 = vpack.c.bf16 %v5011, %v5011
    %v5272 = vpack.c.bf16 %v5018, %v5018
    %v5273 = vpack.c.bf16 %v5025, %v5025
    %v5274 = vpack.c.bf16 %v5032, %v5032
    %v5275 = vpack.c.bf16 %v5039, %v5039
    %v5276 = vpack.c.bf16 %v5046, %v5046
    %v5277 = vpack.c.bf16 %v5053, %v5053
    %v5278 = vpack.c.bf16 %v5060, %v5060
    %v5279 = vpack.c.bf16 %v5067, %v5067
    %v5280 = vpack.c.bf16 %v5074, %v5074
    %v5281 = vpack.c.bf16 %v5081, %v5081
    %v5282 = vpack.c.bf16 %v5088, %v5088
    %v5283 = vpack.c.bf16 %v5095, %v5095
    %v5284 = vpack.c.bf16 %v5102, %v5102
    %v5285 = vpack.c.bf16 %v5109, %v5109
    %v5286 = vpack.c.bf16 %v5116, %v5116
    %v5287 = vpack.c.bf16 %v5123, %v5123
    %v5288 = vpack.c.bf16 %v5130, %v5130
    %v5289 = vpack.c.bf16 %v5137, %v5137
    %v5290 = vpack.c.bf16 %v5144, %v5144
    %v5291 = vpack.c.bf16 %v5151, %v5151
    %v5292 = vpack.c.bf16 %v5158, %v5158
    %v5293 = vpack.c.bf16 %v5165, %v5165
    %v5294 = vpack.c.bf16 %v5172, %v5172
    %v5295 = vpack.c.bf16 %v5179, %v5179
    %v5296 = vpack.c.bf16 %v5186, %v5186
    %v5297 = vpack.c.bf16 %v5193, %v5193
    %v5298 = vpack.c.bf16 %v5200, %v5200
    %v5299 = vpack.c.bf16 %v5207, %v5207
    %v5300 = vpack.c.bf16 %v5214, %v5214
    %v5301 = vpack.c.bf16 %v5221, %v5221
    %v5382 = vunpack.c.l.b16 %v5222
    %v5383 = vunpack.c.l.b16 %v5223
    %v5384 = vunpack.c.l.b16 %v5224
    %v5385 = vunpack.c.l.b16 %v5225
    %v5386 = vunpack.c.l.b16 %v5226
    %v5387 = vunpack.c.l.b16 %v5227
    %v5388 = vunpack.c.l.b16 %v5228
    %v5389 = vunpack.c.l.b16 %v5229
    %v5390 = vunpack.c.l.b16 %v5230
    %v5391 = vunpack.c.l.b16 %v5231
    %v5392 = vunpack.c.l.b16 %v5232
    %v5393 = vunpack.c.l.b16 %v5233
    %v5394 = vunpack.c.l.b16 %v5234
    %v5395 = vunpack.c.l.b16 %v5235
    %v5396 = vunpack.c.l.b16 %v5236
    %v5397 = vunpack.c.l.b16 %v5237
    %v5398 = vunpack.c.l.b16 %v5238
    %v5399 = vunpack.c.l.b16 %v5239
    %v5400 = vunpack.c.l.b16 %v5240
    %v5401 = vunpack.c.l.b16 %v5241
    %v5402 = vunpack.c.l.b16 %v5242
    %v5403 = vunpack.c.l.b16 %v5243
    %v5404 = vunpack.c.l.b16 %v5244
    %v5405 = vunpack.c.l.b16 %v5245
    %v5406 = vunpack.c.l.b16 %v5246
    %v5407 = vunpack.c.l.b16 %v5247
    %v5408 = vunpack.c.l.b16 %v5248
    %v5409 = vunpack.c.l.b16 %v5249
    %v5410 = vunpack.c.l.b16 %v5250
    %v5411 = vunpack.c.l.b16 %v5251
    %v5412 = vunpack.c.l.b16 %v5252
    %v5413 = vunpack.c.l.b16 %v5253
    %v5414 = vunpack.c.l.b16 %v5254
    %v5415 = vunpack.c.l.b16 %v5255
    %v5416 = vunpack.c.l.b16 %v5256
    %v5417 = vunpack.c.l.b16 %v5257
    %v5418 = vunpack.c.l.b16 %v5258
    %v5419 = vunpack.c.l.b16 %v5259
    %v5420 = vunpack.c.l.b16 %v5260
    %v5421 = vunpack.c.l.b16 %v5261
    %v5422 = vunpack.c.l.b16 %v5262
    %v5423 = vunpack.c.l.b16 %v5263
    %v5424 = vunpack.c.l.b16 %v5264
    %v5425 = vunpack.c.l.b16 %v5265
    %v5426 = vunpack.c.l.b16 %v5266
    %v5427 = vunpack.c.l.b16 %v5267
    %v5428 = vunpack.c.l.b16 %v5268
    %v5429 = vunpack.c.l.b16 %v5269
    %v5430 = vunpack.c.l.b16 %v5270
    %v5431 = vunpack.c.l.b16 %v5271
    %v5432 = vunpack.c.l.b16 %v5272
    %v5433 = vunpack.c.l.b16 %v5273
    %v5434 = vunpack.c.l.b16 %v5274
    %v5435 = vunpack.c.l.b16 %v5275
    %v5436 = vunpack.c.l.b16 %v5276
    %v5437 = vunpack.c.l.b16 %v5277
    %v5438 = vunpack.c.l.b16 %v5278
    %v5439 = vunpack.c.l.b16 %v5279
    %v5440 = vunpack.c.l.b16 %v5280
    %v5441 = vunpack.c.l.b16 %v5281
    %v5442 = vunpack.c.l.b16 %v5282
    %v5443 = vunpack.c.l.b16 %v5283
    %v5444 = vunpack.c.l.b16 %v5284
    %v5445 = vunpack.c.l.b16 %v5285
    %v5446 = vunpack.c.l.b16 %v5286
    %v5447 = vunpack.c.l.b16 %v5287
    %v5448 = vunpack.c.l.b16 %v5288
    %v5449 = vunpack.c.l.b16 %v5289
    %v5450 = vunpack.c.l.b16 %v5290
    %v5451 = vunpack.c.l.b16 %v5291
    %v5452 = vunpack.c.l.b16 %v5292
    %v5453 = vunpack.c.l.b16 %v5293
    %v5454 = vunpack.c.l.b16 %v5294
    %v5455 = vunpack.c.l.b16 %v5295
    %v5456 = vunpack.c.l.b16 %v5296
    %v5457 = vunpack.c.l.b16 %v5297
    %v5458 = vunpack.c.l.b16 %v5298
    %v5459 = vunpack.c.l.b16 %v5299
    %v5460 = vunpack.c.l.b16 %v5300
    %v5461 = vunpack.c.l.b16 %v5301
    %vm5462 = vcmask 1041409
    %v5463 = vsel %vm5462, %v5383, %v5382
    %vm5464 = vcmask 1042434
    %v5465 = vsel %vm5464, %v5384, %v5463
    %vm5466 = vcmask 1043459
    %v5467 = vsel %vm5466, %v5385, %v5465
    %vm5468 = vcmask 1044484
    %v5469 = vsel %vm5468, %v5386, %v5467
    %vm5470 = vcmask 1045509
    %v5471 = vsel %vm5470, %v5387, %v5469
    %vm5472 = vcmask 1046534
    %v5473 = vsel %vm5472, %v5388, %v5471
    %vm5474 = vcmask 1047559
    %v5475 = vsel %vm5474, %v5389, %v5473
    %v5476 = vsel %vm5462, %v5391, %v5390
    %v5477 = vsel %vm5464, %v5392, %v5476
    %v5478 = vsel %vm5466, %v5393, %v5477
    %v5479 = vsel %vm5468, %v5394, %v5478
    %v5480 = vsel %vm5470, %v5395, %v5479
    %v5481 = vsel %vm5472, %v5396, %v5480
    %v5482 = vsel %vm5474, %v5397, %v5481
    %v5483 = vsel %vm5462, %v5399, %v5398
    %v5484 = vsel %vm5464, %v5400, %v5483
    %v5485 = vsel %vm5466, %v5401, %v5484
    %v5486 = vsel %vm5468, %v5402, %v5485
    %v5487 = vsel %vm5470, %v5403, %v5486
    %v5488 = vsel %vm5472, %v5404, %v5487
    %v5489 = vsel %vm5474, %v5405, %v5488
    %v5490 = vsel %vm5462, %v5407, %v5406
    %v5491 = vsel %vm5464, %v5408, %v5490
    %v5492 = vsel %vm5466, %v5409, %v5491
    %v5493 = vsel %vm5468, %v5410, %v5492
    %v5494 = vsel %vm5470, %v5411, %v5493
    %v5495 = vsel %vm5472, %v5412, %v5494
    %v5496 = vsel %vm5474, %v5413, %v5495
    %v5497 = vsel %vm5462, %v5415, %v5414
    %v5498 = vsel %vm5464, %v5416, %v5497
    %v5499 = vsel %vm5466, %v5417, %v5498
    %v5500 = vsel %vm5468, %v5418, %v5499
    %v5501 = vsel %vm5470, %v5419, %v5500
    %v5502 = vsel %vm5472, %v5420, %v5501
    %v5503 = vsel %vm5474, %v5421, %v5502
    %v5504 = vsel %vm5462, %v5423, %v5422
    %v5505 = vsel %vm5464, %v5424, %v5504
    %v5506 = vsel %vm5466, %v5425, %v5505
    %v5507 = vsel %vm5468, %v5426, %v5506
    %v5508 = vsel %vm5470, %v5427, %v5507
    %v5509 = vsel %vm5472, %v5428, %v5508
    %v5510 = vsel %vm5474, %v5429, %v5509
    %v5511 = vsel %vm5462, %v5431, %v5430
    %v5512 = vsel %vm5464, %v5432, %v5511
    %v5513 = vsel %vm5466, %v5433, %v5512
    %v5514 = vsel %vm5468, %v5434, %v5513
    %v5515 = vsel %vm5470, %v5435, %v5514
    %v5516 = vsel %vm5472, %v5436, %v5515
    %v5517 = vsel %vm5474, %v5437, %v5516
    %v5518 = vsel %vm5462, %v5439, %v5438
    %v5519 = vsel %vm5464, %v5440, %v5518
    %v5520 = vsel %vm5466, %v5441, %v5519
    %v5521 = vsel %vm5468, %v5442, %v5520
    %v5522 = vsel %vm5470, %v5443, %v5521
    %v5523 = vsel %vm5472, %v5444, %v5522
    %v5524 = vsel %vm5474, %v5445, %v5523
    %v5525 = vsel %vm5462, %v5447, %v5446
    %v5526 = vsel %vm5464, %v5448, %v5525
    %v5527 = vsel %vm5466, %v5449, %v5526
    %v5528 = vsel %vm5468, %v5450, %v5527
    %v5529 = vsel %vm5470, %v5451, %v5528
    %v5530 = vsel %vm5472, %v5452, %v5529
    %v5531 = vsel %vm5474, %v5453, %v5530
    %v5532 = vsel %vm5462, %v5455, %v5454
    %v5533 = vsel %vm5464, %v5456, %v5532
    %v5534 = vsel %vm5466, %v5457, %v5533
    %v5535 = vsel %vm5468, %v5458, %v5534
    %v5536 = vsel %vm5470, %v5459, %v5535
    %v5537 = vsel %vm5472, %v5460, %v5536
    %v5538 = vsel %vm5474, %v5461, %v5537
    %v5539 = vpack.c.b16 %v5482, %v5475
    %v5540 = vpack.c.b16 %v5496, %v5489
    %v5541 = vpack.c.b16 %v5510, %v5503
    %v5542 = vpack.c.b16 %v5524, %v5517
    %v5543 = vpack.c.b16 %v5538, %v5531
    %v5544 = vld [vmem:[%s3] sm:$0xf]
    %v5545 = vld [vmem:[%s3 + $0x4] sm:$0xf]
    %v5546 = vld [vmem:[%s3 + $0x8] sm:$0xf]
    %v5547 = vld [vmem:[%s3 + $0xc] sm:$0xf]
    %v5548 = vld [vmem:[%s3 + $0x10] sm:$0xf]
    %v5549 = vld [vmem:[%s3 + $0x14] sm:$0xf]
    %v5550 = vld [vmem:[%s3 + $0x18] sm:$0xf]
    %v5551 = vld [vmem:[%s3 + $0x1c] sm:$0xf]
    %v5552 = vld [vmem:[%s3 + $0x20] sm:$0xf]
    %v5553 = vld [vmem:[%s3 + $0x24] sm:$0xf]
    %v5554 = vld [vmem:[%s3 + $0x28] sm:$0xf]
    %v5555 = vld [vmem:[%s3 + $0x2c] sm:$0xf]
    %v5556 = vld [vmem:[%s3 + $0x30] sm:$0xf]
    %v5557 = vld [vmem:[%s3 + $0x34] sm:$0xf]
    %v5558 = vld [vmem:[%s3 + $0x38] sm:$0xf]
    %v5559 = vld [vmem:[%s3 + $0x3c] sm:$0xf]
    %s5560 = scalar_lea.vmem %s3, 64
    %v5561 = vld [vmem:[%s5560] sm:$0xf]
    %v5562 = vld [vmem:[%s5560 + $0x4] sm:$0xf]
    %v5563 = vld [vmem:[%s5560 + $0x8] sm:$0xf]
    %v5564 = vld [vmem:[%s5560 + $0xc] sm:$0xf]
    %v5565 = vld [vmem:[%s5560 + $0x10] sm:$0xf]
    %v5566 = vld [vmem:[%s5560 + $0x14] sm:$0xf]
    %v5567 = vld [vmem:[%s5560 + $0x18] sm:$0xf]
    %v5568 = vld [vmem:[%s5560 + $0x1c] sm:$0xf]
    %v5569 = vld [vmem:[%s5560 + $0x20] sm:$0xf]
    %v5570 = vld [vmem:[%s5560 + $0x24] sm:$0xf]
    %v5571 = vld [vmem:[%s5560 + $0x28] sm:$0xf]
    %v5572 = vld [vmem:[%s5560 + $0x2c] sm:$0xf]
    %v5573 = vld [vmem:[%s5560 + $0x30] sm:$0xf]
    %v5574 = vld [vmem:[%s5560 + $0x34] sm:$0xf]
    %v5575 = vld [vmem:[%s5560 + $0x38] sm:$0xf]
    %v5576 = vld [vmem:[%s5560 + $0x3c] sm:$0xf]
    %v5578 = vshrl.u32 %v5539, 16
    %v5580 = vshll.u32 %v5539, 16
    %v5582 = vrot.slane %v5580, 1
    %v5583 = vor.u32 %v5578, %v5582
    %v5585 = vshll.u32 %v5540, 16
    %v5587 = vrot.slane %v5585, 1
    %v5588 = vsel %vm194, %v5583, %v5587
    %v5589 = vshrl.u32 %v5540, 16
    %v5591 = vor.u32 %v5589, %v5587
    %v5593 = vshll.u32 %v5541, 16
    %v5595 = vrot.slane %v5593, 1
    %v5596 = vsel %vm194, %v5591, %v5595
    %v5597 = vshrl.u32 %v5541, 16
    %v5599 = vor.u32 %v5597, %v5595
    %v5601 = vshll.u32 %v5542, 16
    %v5603 = vrot.slane %v5601, 1
    %v5604 = vsel %vm194, %v5599, %v5603
    %v5605 = vshrl.u32 %v5542, 16
    %v5607 = vor.u32 %v5605, %v5603
    %v5609 = vshll.u32 %v5543, 16
    %v5611 = vrot.slane %v5609, 1
    %v5612 = vsel %vm194, %v5607, %v5611
    %v5613 = vshrl.u32 %v5543, 16
    %v5615 = vor.u32 %v5613, %v5611
    %v5616 = vsel %vm194, %v5615, %v325
    %v5638 = vunpack.c.l.b16 %v5561
    %v5639 = vunpack.c.l.b16 %v5562
    %v5640 = vunpack.c.l.b16 %v5563
    %v5641 = vunpack.c.l.b16 %v5564
    %v5642 = vunpack.c.l.b16 %v5565
    %v5643 = vunpack.c.l.b16 %v5566
    %v5644 = vunpack.c.l.b16 %v5567
    %v5645 = vunpack.c.l.b16 %v5568
    %v5646 = vunpack.c.l.b16 %v5569
    %v5647 = vunpack.c.l.b16 %v5570
    %v5648 = vunpack.c.l.b16 %v5571
    %v5649 = vunpack.c.l.b16 %v5572
    %v5650 = vunpack.c.l.b16 %v5573
    %v5651 = vunpack.c.l.b16 %v5574
    %v5652 = vunpack.c.l.b16 %v5575
    %v5653 = vunpack.c.l.b16 %v5576
    %v5654 = vpack.c.b16 %v5639, %v5638
    %v5655 = vpack.c.b16 %v5641, %v5640
    %v5656 = vpack.c.b16 %v5643, %v5642
    %v5657 = vpack.c.b16 %v5645, %v5644
    %v5658 = vpack.c.b16 %v5647, %v5646
    %v5659 = vpack.c.b16 %v5649, %v5648
    %v5660 = vpack.c.b16 %v5651, %v5650
    %v5661 = vpack.c.b16 %v5653, %v5652
    %5670 = vmatprep.subr.bf16.mxu0 0
    %5671 = vmatpush1.bf16.msra.mxu0 %v5661
    %5672 = vmatprep.subr.bf16.mxu0 0
    %5673 = vmatpush1.bf16.msra.mxu0 %v5660
    %5674 = vmatprep.subr.bf16.mxu0 0
    %5675 = vmatpush1.bf16.msra.mxu0 %v5659
    %5676 = vmatprep.subr.bf16.mxu0 0
    %5677 = vmatpush1.bf16.msra.mxu0 %v5658
    %5678 = vmatprep.subr.bf16.mxu0 0
    %5679 = vmatpush1.bf16.msra.mxu0 %v5657
    %5680 = vmatprep.subr.bf16.mxu0 0
    %5681 = vmatpush1.bf16.msra.mxu0 %v5656
    %5682 = vmatprep.subr.bf16.mxu0 0
    %5683 = vmatpush1.bf16.msra.mxu0 %v5655
    %5684 = vmatprep.subr.bf16.mxu0 0
    %5685 = vmatpush1.bf16.msra.mxu0 %v5654
    %5686 = vmatprep.subr.bf16.mxu0 0
    %5687 = vmatpush2.bf16.msra.mxu0 0
    %5688 = vmatprep.subr.bf16.mxu0 0
    %5689 = vmatpush2.bf16.msra.mxu0 0
    %5690 = vmatprep.subr.bf16.mxu0 0
    %5691 = vmatpush2.bf16.msra.mxu0 0
    %5692 = vmatprep.subr.bf16.mxu0 0
    %5693 = vmatpush2.bf16.msra.mxu0 0
    %5694 = vmatprep.subr.bf16.mxu0 0
    %5695 = vmatpush2.bf16.msra.mxu0 0
    %5696 = vmatprep.subr.bf16.mxu0 0
    %5697 = vmatpush2.bf16.msra.mxu0 0
    %5698 = vmatprep.subr.bf16.mxu0 0
    %5699 = vmatpush2.bf16.msra.mxu0 0
    %5700 = vmatprep.subr.bf16.mxu0 0
    %5701 = vmatpush2.bf16.msra.mxu0 0
    %5702 = vmatprep.mubr.bf16.mxu0 0
    %5703 = vmatmul.mubr.bf16.gmra.mxu0 %v5588
    %v5704 = vpop.f32.mrf.mxu0
    %v5705 = vadd.f32 0.0, %v5704
    %v5706 = vpop.f32.mrf.mxu0
    %v5707 = vpop.f32.mrf.mxu0
    %v5708 = vadd.f32 0.0, %v5707
    %v5709 = vpop.f32.mrf.mxu0
    %5710 = vmatprep.mubr.bf16.mxu0 0
    %5711 = vmatmul.mubr.bf16.gmra.mxu0 %v5596
    %v5712 = vpop.f32.mrf.mxu0
    %v5713 = vadd.f32 0.0, %v5712
    %v5714 = vpop.f32.mrf.mxu0
    %v5715 = vpop.f32.mrf.mxu0
    %v5716 = vadd.f32 0.0, %v5715
    %v5717 = vpop.f32.mrf.mxu0
    %5718 = vmatprep.mubr.bf16.mxu0 0
    %5719 = vmatmul.mubr.bf16.gmra.mxu0 %v5604
    %v5720 = vpop.f32.mrf.mxu0
    %v5721 = vadd.f32 0.0, %v5720
    %v5722 = vpop.f32.mrf.mxu0
    %v5723 = vpop.f32.mrf.mxu0
    %v5724 = vadd.f32 0.0, %v5723
    %v5725 = vpop.f32.mrf.mxu0
    %5726 = vmatprep.mubr.bf16.mxu0 0
    %5727 = vmatmul.mubr.bf16.gmra.mxu0 %v5612
    %v5728 = vpop.f32.mrf.mxu0
    %v5729 = vadd.f32 0.0, %v5728
    %v5730 = vpop.f32.mrf.mxu0
    %v5731 = vpop.f32.mrf.mxu0
    %v5732 = vadd.f32 0.0, %v5731
    %v5733 = vpop.f32.mrf.mxu0
    %5734 = vmatprep.mubr.bf16.mxu0 0
    %5735 = vmatmul.mubr.bf16.gmra.mxu0 %v5616
    %v5736 = vpop.f32.mrf.mxu0
    %v5737 = vadd.f32 0.0, %v5736
    %v5738 = vpop.f32.mrf.mxu0
    %v5739 = vpop.f32.mrf.mxu0
    %v5740 = vadd.f32 0.0, %v5739
    %v5741 = vpop.f32.mrf.mxu0
    %5742 = vdwg.mxu0
    %v5764 = vunpack.c.l.b16 %v5544
    %v5765 = vunpack.c.l.b16 %v5545
    %v5766 = vunpack.c.l.b16 %v5546
    %v5767 = vunpack.c.l.b16 %v5547
    %v5768 = vunpack.c.l.b16 %v5548
    %v5769 = vunpack.c.l.b16 %v5549
    %v5770 = vunpack.c.l.b16 %v5550
    %v5771 = vunpack.c.l.b16 %v5551
    %v5772 = vunpack.c.l.b16 %v5552
    %v5773 = vunpack.c.l.b16 %v5553
    %v5774 = vunpack.c.l.b16 %v5554
    %v5775 = vunpack.c.l.b16 %v5555
    %v5776 = vunpack.c.l.b16 %v5556
    %v5777 = vunpack.c.l.b16 %v5557
    %v5778 = vunpack.c.l.b16 %v5558
    %v5779 = vunpack.c.l.b16 %v5559
    %v5780 = vpack.c.b16 %v5765, %v5764
    %v5781 = vpack.c.b16 %v5767, %v5766
    %v5782 = vpack.c.b16 %v5769, %v5768
    %v5783 = vpack.c.b16 %v5771, %v5770
    %v5784 = vpack.c.b16 %v5773, %v5772
    %v5785 = vpack.c.b16 %v5775, %v5774
    %v5786 = vpack.c.b16 %v5777, %v5776
    %v5787 = vpack.c.b16 %v5779, %v5778
    %5796 = vmatprep.subr.bf16.mxu0 0
    %5797 = vmatpush1.bf16.msra.mxu0 %v5787
    %5798 = vmatprep.subr.bf16.mxu0 0
    %5799 = vmatpush1.bf16.msra.mxu0 %v5786
    %5800 = vmatprep.subr.bf16.mxu0 0
    %5801 = vmatpush1.bf16.msra.mxu0 %v5785
    %5802 = vmatprep.subr.bf16.mxu0 0
    %5803 = vmatpush1.bf16.msra.mxu0 %v5784
    %5804 = vmatprep.subr.bf16.mxu0 0
    %5805 = vmatpush1.bf16.msra.mxu0 %v5783
    %5806 = vmatprep.subr.bf16.mxu0 0
    %5807 = vmatpush1.bf16.msra.mxu0 %v5782
    %5808 = vmatprep.subr.bf16.mxu0 0
    %5809 = vmatpush1.bf16.msra.mxu0 %v5781
    %5810 = vmatprep.subr.bf16.mxu0 0
    %5811 = vmatpush1.bf16.msra.mxu0 %v5780
    %5812 = vmatprep.subr.bf16.mxu0 0
    %5813 = vmatpush2.bf16.msra.mxu0 0
    %5814 = vmatprep.subr.bf16.mxu0 0
    %5815 = vmatpush2.bf16.msra.mxu0 0
    %5816 = vmatprep.subr.bf16.mxu0 0
    %5817 = vmatpush2.bf16.msra.mxu0 0
    %5818 = vmatprep.subr.bf16.mxu0 0
    %5819 = vmatpush2.bf16.msra.mxu0 0
    %5820 = vmatprep.subr.bf16.mxu0 0
    %5821 = vmatpush2.bf16.msra.mxu0 0
    %5822 = vmatprep.subr.bf16.mxu0 0
    %5823 = vmatpush2.bf16.msra.mxu0 0
    %5824 = vmatprep.subr.bf16.mxu0 0
    %5825 = vmatpush2.bf16.msra.mxu0 0
    %5826 = vmatprep.subr.bf16.mxu0 0
    %5827 = vmatpush2.bf16.msra.mxu0 0
    %5828 = vmatprep.mubr.bf16.mxu0 0
    %5829 = vmatmul.mubr.bf16.gmra.mxu0 %v5539
    %v5830 = vpop.f32.mrf.mxu0
    %v5831 = vadd.f32 %v5705, %v5830
    %v5832 = vpop.f32.mrf.mxu0
    %v5833 = vpop.f32.mrf.mxu0
    %v5834 = vadd.f32 %v5708, %v5833
    %v5835 = vpop.f32.mrf.mxu0
    %5836 = vmatprep.mubr.bf16.mxu0 0
    %5837 = vmatmul.mubr.bf16.gmra.mxu0 %v5540
    %v5838 = vpop.f32.mrf.mxu0
    %v5839 = vadd.f32 %v5713, %v5838
    %v5840 = vpop.f32.mrf.mxu0
    %v5841 = vpop.f32.mrf.mxu0
    %v5842 = vadd.f32 %v5716, %v5841
    %v5843 = vpop.f32.mrf.mxu0
    %5844 = vmatprep.mubr.bf16.mxu0 0
    %5845 = vmatmul.mubr.bf16.gmra.mxu0 %v5541
    %v5846 = vpop.f32.mrf.mxu0
    %v5847 = vadd.f32 %v5721, %v5846
    %v5848 = vpop.f32.mrf.mxu0
    %v5849 = vpop.f32.mrf.mxu0
    %v5850 = vadd.f32 %v5724, %v5849
    %v5851 = vpop.f32.mrf.mxu0
    %5852 = vmatprep.mubr.bf16.mxu0 0
    %5853 = vmatmul.mubr.bf16.gmra.mxu0 %v5542
    %v5854 = vpop.f32.mrf.mxu0
    %v5855 = vadd.f32 %v5729, %v5854
    %v5856 = vpop.f32.mrf.mxu0
    %v5857 = vpop.f32.mrf.mxu0
    %v5858 = vadd.f32 %v5732, %v5857
    %v5859 = vpop.f32.mrf.mxu0
    %5860 = vmatprep.mubr.bf16.mxu0 0
    %5861 = vmatmul.mubr.bf16.gmra.mxu0 %v5543
    %v5862 = vpop.f32.mrf.mxu0
    %v5863 = vadd.f32 %v5737, %v5862
    %v5864 = vpop.f32.mrf.mxu0
    %v5865 = vpop.f32.mrf.mxu0
    %v5866 = vadd.f32 %v5740, %v5865
    %v5867 = vpop.f32.mrf.mxu0
    %5868 = vdwg.mxu0
    %s5869 = scalar_lea.vmem %s3, 128
    %v5870 = vld [vmem:[%s5869] sm:$0xf]
    %v5871 = vld [vmem:[%s5869 + $0x4] sm:$0xf]
    %v5872 = vld [vmem:[%s5869 + $0x8] sm:$0xf]
    %v5873 = vld [vmem:[%s5869 + $0xc] sm:$0xf]
    %v5874 = vld [vmem:[%s5869 + $0x10] sm:$0xf]
    %v5875 = vld [vmem:[%s5869 + $0x14] sm:$0xf]
    %v5876 = vld [vmem:[%s5869 + $0x18] sm:$0xf]
    %v5877 = vld [vmem:[%s5869 + $0x1c] sm:$0xf]
    %v5878 = vld [vmem:[%s5869 + $0x20] sm:$0xf]
    %v5879 = vld [vmem:[%s5869 + $0x24] sm:$0xf]
    %v5880 = vld [vmem:[%s5869 + $0x28] sm:$0xf]
    %v5881 = vld [vmem:[%s5869 + $0x2c] sm:$0xf]
    %v5882 = vld [vmem:[%s5869 + $0x30] sm:$0xf]
    %v5883 = vld [vmem:[%s5869 + $0x34] sm:$0xf]
    %v5884 = vld [vmem:[%s5869 + $0x38] sm:$0xf]
    %v5885 = vld [vmem:[%s5869 + $0x3c] sm:$0xf]
    %v5886 = vrot.slane %v5539, 1
    %v5887 = vrot.slane %v5540, 1
    %v5888 = vsel %vm795, %v5886, %v5887
    %v5889 = vrot.slane %v5541, 1
    %v5890 = vsel %vm795, %v5887, %v5889
    %v5891 = vrot.slane %v5542, 1
    %v5892 = vsel %vm795, %v5889, %v5891
    %v5893 = vrot.slane %v5543, 1
    %v5894 = vsel %vm795, %v5891, %v5893
    %v5895 = vsel %vm795, %v5893, %v827
    %v5917 = vunpack.c.l.b16 %v5870
    %v5918 = vunpack.c.l.b16 %v5871
    %v5919 = vunpack.c.l.b16 %v5872
    %v5920 = vunpack.c.l.b16 %v5873
    %v5921 = vunpack.c.l.b16 %v5874
    %v5922 = vunpack.c.l.b16 %v5875
    %v5923 = vunpack.c.l.b16 %v5876
    %v5924 = vunpack.c.l.b16 %v5877
    %v5925 = vunpack.c.l.b16 %v5878
    %v5926 = vunpack.c.l.b16 %v5879
    %v5927 = vunpack.c.l.b16 %v5880
    %v5928 = vunpack.c.l.b16 %v5881
    %v5929 = vunpack.c.l.b16 %v5882
    %v5930 = vunpack.c.l.b16 %v5883
    %v5931 = vunpack.c.l.b16 %v5884
    %v5932 = vunpack.c.l.b16 %v5885
    %v5933 = vpack.c.b16 %v5918, %v5917
    %v5934 = vpack.c.b16 %v5920, %v5919
    %v5935 = vpack.c.b16 %v5922, %v5921
    %v5936 = vpack.c.b16 %v5924, %v5923
    %v5937 = vpack.c.b16 %v5926, %v5925
    %v5938 = vpack.c.b16 %v5928, %v5927
    %v5939 = vpack.c.b16 %v5930, %v5929
    %v5940 = vpack.c.b16 %v5932, %v5931
    %5949 = vmatprep.subr.bf16.mxu0 0
    %5950 = vmatpush1.bf16.msra.mxu0 %v5940
    %5951 = vmatprep.subr.bf16.mxu0 0
    %5952 = vmatpush1.bf16.msra.mxu0 %v5939
    %5953 = vmatprep.subr.bf16.mxu0 0
    %5954 = vmatpush1.bf16.msra.mxu0 %v5938
    %5955 = vmatprep.subr.bf16.mxu0 0
    %5956 = vmatpush1.bf16.msra.mxu0 %v5937
    %5957 = vmatprep.subr.bf16.mxu0 0
    %5958 = vmatpush1.bf16.msra.mxu0 %v5936
    %5959 = vmatprep.subr.bf16.mxu0 0
    %5960 = vmatpush1.bf16.msra.mxu0 %v5935
    %5961 = vmatprep.subr.bf16.mxu0 0
    %5962 = vmatpush1.bf16.msra.mxu0 %v5934
    %5963 = vmatprep.subr.bf16.mxu0 0
    %5964 = vmatpush1.bf16.msra.mxu0 %v5933
    %5965 = vmatprep.subr.bf16.mxu0 0
    %5966 = vmatpush2.bf16.msra.mxu0 0
    %5967 = vmatprep.subr.bf16.mxu0 0
    %5968 = vmatpush2.bf16.msra.mxu0 0
    %5969 = vmatprep.subr.bf16.mxu0 0
    %5970 = vmatpush2.bf16.msra.mxu0 0
    %5971 = vmatprep.subr.bf16.mxu0 0
    %5972 = vmatpush2.bf16.msra.mxu0 0
    %5973 = vmatprep.subr.bf16.mxu0 0
    %5974 = vmatpush2.bf16.msra.mxu0 0
    %5975 = vmatprep.subr.bf16.mxu0 0
    %5976 = vmatpush2.bf16.msra.mxu0 0
    %5977 = vmatprep.subr.bf16.mxu0 0
    %5978 = vmatpush2.bf16.msra.mxu0 0
    %5979 = vmatprep.subr.bf16.mxu0 0
    %5980 = vmatpush2.bf16.msra.mxu0 0
    %5981 = vmatprep.mubr.bf16.mxu0 0
    %5982 = vmatmul.mubr.bf16.gmra.mxu0 %v5888
    %v5983 = vpop.f32.mrf.mxu0
    %v5984 = vadd.f32 0.0, %v5983
    %v5985 = vpop.f32.mrf.mxu0
    %v5986 = vpop.f32.mrf.mxu0
    %v5987 = vadd.f32 0.0, %v5986
    %v5988 = vpop.f32.mrf.mxu0
    %5989 = vmatprep.mubr.bf16.mxu0 0
    %5990 = vmatmul.mubr.bf16.gmra.mxu0 %v5890
    %v5991 = vpop.f32.mrf.mxu0
    %v5992 = vadd.f32 0.0, %v5991
    %v5993 = vpop.f32.mrf.mxu0
    %v5994 = vpop.f32.mrf.mxu0
    %v5995 = vadd.f32 0.0, %v5994
    %v5996 = vpop.f32.mrf.mxu0
    %5997 = vmatprep.mubr.bf16.mxu0 0
    %5998 = vmatmul.mubr.bf16.gmra.mxu0 %v5892
    %v5999 = vpop.f32.mrf.mxu0
    %v6000 = vadd.f32 0.0, %v5999
    %v6001 = vpop.f32.mrf.mxu0
    %v6002 = vpop.f32.mrf.mxu0
    %v6003 = vadd.f32 0.0, %v6002
    %v6004 = vpop.f32.mrf.mxu0
    %6005 = vmatprep.mubr.bf16.mxu0 0
    %6006 = vmatmul.mubr.bf16.gmra.mxu0 %v5894
    %v6007 = vpop.f32.mrf.mxu0
    %v6008 = vadd.f32 0.0, %v6007
    %v6009 = vpop.f32.mrf.mxu0
    %v6010 = vpop.f32.mrf.mxu0
    %v6011 = vadd.f32 0.0, %v6010
    %v6012 = vpop.f32.mrf.mxu0
    %6013 = vmatprep.mubr.bf16.mxu0 0
    %6014 = vmatmul.mubr.bf16.gmra.mxu0 %v5895
    %v6015 = vpop.f32.mrf.mxu0
    %v6016 = vadd.f32 0.0, %v6015
    %v6017 = vpop.f32.mrf.mxu0
    %v6018 = vpop.f32.mrf.mxu0
    %v6019 = vadd.f32 0.0, %v6018
    %v6020 = vpop.f32.mrf.mxu0
    %6021 = vdwg.mxu0
    %v6022 = vadd.f32 %v5831, %v5984
    %v6023 = vadd.f32 %v5834, %v5987
    %v6024 = vadd.f32 %v5839, %v5992
    %v6025 = vadd.f32 %v5842, %v5995
    %v6026 = vadd.f32 %v5847, %v6000
    %v6027 = vadd.f32 %v5850, %v6003
    %v6028 = vadd.f32 %v5855, %v6008
    %v6029 = vadd.f32 %v5858, %v6011
    %v6030 = vadd.f32 %v5863, %v6016
    %v6031 = vadd.f32 %v5866, %v6019
    %v6032 = vld [vmem:[%s4] sm:$0x1]
    %v6034 = vlaneseq
    %v6035 = vshrl.u32 %v6034, 7
    %v6036 = vsub.s32 0, %v6035
    %v6037 = vrot.slane %v6032, %v6036
    %v6039 = vadd.f32 %v6022, %v6037
    %v6040 = vadd.f32 %v6023, %v6037
    %v6041 = vadd.f32 %v6024, %v6037
    %v6042 = vadd.f32 %v6025, %v6037
    %v6043 = vadd.f32 %v6026, %v6037
    %v6044 = vadd.f32 %v6027, %v6037
    %v6045 = vadd.f32 %v6028, %v6037
    %v6046 = vadd.f32 %v6029, %v6037
    %v6047 = vadd.f32 %v6030, %v6037
    %v6048 = vadd.f32 %v6031, %v6037
    %v6049 = vmax.f32 %v6039, 0.0
    %v6050 = vmax.f32 %v6040, 0.0
    %v6051 = vmax.f32 %v6041, 0.0
    %v6052 = vmax.f32 %v6042, 0.0
    %v6053 = vmax.f32 %v6043, 0.0
    %v6054 = vmax.f32 %v6044, 0.0
    %v6055 = vmax.f32 %v6045, 0.0
    %v6056 = vmax.f32 %v6046, 0.0
    %v6057 = vmax.f32 %v6047, 0.0
    %v6058 = vmax.f32 %v6048, 0.0
    %v6069 = vcombine.high %v6049, %v6049
    %v6071 = vunpack.c.l.s4 1983009808
    %v6072 = vunpack.c.0.s8 %v6071
    %v6073 = vlaneseq
    %v6074 = vshrl.u32 %v6073, 7
    %v6075 = vsub.s32 %v6072, %v6074
    %v6076 = vrot.slane %v6049, %v6075
    %v6078 = vunpack.c.l.s4 1983009808
    %v6079 = vunpack.c.0.s8 %v6078
    %v6080 = vlaneseq
    %v6081 = vshrl.u32 %v6080, 7
    %v6082 = vsub.s32 %v6079, %v6081
    %v6083 = vrot.slane %v6069, %v6082
    %v6084 = vcombine.high %v6076, %v6076
    %v6085 = vcombine.high %v6083, %v6083
    %v6086 = vcombine.high %v6050, %v6050
    %v6088 = vunpack.c.l.s4 1983009808
    %v6089 = vunpack.c.0.s8 %v6088
    %v6090 = vlaneseq
    %v6091 = vshrl.u32 %v6090, 7
    %v6092 = vsub.s32 %v6089, %v6091
    %v6093 = vrot.slane %v6050, %v6092
    %v6095 = vunpack.c.l.s4 1983009808
    %v6096 = vunpack.c.0.s8 %v6095
    %v6097 = vlaneseq
    %v6098 = vshrl.u32 %v6097, 7
    %v6099 = vsub.s32 %v6096, %v6098
    %v6100 = vrot.slane %v6086, %v6099
    %v6101 = vcombine.high %v6093, %v6093
    %v6102 = vcombine.high %v6100, %v6100
    %v6103 = vcombine.high %v6051, %v6051
    %v6105 = vunpack.c.l.s4 1983009808
    %v6106 = vunpack.c.0.s8 %v6105
    %v6107 = vlaneseq
    %v6108 = vshrl.u32 %v6107, 7
    %v6109 = vsub.s32 %v6106, %v6108
    %v6110 = vrot.slane %v6051, %v6109
    %v6112 = vunpack.c.l.s4 1983009808
    %v6113 = vunpack.c.0.s8 %v6112
    %v6114 = vlaneseq
    %v6115 = vshrl.u32 %v6114, 7
    %v6116 = vsub.s32 %v6113, %v6115
    %v6117 = vrot.slane %v6103, %v6116
    %v6118 = vcombine.high %v6117, %v6117
    %v6119 = vcombine.high %v6052, %v6052
    %v6121 = vunpack.c.l.s4 1983009808
    %v6122 = vunpack.c.0.s8 %v6121
    %v6123 = vlaneseq
    %v6124 = vshrl.u32 %v6123, 7
    %v6125 = vsub.s32 %v6122, %v6124
    %v6126 = vrot.slane %v6052, %v6125
    %v6128 = vunpack.c.l.s4 1983009808
    %v6129 = vunpack.c.0.s8 %v6128
    %v6130 = vlaneseq
    %v6131 = vshrl.u32 %v6130, 7
    %v6132 = vsub.s32 %v6129, %v6131
    %v6133 = vrot.slane %v6119, %v6132
    %v6134 = vcombine.high %v6126, %v6126
    %v6135 = vcombine.high %v6133, %v6133
    %v6136 = vcombine.high %v6053, %v6053
    %v6138 = vunpack.c.l.s4 1983009808
    %v6139 = vunpack.c.0.s8 %v6138
    %v6140 = vlaneseq
    %v6141 = vshrl.u32 %v6140, 7
    %v6142 = vsub.s32 %v6139, %v6141
    %v6143 = vrot.slane %v6053, %v6142
    %v6145 = vunpack.c.l.s4 1983009808
    %v6146 = vunpack.c.0.s8 %v6145
    %v6147 = vlaneseq
    %v6148 = vshrl.u32 %v6147, 7
    %v6149 = vsub.s32 %v6146, %v6148
    %v6150 = vrot.slane %v6136, %v6149
    %v6151 = vcombine.high %v6143, %v6143
    %v6152 = vcombine.high %v6054, %v6054
    %v6154 = vunpack.c.l.s4 1983009808
    %v6155 = vunpack.c.0.s8 %v6154
    %v6156 = vlaneseq
    %v6157 = vshrl.u32 %v6156, 7
    %v6158 = vsub.s32 %v6155, %v6157
    %v6159 = vrot.slane %v6054, %v6158
    %v6161 = vunpack.c.l.s4 1983009808
    %v6162 = vunpack.c.0.s8 %v6161
    %v6163 = vlaneseq
    %v6164 = vshrl.u32 %v6163, 7
    %v6165 = vsub.s32 %v6162, %v6164
    %v6166 = vrot.slane %v6152, %v6165
    %v6167 = vcombine.high %v6159, %v6159
    %v6168 = vcombine.high %v6166, %v6166
    %v6169 = vcombine.high %v6055, %v6055
    %v6171 = vunpack.c.l.s4 1983009808
    %v6172 = vunpack.c.0.s8 %v6171
    %v6173 = vlaneseq
    %v6174 = vshrl.u32 %v6173, 7
    %v6175 = vsub.s32 %v6172, %v6174
    %v6176 = vrot.slane %v6055, %v6175
    %v6178 = vunpack.c.l.s4 1983009808
    %v6179 = vunpack.c.0.s8 %v6178
    %v6180 = vlaneseq
    %v6181 = vshrl.u32 %v6180, 7
    %v6182 = vsub.s32 %v6179, %v6181
    %v6183 = vrot.slane %v6169, %v6182
    %v6184 = vcombine.high %v6176, %v6176
    %v6185 = vcombine.high %v6183, %v6183
    %v6186 = vcombine.high %v6056, %v6056
    %v6188 = vunpack.c.l.s4 1983009808
    %v6189 = vunpack.c.0.s8 %v6188
    %v6190 = vlaneseq
    %v6191 = vshrl.u32 %v6190, 7
    %v6192 = vsub.s32 %v6189, %v6191
    %v6193 = vrot.slane %v6056, %v6192
    %v6195 = vunpack.c.l.s4 1983009808
    %v6196 = vunpack.c.0.s8 %v6195
    %v6197 = vlaneseq
    %v6198 = vshrl.u32 %v6197, 7
    %v6199 = vsub.s32 %v6196, %v6198
    %v6200 = vrot.slane %v6186, %v6199
    %v6201 = vcombine.high %v6200, %v6200
    %v6202 = vcombine.high %v6057, %v6057
    %v6204 = vunpack.c.l.s4 1983009808
    %v6205 = vunpack.c.0.s8 %v6204
    %v6206 = vlaneseq
    %v6207 = vshrl.u32 %v6206, 7
    %v6208 = vsub.s32 %v6205, %v6207
    %v6209 = vrot.slane %v6057, %v6208
    %v6211 = vunpack.c.l.s4 1983009808
    %v6212 = vunpack.c.0.s8 %v6211
    %v6213 = vlaneseq
    %v6214 = vshrl.u32 %v6213, 7
    %v6215 = vsub.s32 %v6212, %v6214
    %v6216 = vrot.slane %v6202, %v6215
    %v6217 = vcombine.high %v6209, %v6209
    %v6218 = vcombine.high %v6216, %v6216
    %v6219 = vcombine.high %v6058, %v6058
    %v6221 = vunpack.c.l.s4 1983009808
    %v6222 = vunpack.c.0.s8 %v6221
    %v6223 = vlaneseq
    %v6224 = vshrl.u32 %v6223, 7
    %v6225 = vsub.s32 %v6222, %v6224
    %v6226 = vrot.slane %v6058, %v6225
    %v6228 = vunpack.c.l.s4 1983009808
    %v6229 = vunpack.c.0.s8 %v6228
    %v6230 = vlaneseq
    %v6231 = vshrl.u32 %v6230, 7
    %v6232 = vsub.s32 %v6229, %v6231
    %v6233 = vrot.slane %v6219, %v6232
    %v6234 = vcombine.high %v6226, %v6226
    %v6235 = vcombine.low %v6076, %v6084
    %v6236 = vcombine.low %v6083, %v6085
    %v6238 = vunpack.c.l.s4 1983009808
    %v6239 = vunpack.c.0.s8 %v6238
    %v6240 = vlaneseq
    %v6241 = vshrl.u32 %v6240, 7
    %v6242 = vsub.s32 %v6239, %v6241
    %v6243 = vrot.slane %v6235, %v6242
    %v6245 = vunpack.c.l.s4 1983009808
    %v6246 = vunpack.c.0.s8 %v6245
    %v6247 = vlaneseq
    %v6248 = vshrl.u32 %v6247, 7
    %v6249 = vsub.s32 %v6246, %v6248
    %v6250 = vrot.slane %v6236, %v6249
    %v6251 = vcombine.low %v6243, %v6250
    %v6252 = vcombine.low %v6101, %v6100
    %v6253 = vcombine.low %v6102, %v6110
    %v6255 = vunpack.c.l.s4 1983009808
    %v6256 = vunpack.c.0.s8 %v6255
    %v6257 = vlaneseq
    %v6258 = vshrl.u32 %v6257, 7
    %v6259 = vsub.s32 %v6256, %v6258
    %v6260 = vrot.slane %v6252, %v6259
    %v6262 = vunpack.c.l.s4 1983009808
    %v6263 = vunpack.c.0.s8 %v6262
    %v6264 = vlaneseq
    %v6265 = vshrl.u32 %v6264, 7
    %v6266 = vsub.s32 %v6263, %v6265
    %v6267 = vrot.slane %v6253, %v6266
    %v6268 = vcombine.low %v6260, %v6267
    %v6269 = vcombine.low %v6117, %v6118
    %v6270 = vcombine.low %v6126, %v6134
    %v6272 = vunpack.c.l.s4 1983009808
    %v6273 = vunpack.c.0.s8 %v6272
    %v6274 = vlaneseq
    %v6275 = vshrl.u32 %v6274, 7
    %v6276 = vsub.s32 %v6273, %v6275
    %v6277 = vrot.slane %v6269, %v6276
    %v6279 = vunpack.c.l.s4 1983009808
    %v6280 = vunpack.c.0.s8 %v6279
    %v6281 = vlaneseq
    %v6282 = vshrl.u32 %v6281, 7
    %v6283 = vsub.s32 %v6280, %v6282
    %v6284 = vrot.slane %v6270, %v6283
    %v6285 = vcombine.low %v6277, %v6284
    %v6286 = vcombine.low %v6135, %v6143
    %v6287 = vcombine.low %v6151, %v6150
    %v6289 = vunpack.c.l.s4 1983009808
    %v6290 = vunpack.c.0.s8 %v6289
    %v6291 = vlaneseq
    %v6292 = vshrl.u32 %v6291, 7
    %v6293 = vsub.s32 %v6290, %v6292
    %v6294 = vrot.slane %v6286, %v6293
    %v6296 = vunpack.c.l.s4 1983009808
    %v6297 = vunpack.c.0.s8 %v6296
    %v6298 = vlaneseq
    %v6299 = vshrl.u32 %v6298, 7
    %v6300 = vsub.s32 %v6297, %v6299
    %v6301 = vrot.slane %v6287, %v6300
    %v6302 = vcombine.low %v6294, %v6301
    %v6303 = vcombine.low %v6159, %v6167
    %v6304 = vcombine.low %v6166, %v6168
    %v6306 = vunpack.c.l.s4 1983009808
    %v6307 = vunpack.c.0.s8 %v6306
    %v6308 = vlaneseq
    %v6309 = vshrl.u32 %v6308, 7
    %v6310 = vsub.s32 %v6307, %v6309
    %v6311 = vrot.slane %v6303, %v6310
    %v6313 = vunpack.c.l.s4 1983009808
    %v6314 = vunpack.c.0.s8 %v6313
    %v6315 = vlaneseq
    %v6316 = vshrl.u32 %v6315, 7
    %v6317 = vsub.s32 %v6314, %v6316
    %v6318 = vrot.slane %v6304, %v6317
    %v6319 = vcombine.low %v6311, %v6318
    %v6320 = vcombine.low %v6184, %v6183
    %v6321 = vcombine.low %v6185, %v6193
    %v6323 = vunpack.c.l.s4 1983009808
    %v6324 = vunpack.c.0.s8 %v6323
    %v6325 = vlaneseq
    %v6326 = vshrl.u32 %v6325, 7
    %v6327 = vsub.s32 %v6324, %v6326
    %v6328 = vrot.slane %v6320, %v6327
    %v6330 = vunpack.c.l.s4 1983009808
    %v6331 = vunpack.c.0.s8 %v6330
    %v6332 = vlaneseq
    %v6333 = vshrl.u32 %v6332, 7
    %v6334 = vsub.s32 %v6331, %v6333
    %v6335 = vrot.slane %v6321, %v6334
    %v6336 = vcombine.low %v6328, %v6335
    %v6337 = vcombine.low %v6200, %v6201
    %v6338 = vcombine.low %v6209, %v6217
    %v6340 = vunpack.c.l.s4 1983009808
    %v6341 = vunpack.c.0.s8 %v6340
    %v6342 = vlaneseq
    %v6343 = vshrl.u32 %v6342, 7
    %v6344 = vsub.s32 %v6341, %v6343
    %v6345 = vrot.slane %v6337, %v6344
    %v6347 = vunpack.c.l.s4 1983009808
    %v6348 = vunpack.c.0.s8 %v6347
    %v6349 = vlaneseq
    %v6350 = vshrl.u32 %v6349, 7
    %v6351 = vsub.s32 %v6348, %v6350
    %v6352 = vrot.slane %v6338, %v6351
    %v6353 = vcombine.low %v6345, %v6352
    %v6354 = vcombine.low %v6218, %v6226
    %v6355 = vcombine.low %v6234, %v6233
    %v6357 = vunpack.c.l.s4 1983009808
    %v6358 = vunpack.c.0.s8 %v6357
    %v6359 = vlaneseq
    %v6360 = vshrl.u32 %v6359, 7
    %v6361 = vsub.s32 %v6358, %v6360
    %v6362 = vrot.slane %v6354, %v6361
    %v6364 = vunpack.c.l.s4 1983009808
    %v6365 = vunpack.c.0.s8 %v6364
    %v6366 = vlaneseq
    %v6367 = vshrl.u32 %v6366, 7
    %v6368 = vsub.s32 %v6365, %v6367
    %v6369 = vrot.slane %v6355, %v6368
    %v6370 = vcombine.low %v6362, %v6369
    %vm6379 = vcmask 523264
    %v6380 = vsel %vm6379, %v6251, -inf
    %v6381 = vrot.slane %v6380, 4
    %v6382 = vmax.f32 %v6380, %v6381
    %v6383 = vrot.slane %v6382, 2
    %v6384 = vmax.f32 %v6382, %v6383
    %v6385 = vrot.slane %v6384, 1
    %v6386 = vmax.f32 %v6384, %v6385
    %v6387 = vsel %vm6379, %v6268, -inf
    %v6388 = vrot.slane %v6387, 4
    %v6389 = vmax.f32 %v6387, %v6388
    %v6390 = vrot.slane %v6389, 2
    %v6391 = vmax.f32 %v6389, %v6390
    %v6392 = vrot.slane %v6391, 1
    %v6393 = vmax.f32 %v6391, %v6392
    %v6394 = vsel %vm6379, %v6285, -inf
    %v6395 = vrot.slane %v6394, 4
    %v6396 = vmax.f32 %v6394, %v6395
    %v6397 = vrot.slane %v6396, 2
    %v6398 = vmax.f32 %v6396, %v6397
    %v6399 = vrot.slane %v6398, 1
    %v6400 = vmax.f32 %v6398, %v6399
    %v6401 = vsel %vm6379, %v6302, -inf
    %v6402 = vrot.slane %v6401, 4
    %v6403 = vmax.f32 %v6401, %v6402
    %v6404 = vrot.slane %v6403, 2
    %v6405 = vmax.f32 %v6403, %v6404
    %v6406 = vrot.slane %v6405, 1
    %v6407 = vmax.f32 %v6405, %v6406
    %v6408 = vsel %vm6379, %v6319, -inf
    %v6409 = vrot.slane %v6408, 4
    %v6410 = vmax.f32 %v6408, %v6409
    %v6411 = vrot.slane %v6410, 2
    %v6412 = vmax.f32 %v6410, %v6411
    %v6413 = vrot.slane %v6412, 1
    %v6414 = vmax.f32 %v6412, %v6413
    %v6415 = vsel %vm6379, %v6336, -inf
    %v6416 = vrot.slane %v6415, 4
    %v6417 = vmax.f32 %v6415, %v6416
    %v6418 = vrot.slane %v6417, 2
    %v6419 = vmax.f32 %v6417, %v6418
    %v6420 = vrot.slane %v6419, 1
    %v6421 = vmax.f32 %v6419, %v6420
    %v6422 = vsel %vm6379, %v6353, -inf
    %v6423 = vrot.slane %v6422, 4
    %v6424 = vmax.f32 %v6422, %v6423
    %v6425 = vrot.slane %v6424, 2
    %v6426 = vmax.f32 %v6424, %v6425
    %v6427 = vrot.slane %v6426, 1
    %v6428 = vmax.f32 %v6426, %v6427
    %v6429 = vsel %vm6379, %v6370, -inf
    %v6430 = vrot.slane %v6429, 4
    %v6431 = vmax.f32 %v6429, %v6430
    %v6432 = vrot.slane %v6431, 2
    %v6433 = vmax.f32 %v6431, %v6432
    %v6434 = vrot.slane %v6433, 1
    %v6435 = vmax.f32 %v6433, %v6434
    %v6436 = vpack.c.bf16 %v6386, %v6386
    %v6437 = vpack.c.bf16 %v6393, %v6393
    %v6438 = vpack.c.bf16 %v6400, %v6400
    %v6439 = vpack.c.bf16 %v6407, %v6407
    %v6440 = vpack.c.bf16 %v6414, %v6414
    %v6441 = vpack.c.bf16 %v6421, %v6421
    %v6442 = vpack.c.bf16 %v6428, %v6428
    %v6443 = vpack.c.bf16 %v6435, %v6435
    %v6444 = vld [vmem:[#allocation3] sm:$0xf]
    %v6445 = vld [vmem:[#allocation3 + $0x4] sm:$0xf]
    %v6446 = vld [vmem:[#allocation3 + $0x8] sm:$0xf]
    %v6447 = vld [vmem:[#allocation3 + $0xc] sm:$0xf]
    %v6448 = vld [vmem:[#allocation3 + $0x10] sm:$0xf]
    %v6449 = vld [vmem:[#allocation3 + $0x14] sm:$0xf]
    %v6450 = vld [vmem:[#allocation3 + $0x18] sm:$0xf]
    %v6451 = vld [vmem:[#allocation3 + $0x1c] sm:$0xf]
    %v6452 = vld [vmem:[%s6] sm:$0x1]
    %v6454 = vlaneseq
    %v6455 = vshrl.u32 %v6454, 7
    %v6456 = vsub.s32 0, %v6455
    %v6457 = vrot.slane %v6452, %v6456
    %v6467 = vunpack.c.l.b16 %v6436
    %v6468 = vunpack.c.l.b16 %v6437
    %v6469 = vunpack.c.l.b16 %v6438
    %v6470 = vunpack.c.l.b16 %v6439
    %v6471 = vunpack.c.l.b16 %v6440
    %v6472 = vunpack.c.l.b16 %v6441
    %v6473 = vunpack.c.l.b16 %v6442
    %v6474 = vunpack.c.l.b16 %v6443
    %v6475 = vsel %vm5462, %v6468, %v6467
    %v6476 = vsel %vm5464, %v6469, %v6475
    %v6477 = vsel %vm5466, %v6470, %v6476
    %v6478 = vsel %vm5468, %v6471, %v6477
    %v6479 = vsel %vm5470, %v6472, %v6478
    %v6480 = vsel %vm5472, %v6473, %v6479
    %v6481 = vsel %vm5474, %v6474, %v6480
    %v6482 = vpack.c.b16 %v6481, %v6481
    %v6491 = vunpack.c.l.b16 %v6444
    %v6492 = vunpack.c.l.b16 %v6445
    %v6493 = vunpack.c.l.b16 %v6446
    %v6494 = vunpack.c.l.b16 %v6447
    %v6495 = vunpack.c.l.b16 %v6448
    %v6496 = vunpack.c.l.b16 %v6449
    %v6497 = vunpack.c.l.b16 %v6450
    %v6498 = vunpack.c.l.b16 %v6451
    %v6499 = vpack.c.b16 %v6492, %v6491
    %v6500 = vpack.c.b16 %v6494, %v6493
    %v6501 = vpack.c.b16 %v6496, %v6495
    %v6502 = vpack.c.b16 %v6498, %v6497
    %v6508 = vsel %vm6379, %v6482, 0
    %6510 = vmatprep.subr.bf16.mxu0 0
    %6511 = vmatpush1.bf16.msra.mxu0 0
    %6512 = vmatprep.subr.bf16.mxu0 0
    %6513 = vmatpush1.bf16.msra.mxu0 0
    %6514 = vmatprep.subr.bf16.mxu0 0
    %6515 = vmatpush1.bf16.msra.mxu0 0
    %6516 = vmatprep.subr.bf16.mxu0 0
    %6517 = vmatpush1.bf16.msra.mxu0 0
    %6518 = vmatprep.subr.bf16.mxu0 0
    %6519 = vmatpush1.bf16.msra.mxu0 %v6502
    %6520 = vmatprep.subr.bf16.mxu0 0
    %6521 = vmatpush1.bf16.msra.mxu0 %v6501
    %6522 = vmatprep.subr.bf16.mxu0 0
    %6523 = vmatpush1.bf16.msra.mxu0 %v6500
    %6524 = vmatprep.subr.bf16.mxu0 0
    %6525 = vmatpush1.bf16.msra.mxu0 %v6499
    %6526 = vmatprep.subr.bf16.mxu0 0
    %6527 = vmatpush2.bf16.msra.mxu0 0
    %6528 = vmatprep.subr.bf16.mxu0 0
    %6529 = vmatpush2.bf16.msra.mxu0 0
    %6530 = vmatprep.subr.bf16.mxu0 0
    %6531 = vmatpush2.bf16.msra.mxu0 0
    %6532 = vmatprep.subr.bf16.mxu0 0
    %6533 = vmatpush2.bf16.msra.mxu0 0
    %6534 = vmatprep.subr.bf16.mxu0 0
    %6535 = vmatpush2.bf16.msra.mxu0 0
    %6536 = vmatprep.subr.bf16.mxu0 0
    %6537 = vmatpush2.bf16.msra.mxu0 0
    %6538 = vmatprep.subr.bf16.mxu0 0
    %6539 = vmatpush2.bf16.msra.mxu0 0
    %6540 = vmatprep.subr.bf16.mxu0 0
    %6541 = vmatpush2.bf16.msra.mxu0 0
    %6542 = vmatprep.mubr.bf16.mxu0 0
    %6543 = vmatmul.mubr.bf16.gmra.mxu0 %v6508
    %v6544 = vpop.f32.mrf.mxu0
    %v6545 = vadd.f32 %v6457, %v6544
    %v6546 = vpop.f32.mrf.mxu0
    %v6547 = vpop.f32.mrf.mxu0
    %v6548 = vpop.f32.mrf.mxu0
    %6549 = vdwg.mxu0
    %v6550 = vmax.f32 %v6545, 0.0
    %v6551 = vpack.c.bf16 %v6550, %v6550
    %v6552 = vld [vmem:[%s7] sm:$0xf]
    %v6553 = vld [vmem:[%s7 + $0x4] sm:$0xf]
    %v6554 = vld [vmem:[%s7 + $0x8] sm:$0xf]
    %v6555 = vld [vmem:[%s7 + $0xc] sm:$0xf]
    %v6556 = vld [vmem:[%s7 + $0x10] sm:$0xf]
    %v6557 = vld [vmem:[%s7 + $0x14] sm:$0xf]
    %v6558 = vld [vmem:[%s7 + $0x18] sm:$0xf]
    %v6559 = vld [vmem:[%s7 + $0x1c] sm:$0xf]
    %v6560 = vld [vmem:[#allocation2] sm:$0x1]
    %v6562 = vlaneseq
    %v6563 = vshrl.u32 %v6562, 7
    %v6564 = vsub.s32 0, %v6563
    %v6565 = vrot.slane %v6560, %v6564
    %v6575 = vunpack.c.l.b16 %v6552
    %v6576 = vunpack.c.l.b16 %v6553
    %v6577 = vunpack.c.l.b16 %v6554
    %v6578 = vunpack.c.l.b16 %v6555
    %v6579 = vunpack.c.l.b16 %v6556
    %v6580 = vunpack.c.l.b16 %v6557
    %v6581 = vunpack.c.l.b16 %v6558
    %v6582 = vunpack.c.l.b16 %v6559
    %v6583 = vpack.c.b16 %v6576, %v6575
    %v6584 = vpack.c.b16 %v6578, %v6577
    %v6585 = vpack.c.b16 %v6580, %v6579
    %v6586 = vpack.c.b16 %v6582, %v6581
    %v6592 = vsel %vm6379, %v6551, 0
    %6594 = vmatprep.subr.bf16.mxu0 0
    %6595 = vmatpush1.bf16.msra.mxu0 0
    %6596 = vmatprep.subr.bf16.mxu0 0
    %6597 = vmatpush1.bf16.msra.mxu0 0
    %6598 = vmatprep.subr.bf16.mxu0 0
    %6599 = vmatpush1.bf16.msra.mxu0 0
    %6600 = vmatprep.subr.bf16.mxu0 0
    %6601 = vmatpush1.bf16.msra.mxu0 0
    %6602 = vmatprep.subr.bf16.mxu0 0
    %6603 = vmatpush1.bf16.msra.mxu0 %v6586
    %6604 = vmatprep.subr.bf16.mxu0 0
    %6605 = vmatpush1.bf16.msra.mxu0 %v6585
    %6606 = vmatprep.subr.bf16.mxu0 0
    %6607 = vmatpush1.bf16.msra.mxu0 %v6584
    %6608 = vmatprep.subr.bf16.mxu0 0
    %6609 = vmatpush1.bf16.msra.mxu0 %v6583
    %6610 = vmatprep.subr.bf16.mxu0 0
    %6611 = vmatpush2.bf16.msra.mxu0 0
    %6612 = vmatprep.subr.bf16.mxu0 0
    %6613 = vmatpush2.bf16.msra.mxu0 0
    %6614 = vmatprep.subr.bf16.mxu0 0
    %6615 = vmatpush2.bf16.msra.mxu0 0
    %6616 = vmatprep.subr.bf16.mxu0 0
    %6617 = vmatpush2.bf16.msra.mxu0 0
    %6618 = vmatprep.subr.bf16.mxu0 0
    %6619 = vmatpush2.bf16.msra.mxu0 0
    %6620 = vmatprep.subr.bf16.mxu0 0
    %6621 = vmatpush2.bf16.msra.mxu0 0
    %6622 = vmatprep.subr.bf16.mxu0 0
    %6623 = vmatpush2.bf16.msra.mxu0 0
    %6624 = vmatprep.subr.bf16.mxu0 0
    %6625 = vmatpush2.bf16.msra.mxu0 0
    %6626 = vmatprep.mubr.bf16.mxu0 0
    %6627 = vmatmul.mubr.bf16.gmra.mxu0 %v6592
    %v6628 = vpop.f32.mrf.mxu0
    %v6629 = vadd.f32 %v6565, %v6628
    %v6630 = vpop.f32.mrf.mxu0
    %v6631 = vpop.f32.mrf.mxu0
    %v6632 = vpop.f32.mrf.mxu0
    %6633 = vdwg.mxu0
    %v6634 = vxor.u32 %v6629, 2147483648
    %v6635 = vmul.f32 %v6634, 1.442695
    %v6636 = vpow.pop %v6635
    %v6637 = vadd.f32 %v6636, 1.0
    %v6638 = vrcp.pop %v6637
    %v6639 = vmul.f32 1.0, %v6638
    %vm6640 = vcmask 7168
    %6641 = vst.msk [vmem:[%s9] sm:$0xff] %vm6640, %v6639
    // Predicated region
    $region42: #{tpu_custom_call.1} parent=1 // pred_check
      _
    $region43: #{tpu_custom_call.1} parent=1 // pred_check_branch
      %6643 = sbr.rel (0) target = $region45
    $region44: #{tpu_custom_call.1} parent=1 // pred_region
      _
    $region45: #{tpu_custom_call.1} parent=1 // pred_fallthru
      _
    // Predicated region
    $region46: #{tpu_custom_call.1} parent=1 // pred_check
      _
    $region47: #{tpu_custom_call.1} parent=1 // pred_check_branch
      %6645 = sbr.rel (0) target = $region49
    $region48: #{tpu_custom_call.1} parent=1 // pred_region
      _
    $region49: #{tpu_custom_call.1} parent=1 // pred_fallthru
      _
    %6646 = vsyncpa [#allocation4], 1

</llo_original>
